<compile_context>
chip_gen: v7x
topology: tpu7x:2x2x1
jax: 0.10.0
libtpu: 0.0.40
codegen_flags: <defaults>
</compile_context>

<pallas_src>
import jax
import jax.numpy as jnp
import numpy as np
from jax.experimental import pallas as pl
from jax.experimental.pallas import tpu as pltpu


COMPUTE_DTYPE = jnp.bfloat16   # MXU operand dtype; accumulation is always f32.


# ----------------------------------------------------------------------------
# Fused Pallas kernel: whole CNN forward pass, VMEM resident.
# ----------------------------------------------------------------------------
def _fused_cnn_kernel(
    x_ref,            # (N, 32, 32*C_in) f32   input rows, W*C packed in lanes
    t1_ref,           # (3, 32, 32)      cdt   conv1 H-shift row matrices
    w1_ref,           # (3, 32*C_in, 512) cdt  conv1 banded weights (per kh)
    b1_ref,           # (1, 512)         f32   conv1 bias tiled over W
    s2_ref,           # (3, 8, 32)       cdt   pool1-H + conv2 H-stride matrices
    w2_ref,           # (3, 512, 256)    cdt   pool1-W folded into conv2 bands
    b2_ref,           # (1, 256)         f32   conv2 bias tiled over W
    fw1_ref,          # (8, 256, 128)    cdt   pool2 + flatten folded into fc1
    fb1_ref,          # (1, 128)         f32
    fw2_ref,          # (128, n_out)     cdt
    fb2_ref,          # (1, n_out)       f32
    out_ref,          # (N, n_out)       f32
    h2_ref,           # scratch (N, 8, 256) cdt  -- layer-2 activations
):
    f32 = jnp.float32
    cdt = COMPUTE_DTYPE
    N = x_ref.shape[0]
    H1 = x_ref.shape[1]            # 32
    WC0 = x_ref.shape[2]           # 32 * C_in
    WC1 = w1_ref.shape[2]          # 32 * 16 = 512
    H2 = s2_ref.shape[1]           # 8
    WC2 = w2_ref.shape[2]          # 8 * 32 = 256
    F1 = fw1_ref.shape[2]          # 128

    xb = x_ref[...].astype(cdt)                                  # (N, 32, WC0)

    # ---------------- conv1: 3x3, stride 1, pad 1, fused bias + ReLU ---------
    # H shift/padding via tiny row-mix matrices (T1); W shift/padding is baked
    # into the banded weight matrices W1 built in prepare_params().
    acc1 = jnp.zeros((N * H1, WC1), f32)
    for kh in range(3):
        sel = jnp.broadcast_to(t1_ref[kh][None], (N, H1, H1))
        rows = jnp.einsum('nhr,nrl->nhl', sel, xb,
                          preferred_element_type=f32).astype(cdt)
        acc1 = acc1 + jnp.dot(rows.reshape(N * H1, WC0), w1_ref[kh],
                              preferred_element_type=f32)
    h1 = jnp.maximum(acc1 + b1_ref[...], 0.0)                    # (N*32, 512)
    h1b = h1.astype(cdt).reshape(N, H1, WC1)

    # ------- avgpool 2x2  +  conv2 (3x3, stride 2, pad 1), fused + ReLU ------
    # S2 row matrices do the H-average (0.5) and the stride-2 / padded H taps;
    # W2 = (pool1 W-average) @ (conv2 banded, stride 2, pad 1 in W).
    acc2 = jnp.zeros((N * H2, WC2), f32)
    for kh in range(3):
        sel = jnp.broadcast_to(s2_ref[kh][None], (N, H2, H1))
        rows = jnp.einsum('nhr,nrl->nhl', sel, h1b,
                          preferred_element_type=f32).astype(cdt)
        acc2 = acc2 + jnp.dot(rows.reshape(N * H2, WC1), w2_ref[kh],
                              preferred_element_type=f32)
    h2 = jnp.maximum(acc2 + b2_ref[...], 0.0)                    # (N*8, 256)
    h2_ref[...] = h2.astype(cdt).reshape(N, H2, WC2)

    # ------- avgpool 2x2 + flatten + fc1 (pool & flatten folded into fw1) ----
    acc3 = jnp.zeros((N, F1), f32)
    for h in range(H2):
        acc3 = acc3 + jnp.dot(h2_ref[:, h, :], fw1_ref[h],
                              preferred_element_type=f32)
    f1 = jnp.maximum(acc3 + fb1_ref[...], 0.0)                   # (N, 128)
    # TODO(synk): Dropout(0.5) is identity in eval/inference mode; training-mode
    # stochastic masking is not implemented here.

    # ---------------- fc2 (128 -> n_out) --------------------------------------
    logits = jnp.dot(f1.astype(cdt), fw2_ref[...], preferred_element_type=f32)
    out_ref[...] = (logits + fb2_ref[...]).astype(out_ref.dtype)


def _full_spec(a):
    nd = a.ndim
    return pl.BlockSpec(a.shape, lambda *args, _nd=nd: (0,) * _nd)


def _fused_forward(x_packed, prep):
    """x_packed: (N, 32, 32*C_in) f32.  Returns logits (N, n_out) f32."""
    N = x_packed.shape[0]
    n_out = prep['fw2'].shape[1]
    args = (x_packed,
            prep['t1'], prep['w1'], prep['b1'],
            prep['s2'], prep['w2'], prep['b2'],
            prep['fw1'], prep['fb1'], prep['fw2'], prep['fb2'])
    return pl.pallas_call(
        _fused_cnn_kernel,
        out_shape=jax.ShapeDtypeStruct((N, n_out), jnp.float32),
        in_specs=[_full_spec(a) for a in args],
        out_specs=pl.BlockSpec((N, n_out), lambda: (0, 0)),
        scratch_shapes=[pltpu.VMEM((N, 8, 256), COMPUTE_DTYPE)],
    )(*args)


# ----------------------------------------------------------------------------
# Parameters: PyTorch-style init + one-time kernel-friendly re-layout.
# ----------------------------------------------------------------------------
def init_params(in_channels=3, out_channels=10, seed=0):
    key = jax.random.PRNGKey(seed)
    ks = jax.random.split(key, 8)

    def uniform(k, shape, fan_in):
        bound = 1.0 / jnp.sqrt(jnp.float32(fan_in))
        return jax.random.uniform(k, shape, jnp.float32, -bound, bound)

    return {
        "conv1_w": uniform(ks[0], (16, in_channels, 3, 3), in_channels * 9),
        "conv1_b": uniform(ks[1], (16,), in_channels * 9),
        "conv2_w": uniform(ks[2], (32, 16, 3, 3), 16 * 9),
        "conv2_b": uniform(ks[3], (32,), 16 * 9),
        "fc1_w": uniform(ks[4], (128, 32 * 4 * 4), 32 * 4 * 4),   # PyTorch (out, in)
        "fc1_b": uniform(ks[5], (128,), 32 * 4 * 4),
        "fc2_w": uniform(ks[6], (out_channels, 128), 128),
        "fc2_b": uniform(ks[7], (out_channels,), 128),
    }


def prepare_params(params, compute_dtype=COMPUTE_DTYPE):
    """One-time weight re-layout: banded conv matrices in the (W*C) packed
    layout, pooling folded into the following linear layer, tiled biases."""
    f32 = np.float32
    conv1_w = np.asarray(params['conv1_w'], f32)     # (16, C_in, 3, 3)
    conv1_b = np.asarray(params['conv1_b'], f32)
    conv2_w = np.asarray(params['conv2_w'], f32)     # (32, 16, 3, 3)
    conv2_b = np.asarray(params['conv2_b'], f32)
    fc1_w = np.asarray(params['fc1_w'], f32)         # (128, 512)
    fc1_b = np.asarray(params['fc1_b'], f32)
    fc2_w = np.asarray(params['fc2_w'], f32)         # (n_out, 128)
    fc2_b = np.asarray(params['fc2_b'], f32)

    c_in = conv1_w.shape[1]
    H = W = 32
    C1, C2 = 16, 32

    # conv1 banded weights: W1[kh][w_in*C_in + c, w_out*16 + o] = conv1_w[o,c,kh,kw]
    # with kw = w_in - w_out + 1 (zero outside the band ⇒ W padding built-in).
    W1 = np.zeros((3, W * c_in, W * C1), f32)
    for kh in range(3):
        for kw in range(3):
            blk = conv1_w[:, :, kh, kw].T                        # (C_in, 16)
            for wo in range(W):
                wi = wo + kw - 1
                if 0 <= wi < W:
                    W1[kh, wi * c_in:(wi + 1) * c_in, wo * C1:(wo + 1) * C1] = blk

    # conv1 H-shift row matrices (zero rows implement H padding).
    T1 = np.zeros((3, H, H), f32)
    for kh in range(3):
        for ho in range(H):
            hi = ho + kh - 1
            if 0 <= hi < H:
                T1[kh, ho, hi] = 1.0

    # avgpool1 W-average (0.5; the other 0.5 lives in S2).
    PW1 = np.zeros((W * C1, 16 * C1), f32)
    for wp in range(16):
        for dw in range(2):
            w = 2 * wp + dw
            PW1[w * C1:(w + 1) * C1, wp * C1:(wp + 1) * C1] = 0.5 * np.eye(C1, dtype=f32)

    # conv2 banded weights (stride 2, pad 1 in W) on the pooled width.
    B2 = np.zeros((3, 16 * C1, 8 * C2), f32)
    for kh in range(3):
        for kw in range(3):
            blk = conv2_w[:, :, kh, kw].T                        # (16, 32)
            for wo in range(8):
                wi = 2 * wo + kw - 1
                if 0 <= wi < 16:
                    B2[kh, wi * C1:(wi + 1) * C1, wo * C2:(wo + 1) * C2] = blk
    W2 = np.stack([PW1 @ B2[kh] for kh in range(3)])             # (3, 512, 256)

    # Combined avgpool1 H-average (0.5) + conv2 H taps (stride 2, pad 1).
    S2 = np.zeros((3, 8, H), f32)
    for kh in range(3):
        for h2 in range(8):
            p = 2 * h2 + kh - 1
            if 0 <= p < 16:
                S2[kh, h2, 2 * p] = 0.5
                S2[kh, h2, 2 * p + 1] = 0.5

    # fc1 with avgpool2 + PyTorch NCHW flatten (idx = c*16 + h3*4 + w3) folded:
    # FW1[h2, w2*32 + o, u] = 0.25 * fc1_w[u, o*16 + (h2//2)*4 + (w2//2)].
    fc1_r = fc1_w.reshape(128, C2, 4, 4)                         # [u, o, h3, w3]
    tmp = fc1_r.transpose(2, 3, 1, 0)                            # [h3, w3, o, u]
    tmp = np.repeat(np.repeat(tmp, 2, axis=0), 2, axis=1)        # (8, 8, 32, 128)
    FW1 = 0.25 * tmp.reshape(8, 8 * C2, 128)

    cdt = compute_dtype
    return dict(
        t1=jnp.asarray(T1, cdt),
        w1=jnp.asarray(W1, cdt),
        b1=jnp.asarray(np.tile(conv1_b, W)[None, :]),            # (1, 512) f32
        s2=jnp.asarray(S2, cdt),
        w2=jnp.asarray(W2, cdt),
        b2=jnp.asarray(np.tile(conv2_b, 8)[None, :]),            # (1, 256) f32
        fw1=jnp.asarray(FW1, cdt),
        fb1=jnp.asarray(fc1_b[None, :]),                         # (1, 128) f32
        fw2=jnp.asarray(fc2_w.T, cdt),                           # (128, n_out)
        fb2=jnp.asarray(fc2_b[None, :]),                         # (1, n_out) f32
    )


def forward(prep, x_nchw):
    """PyTorch-semantics forward.  x: (N, C, 32, 32) NCHW -> logits (N, n_out)."""
    N, C, H, W = x_nchw.shape
    assert H == 32 and W == 32, "fc1 = Linear(32*4*4, .) implies 32x32 input"
    # Single cheap input re-layout: NCHW -> (N, H, W*C) rows with lane-packed W,C.
    x = jnp.transpose(x_nchw, (0, 2, 3, 1)).reshape(N, H, W * C).astype(jnp.float32)
    return _fused_forward(x, prep)


# ----------------------------------------------------------------------------
# Pure-JAX reference (f32) for validation.
# ----------------------------------------------------------------------------
def _reference_forward(params, x):
    def conv(h, w, b, stride):
        dn = jax.lax.conv_dimension_numbers(h.shape, w.shape, ('NCHW', 'OIHW', 'NCHW'))
        h = jax.lax.conv_general_dilated(h, w, (stride, stride), [(1, 1), (1, 1)],
                                         dimension_numbers=dn)
        return jax.nn.relu(h + b[None, :, None, None])

    def avgpool(h):
        n, c, hh, ww = h.shape
        return h.reshape(n, c, hh // 2, 2, ww // 2, 2).mean(axis=(3, 5))

    h = avgpool(conv(x, params['conv1_w'], params['conv1_b'], 1))
    h = avgpool(conv(h, params['conv2_w'], params['conv2_b'], 2))
    h = h.reshape(h.shape[0], -1)
    h = jax.nn.relu(h @ params['fc1_w'].T + params['fc1_b'])
    return h @ params['fc2_w'].T + params['fc2_b']


if __name__ == "__main__":
    key = jax.random.PRNGKey(0)
    x = jax.random.normal(key, (2, 3, 32, 32), dtype=jnp.float32)
    params = init_params(in_channels=3, out_channels=10, seed=0)

    prep = prepare_params(params)          # one-time weight re-layout
    fwd = jax.jit(forward)
    logits = fwd(prep, x)
    jax.block_until_ready(logits)
    assert logits.shape == (2, 10)

    # Validate against a pure-JAX f32 reference (loose tol: bf16 MXU operands).
    ref = _reference_forward(params, x)
    max_err = float(jnp.max(jnp.abs(logits - ref)))
    assert max_err < 2e-2, f"max |kernel - reference| = {max_err}"

    print("KERNEL_OK")
</pallas_src>

<mosaic_0001>
module attributes {stable_mosaic.version = 11 : i64} {
  func.func @_fused_cnn_kernel(%arg0: memref<2x32x96xf32, #tpu.memory_space<vmem>>, %arg1: memref<3x32x32xbf16, #tpu.memory_space<vmem>>, %arg2: memref<3x96x512xbf16, #tpu.memory_space<vmem>>, %arg3: memref<1x512xf32, #tpu.memory_space<vmem>>, %arg4: memref<3x8x32xbf16, #tpu.memory_space<vmem>>, %arg5: memref<3x512x256xbf16, #tpu.memory_space<vmem>>, %arg6: memref<1x256xf32, #tpu.memory_space<vmem>>, %arg7: memref<8x256x128xbf16, #tpu.memory_space<vmem>>, %arg8: memref<1x128xf32, #tpu.memory_space<vmem>>, %arg9: memref<128x10xbf16, #tpu.memory_space<vmem>>, %arg10: memref<1x10xf32, #tpu.memory_space<vmem>>, %arg11: memref<2x10xf32, #tpu.memory_space<vmem>>, %arg12: memref<2x8x256xbf16, #tpu.memory_space<vmem>>) attributes {dimension_semantics = [], scalar_prefetch = 0 : i64, scratch_operands = 1 : i64, tpu.core_type = #tpu.core_type<tc>} {
    %c0 = arith.constant 0 : index
    %c0_0 = arith.constant 0 : index
    %c0_1 = arith.constant 0 : index
    %0 = vector.load %arg0[%c0, %c0_0, %c0_1] : memref<2x32x96xf32, #tpu.memory_space<vmem>>, vector<2x32x96xf32>
    %1 = arith.truncf %0 : vector<2x32x96xf32> to vector<2x32x96xbf16>
    %cst = arith.constant 0.000000e+00 : f32
    %2 = vector.broadcast %cst : f32 to vector<64x512xf32>
    %c0_2 = arith.constant 0 : index
    %c0_3 = arith.constant 0 : index
    %c0_4 = arith.constant 0 : index
    %3 = vector.load %arg1[%c0_2, %c0_3, %c0_4] : memref<3x32x32xbf16, #tpu.memory_space<vmem>>, vector<1x32x32xbf16>
    %4 = vector.shape_cast %3 : vector<1x32x32xbf16> to vector<32x32xbf16>
    %5 = vector.shape_cast %4 : vector<32x32xbf16> to vector<1x32x32xbf16>
    %6 = vector.shape_cast %5 : vector<1x32x32xbf16> to vector<1x32x32xbf16>
    %7 = vector.broadcast %6 : vector<1x32x32xbf16> to vector<2x32x32xbf16>
    "tpu.trace_start"() <{level = 10 : i32, message = "nhr,nrl->nhl"}> : () -> ()
    %cst_5 = arith.constant dense<0.000000e+00> : vector<2x32x96xf32>
    %8 = tpu.matmul %7, %1, %cst_5 {dimension_numbers = #tpu.dot_dimension_numbers<[2], [1], [1], [2], [0, 0, 0, 1, 1, 2], [0], [0]>} : vector<2x32x32xbf16>, vector<2x32x96xbf16>, vector<2x32x96xf32> -> vector<2x32x96xf32>
    "tpu.trace_stop"() : () -> ()
    %9 = arith.truncf %8 : vector<2x32x96xf32> to vector<2x32x96xbf16>
    %10 = vector.shape_cast %9 : vector<2x32x96xbf16> to vector<64x96xbf16>
    %c0_6 = arith.constant 0 : index
    %c0_7 = arith.constant 0 : index
    %c0_8 = arith.constant 0 : index
    %11 = vector.load %arg2[%c0_6, %c0_7, %c0_8] : memref<3x96x512xbf16, #tpu.memory_space<vmem>>, vector<1x96x512xbf16>
    %12 = vector.shape_cast %11 : vector<1x96x512xbf16> to vector<96x512xbf16>
    %cst_9 = arith.constant dense<0.000000e+00> : vector<64x512xf32>
    %13 = tpu.matmul %10, %12, %cst_9 {dimension_numbers = #tpu.dot_dimension_numbers<[1], [0], [0], [1], [0, 0, 1, 1], [], []>} : vector<64x96xbf16>, vector<96x512xbf16>, vector<64x512xf32> -> vector<64x512xf32>
    %14 = arith.addf %2, %13 : vector<64x512xf32>
    %c1 = arith.constant 1 : index
    %c0_10 = arith.constant 0 : index
    %c0_11 = arith.constant 0 : index
    %15 = vector.load %arg1[%c1, %c0_10, %c0_11] : memref<3x32x32xbf16, #tpu.memory_space<vmem>>, vector<1x32x32xbf16>
    %16 = vector.shape_cast %15 : vector<1x32x32xbf16> to vector<32x32xbf16>
    %17 = vector.shape_cast %16 : vector<32x32xbf16> to vector<1x32x32xbf16>
    %18 = vector.shape_cast %17 : vector<1x32x32xbf16> to vector<1x32x32xbf16>
    %19 = vector.broadcast %18 : vector<1x32x32xbf16> to vector<2x32x32xbf16>
    "tpu.trace_start"() <{level = 10 : i32, message = "nhr,nrl->nhl"}> : () -> ()
    %cst_12 = arith.constant dense<0.000000e+00> : vector<2x32x96xf32>
    %20 = tpu.matmul %19, %1, %cst_12 {dimension_numbers = #tpu.dot_dimension_numbers<[2], [1], [1], [2], [0, 0, 0, 1, 1, 2], [0], [0]>} : vector<2x32x32xbf16>, vector<2x32x96xbf16>, vector<2x32x96xf32> -> vector<2x32x96xf32>
    "tpu.trace_stop"() : () -> ()
    %21 = arith.truncf %20 : vector<2x32x96xf32> to vector<2x32x96xbf16>
    %22 = vector.shape_cast %21 : vector<2x32x96xbf16> to vector<64x96xbf16>
    %c1_13 = arith.constant 1 : index
    %c0_14 = arith.constant 0 : index
    %c0_15 = arith.constant 0 : index
    %23 = vector.load %arg2[%c1_13, %c0_14, %c0_15] : memref<3x96x512xbf16, #tpu.memory_space<vmem>>, vector<1x96x512xbf16>
    %24 = vector.shape_cast %23 : vector<1x96x512xbf16> to vector<96x512xbf16>
    %cst_16 = arith.constant dense<0.000000e+00> : vector<64x512xf32>
    %25 = tpu.matmul %22, %24, %cst_16 {dimension_numbers = #tpu.dot_dimension_numbers<[1], [0], [0], [1], [0, 0, 1, 1], [], []>} : vector<64x96xbf16>, vector<96x512xbf16>, vector<64x512xf32> -> vector<64x512xf32>
    %26 = arith.addf %14, %25 : vector<64x512xf32>
    %c2 = arith.constant 2 : index
    %c0_17 = arith.constant 0 : index
    %c0_18 = arith.constant 0 : index
    %27 = vector.load %arg1[%c2, %c0_17, %c0_18] : memref<3x32x32xbf16, #tpu.memory_space<vmem>>, vector<1x32x32xbf16>
    %28 = vector.shape_cast %27 : vector<1x32x32xbf16> to vector<32x32xbf16>
    %29 = vector.shape_cast %28 : vector<32x32xbf16> to vector<1x32x32xbf16>
    %30 = vector.shape_cast %29 : vector<1x32x32xbf16> to vector<1x32x32xbf16>
    %31 = vector.broadcast %30 : vector<1x32x32xbf16> to vector<2x32x32xbf16>
    "tpu.trace_start"() <{level = 10 : i32, message = "nhr,nrl->nhl"}> : () -> ()
    %cst_19 = arith.constant dense<0.000000e+00> : vector<2x32x96xf32>
    %32 = tpu.matmul %31, %1, %cst_19 {dimension_numbers = #tpu.dot_dimension_numbers<[2], [1], [1], [2], [0, 0, 0, 1, 1, 2], [0], [0]>} : vector<2x32x32xbf16>, vector<2x32x96xbf16>, vector<2x32x96xf32> -> vector<2x32x96xf32>
    "tpu.trace_stop"() : () -> ()
    %33 = arith.truncf %32 : vector<2x32x96xf32> to vector<2x32x96xbf16>
    %34 = vector.shape_cast %33 : vector<2x32x96xbf16> to vector<64x96xbf16>
    %c2_20 = arith.constant 2 : index
    %c0_21 = arith.constant 0 : index
    %c0_22 = arith.constant 0 : index
    %35 = vector.load %arg2[%c2_20, %c0_21, %c0_22] : memref<3x96x512xbf16, #tpu.memory_space<vmem>>, vector<1x96x512xbf16>
    %36 = vector.shape_cast %35 : vector<1x96x512xbf16> to vector<96x512xbf16>
    %cst_23 = arith.constant dense<0.000000e+00> : vector<64x512xf32>
    %37 = tpu.matmul %34, %36, %cst_23 {dimension_numbers = #tpu.dot_dimension_numbers<[1], [0], [0], [1], [0, 0, 1, 1], [], []>} : vector<64x96xbf16>, vector<96x512xbf16>, vector<64x512xf32> -> vector<64x512xf32>
    %38 = arith.addf %26, %37 : vector<64x512xf32>
    %c0_24 = arith.constant 0 : index
    %c0_25 = arith.constant 0 : index
    %39 = vector.load %arg3[%c0_24, %c0_25] : memref<1x512xf32, #tpu.memory_space<vmem>>, vector<1x512xf32>
    %40 = vector.broadcast %39 : vector<1x512xf32> to vector<64x512xf32>
    %41 = arith.addf %38, %40 : vector<64x512xf32>
    %cst_26 = arith.constant 0.000000e+00 : f32
    %42 = vector.broadcast %cst_26 : f32 to vector<64x512xf32>
    %43 = arith.maximumf %41, %42 : vector<64x512xf32>
    %44 = arith.truncf %43 : vector<64x512xf32> to vector<64x512xbf16>
    %45 = vector.shape_cast %44 : vector<64x512xbf16> to vector<2x32x512xbf16>
    %cst_27 = arith.constant 0.000000e+00 : f32
    %46 = vector.broadcast %cst_27 : f32 to vector<16x256xf32>
    %c0_28 = arith.constant 0 : index
    %c0_29 = arith.constant 0 : index
    %c0_30 = arith.constant 0 : index
    %47 = vector.load %arg4[%c0_28, %c0_29, %c0_30] : memref<3x8x32xbf16, #tpu.memory_space<vmem>>, vector<1x8x32xbf16>
    %48 = vector.shape_cast %47 : vector<1x8x32xbf16> to vector<8x32xbf16>
    %49 = vector.shape_cast %48 : vector<8x32xbf16> to vector<1x8x32xbf16>
    %50 = vector.shape_cast %49 : vector<1x8x32xbf16> to vector<1x8x32xbf16>
    %51 = vector.broadcast %50 : vector<1x8x32xbf16> to vector<2x8x32xbf16>
    "tpu.trace_start"() <{level = 10 : i32, message = "nhr,nrl->nhl"}> : () -> ()
    %cst_31 = arith.constant dense<0.000000e+00> : vector<2x8x512xf32>
    %52 = tpu.matmul %51, %45, %cst_31 {dimension_numbers = #tpu.dot_dimension_numbers<[2], [1], [1], [2], [0, 0, 0, 1, 1, 2], [0], [0]>} : vector<2x8x32xbf16>, vector<2x32x512xbf16>, vector<2x8x512xf32> -> vector<2x8x512xf32>
    "tpu.trace_stop"() : () -> ()
    %53 = arith.truncf %52 : vector<2x8x512xf32> to vector<2x8x512xbf16>
    %54 = vector.shape_cast %53 : vector<2x8x512xbf16> to vector<16x512xbf16>
    %c0_32 = arith.constant 0 : index
    %c0_33 = arith.constant 0 : index
    %c0_34 = arith.constant 0 : index
    %55 = vector.load %arg5[%c0_32, %c0_33, %c0_34] : memref<3x512x256xbf16, #tpu.memory_space<vmem>>, vector<1x512x256xbf16>
    %56 = vector.shape_cast %55 : vector<1x512x256xbf16> to vector<512x256xbf16>
    %cst_35 = arith.constant dense<0.000000e+00> : vector<16x256xf32>
    %57 = tpu.matmul %54, %56, %cst_35 {dimension_numbers = #tpu.dot_dimension_numbers<[1], [0], [0], [1], [0, 0, 1, 1], [], []>} : vector<16x512xbf16>, vector<512x256xbf16>, vector<16x256xf32> -> vector<16x256xf32>
    %58 = arith.addf %46, %57 : vector<16x256xf32>
    %c1_36 = arith.constant 1 : index
    %c0_37 = arith.constant 0 : index
    %c0_38 = arith.constant 0 : index
    %59 = vector.load %arg4[%c1_36, %c0_37, %c0_38] : memref<3x8x32xbf16, #tpu.memory_space<vmem>>, vector<1x8x32xbf16>
    %60 = vector.shape_cast %59 : vector<1x8x32xbf16> to vector<8x32xbf16>
    %61 = vector.shape_cast %60 : vector<8x32xbf16> to vector<1x8x32xbf16>
    %62 = vector.shape_cast %61 : vector<1x8x32xbf16> to vector<1x8x32xbf16>
    %63 = vector.broadcast %62 : vector<1x8x32xbf16> to vector<2x8x32xbf16>
    "tpu.trace_start"() <{level = 10 : i32, message = "nhr,nrl->nhl"}> : () -> ()
    %cst_39 = arith.constant dense<0.000000e+00> : vector<2x8x512xf32>
    %64 = tpu.matmul %63, %45, %cst_39 {dimension_numbers = #tpu.dot_dimension_numbers<[2], [1], [1], [2], [0, 0, 0, 1, 1, 2], [0], [0]>} : vector<2x8x32xbf16>, vector<2x32x512xbf16>, vector<2x8x512xf32> -> vector<2x8x512xf32>
    "tpu.trace_stop"() : () -> ()
    %65 = arith.truncf %64 : vector<2x8x512xf32> to vector<2x8x512xbf16>
    %66 = vector.shape_cast %65 : vector<2x8x512xbf16> to vector<16x512xbf16>
    %c1_40 = arith.constant 1 : index
    %c0_41 = arith.constant 0 : index
    %c0_42 = arith.constant 0 : index
    %67 = vector.load %arg5[%c1_40, %c0_41, %c0_42] : memref<3x512x256xbf16, #tpu.memory_space<vmem>>, vector<1x512x256xbf16>
    %68 = vector.shape_cast %67 : vector<1x512x256xbf16> to vector<512x256xbf16>
    %cst_43 = arith.constant dense<0.000000e+00> : vector<16x256xf32>
    %69 = tpu.matmul %66, %68, %cst_43 {dimension_numbers = #tpu.dot_dimension_numbers<[1], [0], [0], [1], [0, 0, 1, 1], [], []>} : vector<16x512xbf16>, vector<512x256xbf16>, vector<16x256xf32> -> vector<16x256xf32>
    %70 = arith.addf %58, %69 : vector<16x256xf32>
    %c2_44 = arith.constant 2 : index
    %c0_45 = arith.constant 0 : index
    %c0_46 = arith.constant 0 : index
    %71 = vector.load %arg4[%c2_44, %c0_45, %c0_46] : memref<3x8x32xbf16, #tpu.memory_space<vmem>>, vector<1x8x32xbf16>
    %72 = vector.shape_cast %71 : vector<1x8x32xbf16> to vector<8x32xbf16>
    %73 = vector.shape_cast %72 : vector<8x32xbf16> to vector<1x8x32xbf16>
    %74 = vector.shape_cast %73 : vector<1x8x32xbf16> to vector<1x8x32xbf16>
    %75 = vector.broadcast %74 : vector<1x8x32xbf16> to vector<2x8x32xbf16>
    "tpu.trace_start"() <{level = 10 : i32, message = "nhr,nrl->nhl"}> : () -> ()
    %cst_47 = arith.constant dense<0.000000e+00> : vector<2x8x512xf32>
    %76 = tpu.matmul %75, %45, %cst_47 {dimension_numbers = #tpu.dot_dimension_numbers<[2], [1], [1], [2], [0, 0, 0, 1, 1, 2], [0], [0]>} : vector<2x8x32xbf16>, vector<2x32x512xbf16>, vector<2x8x512xf32> -> vector<2x8x512xf32>
    "tpu.trace_stop"() : () -> ()
    %77 = arith.truncf %76 : vector<2x8x512xf32> to vector<2x8x512xbf16>
    %78 = vector.shape_cast %77 : vector<2x8x512xbf16> to vector<16x512xbf16>
    %c2_48 = arith.constant 2 : index
    %c0_49 = arith.constant 0 : index
    %c0_50 = arith.constant 0 : index
    %79 = vector.load %arg5[%c2_48, %c0_49, %c0_50] : memref<3x512x256xbf16, #tpu.memory_space<vmem>>, vector<1x512x256xbf16>
    %80 = vector.shape_cast %79 : vector<1x512x256xbf16> to vector<512x256xbf16>
    %cst_51 = arith.constant dense<0.000000e+00> : vector<16x256xf32>
    %81 = tpu.matmul %78, %80, %cst_51 {dimension_numbers = #tpu.dot_dimension_numbers<[1], [0], [0], [1], [0, 0, 1, 1], [], []>} : vector<16x512xbf16>, vector<512x256xbf16>, vector<16x256xf32> -> vector<16x256xf32>
    %82 = arith.addf %70, %81 : vector<16x256xf32>
    %c0_52 = arith.constant 0 : index
    %c0_53 = arith.constant 0 : index
    %83 = vector.load %arg6[%c0_52, %c0_53] : memref<1x256xf32, #tpu.memory_space<vmem>>, vector<1x256xf32>
    %84 = vector.broadcast %83 : vector<1x256xf32> to vector<16x256xf32>
    %85 = arith.addf %82, %84 : vector<16x256xf32>
    %cst_54 = arith.constant 0.000000e+00 : f32
    %86 = vector.broadcast %cst_54 : f32 to vector<16x256xf32>
    %87 = arith.maximumf %85, %86 : vector<16x256xf32>
    %88 = arith.truncf %87 : vector<16x256xf32> to vector<16x256xbf16>
    %89 = vector.shape_cast %88 : vector<16x256xbf16> to vector<2x8x256xbf16>
    %c0_55 = arith.constant 0 : index
    %c0_56 = arith.constant 0 : index
    %c0_57 = arith.constant 0 : index
    %90 = vector.load %arg12[%c0_55, %c0_56, %c0_57] : memref<2x8x256xbf16, #tpu.memory_space<vmem>>, vector<2x8x256xbf16>
    tpu.vector_store %arg12[%c0_55, %c0_56, %c0_57], %89 {strides = array<i32>} : memref<2x8x256xbf16, #tpu.memory_space<vmem>>, vector<2x8x256xbf16>,
    %cst_58 = arith.constant 0.000000e+00 : f32
    %91 = vector.broadcast %cst_58 : f32 to vector<2x128xf32>
    %c0_59 = arith.constant 0 : index
    %c0_60 = arith.constant 0 : index
    %c0_61 = arith.constant 0 : index
    %92 = vector.load %arg12[%c0_59, %c0_60, %c0_61] : memref<2x8x256xbf16, #tpu.memory_space<vmem>>, vector<2x1x256xbf16>
    %93 = vector.shape_cast %92 : vector<2x1x256xbf16> to vector<2x256xbf16>
    %c0_62 = arith.constant 0 : index
    %c0_63 = arith.constant 0 : index
    %c0_64 = arith.constant 0 : index
    %94 = vector.load %arg7[%c0_62, %c0_63, %c0_64] : memref<8x256x128xbf16, #tpu.memory_space<vmem>>, vector<1x256x128xbf16>
    %95 = vector.shape_cast %94 : vector<1x256x128xbf16> to vector<256x128xbf16>
    %cst_65 = arith.constant dense<0.000000e+00> : vector<2x128xf32>
    %96 = tpu.matmul %93, %95, %cst_65 {dimension_numbers = #tpu.dot_dimension_numbers<[1], [0], [0], [1], [0, 0, 1, 1], [], []>} : vector<2x256xbf16>, vector<256x128xbf16>, vector<2x128xf32> -> vector<2x128xf32>
    %97 = arith.addf %91, %96 : vector<2x128xf32>
    %c0_66 = arith.constant 0 : index
    %c1_67 = arith.constant 1 : index
    %c0_68 = arith.constant 0 : index
    %98 = vector.load %arg12[%c0_66, %c1_67, %c0_68] : memref<2x8x256xbf16, #tpu.memory_space<vmem>>, vector<2x1x256xbf16>
    %99 = vector.shape_cast %98 : vector<2x1x256xbf16> to vector<2x256xbf16>
    %c1_69 = arith.constant 1 : index
    %c0_70 = arith.constant 0 : index
    %c0_71 = arith.constant 0 : index
    %100 = vector.load %arg7[%c1_69, %c0_70, %c0_71] : memref<8x256x128xbf16, #tpu.memory_space<vmem>>, vector<1x256x128xbf16>
    %101 = vector.shape_cast %100 : vector<1x256x128xbf16> to vector<256x128xbf16>
    %cst_72 = arith.constant dense<0.000000e+00> : vector<2x128xf32>
    %102 = tpu.matmul %99, %101, %cst_72 {dimension_numbers = #tpu.dot_dimension_numbers<[1], [0], [0], [1], [0, 0, 1, 1], [], []>} : vector<2x256xbf16>, vector<256x128xbf16>, vector<2x128xf32> -> vector<2x128xf32>
    %103 = arith.addf %97, %102 : vector<2x128xf32>
    %c0_73 = arith.constant 0 : index
    %c2_74 = arith.constant 2 : index
    %c0_75 = arith.constant 0 : index
    %104 = vector.load %arg12[%c0_73, %c2_74, %c0_75] : memref<2x8x256xbf16, #tpu.memory_space<vmem>>, vector<2x1x256xbf16>
    %105 = vector.shape_cast %104 : vector<2x1x256xbf16> to vector<2x256xbf16>
    %c2_76 = arith.constant 2 : index
    %c0_77 = arith.constant 0 : index
    %c0_78 = arith.constant 0 : index
    %106 = vector.load %arg7[%c2_76, %c0_77, %c0_78] : memref<8x256x128xbf16, #tpu.memory_space<vmem>>, vector<1x256x128xbf16>
    %107 = vector.shape_cast %106 : vector<1x256x128xbf16> to vector<256x128xbf16>
    %cst_79 = arith.constant dense<0.000000e+00> : vector<2x128xf32>
    %108 = tpu.matmul %105, %107, %cst_79 {dimension_numbers = #tpu.dot_dimension_numbers<[1], [0], [0], [1], [0, 0, 1, 1], [], []>} : vector<2x256xbf16>, vector<256x128xbf16>, vector<2x128xf32> -> vector<2x128xf32>
    %109 = arith.addf %103, %108 : vector<2x128xf32>
    %c0_80 = arith.constant 0 : index
    %c3 = arith.constant 3 : index
    %c0_81 = arith.constant 0 : index
    %110 = vector.load %arg12[%c0_80, %c3, %c0_81] : memref<2x8x256xbf16, #tpu.memory_space<vmem>>, vector<2x1x256xbf16>
    %111 = vector.shape_cast %110 : vector<2x1x256xbf16> to vector<2x256xbf16>
    %c3_82 = arith.constant 3 : index
    %c0_83 = arith.constant 0 : index
    %c0_84 = arith.constant 0 : index
    %112 = vector.load %arg7[%c3_82, %c0_83, %c0_84] : memref<8x256x128xbf16, #tpu.memory_space<vmem>>, vector<1x256x128xbf16>
    %113 = vector.shape_cast %112 : vector<1x256x128xbf16> to vector<256x128xbf16>
    %cst_85 = arith.constant dense<0.000000e+00> : vector<2x128xf32>
    %114 = tpu.matmul %111, %113, %cst_85 {dimension_numbers = #tpu.dot_dimension_numbers<[1], [0], [0], [1], [0, 0, 1, 1], [], []>} : vector<2x256xbf16>, vector<256x128xbf16>, vector<2x128xf32> -> vector<2x128xf32>
    %115 = arith.addf %109, %114 : vector<2x128xf32>
    %c0_86 = arith.constant 0 : index
    %c4 = arith.constant 4 : index
    %c0_87 = arith.constant 0 : index
    %116 = vector.load %arg12[%c0_86, %c4, %c0_87] : memref<2x8x256xbf16, #tpu.memory_space<vmem>>, vector<2x1x256xbf16>
    %117 = vector.shape_cast %116 : vector<2x1x256xbf16> to vector<2x256xbf16>
    %c4_88 = arith.constant 4 : index
    %c0_89 = arith.constant 0 : index
    %c0_90 = arith.constant 0 : index
    %118 = vector.load %arg7[%c4_88, %c0_89, %c0_90] : memref<8x256x128xbf16, #tpu.memory_space<vmem>>, vector<1x256x128xbf16>
    %119 = vector.shape_cast %118 : vector<1x256x128xbf16> to vector<256x128xbf16>
    %cst_91 = arith.constant dense<0.000000e+00> : vector<2x128xf32>
    %120 = tpu.matmul %117, %119, %cst_91 {dimension_numbers = #tpu.dot_dimension_numbers<[1], [0], [0], [1], [0, 0, 1, 1], [], []>} : vector<2x256xbf16>, vector<256x128xbf16>, vector<2x128xf32> -> vector<2x128xf32>
    %121 = arith.addf %115, %120 : vector<2x128xf32>
    %c0_92 = arith.constant 0 : index
    %c5 = arith.constant 5 : index
    %c0_93 = arith.constant 0 : index
    %122 = vector.load %arg12[%c0_92, %c5, %c0_93] : memref<2x8x256xbf16, #tpu.memory_space<vmem>>, vector<2x1x256xbf16>
    %123 = vector.shape_cast %122 : vector<2x1x256xbf16> to vector<2x256xbf16>
    %c5_94 = arith.constant 5 : index
    %c0_95 = arith.constant 0 : index
    %c0_96 = arith.constant 0 : index
    %124 = vector.load %arg7[%c5_94, %c0_95, %c0_96] : memref<8x256x128xbf16, #tpu.memory_space<vmem>>, vector<1x256x128xbf16>
    %125 = vector.shape_cast %124 : vector<1x256x128xbf16> to vector<256x128xbf16>
    %cst_97 = arith.constant dense<0.000000e+00> : vector<2x128xf32>
    %126 = tpu.matmul %123, %125, %cst_97 {dimension_numbers = #tpu.dot_dimension_numbers<[1], [0], [0], [1], [0, 0, 1, 1], [], []>} : vector<2x256xbf16>, vector<256x128xbf16>, vector<2x128xf32> -> vector<2x128xf32>
    %127 = arith.addf %121, %126 : vector<2x128xf32>
    %c0_98 = arith.constant 0 : index
    %c6 = arith.constant 6 : index
    %c0_99 = arith.constant 0 : index
    %128 = vector.load %arg12[%c0_98, %c6, %c0_99] : memref<2x8x256xbf16, #tpu.memory_space<vmem>>, vector<2x1x256xbf16>
    %129 = vector.shape_cast %128 : vector<2x1x256xbf16> to vector<2x256xbf16>
    %c6_100 = arith.constant 6 : index
    %c0_101 = arith.constant 0 : index
    %c0_102 = arith.constant 0 : index
    %130 = vector.load %arg7[%c6_100, %c0_101, %c0_102] : memref<8x256x128xbf16, #tpu.memory_space<vmem>>, vector<1x256x128xbf16>
    %131 = vector.shape_cast %130 : vector<1x256x128xbf16> to vector<256x128xbf16>
    %cst_103 = arith.constant dense<0.000000e+00> : vector<2x128xf32>
    %132 = tpu.matmul %129, %131, %cst_103 {dimension_numbers = #tpu.dot_dimension_numbers<[1], [0], [0], [1], [0, 0, 1, 1], [], []>} : vector<2x256xbf16>, vector<256x128xbf16>, vector<2x128xf32> -> vector<2x128xf32>
    %133 = arith.addf %127, %132 : vector<2x128xf32>
    %c0_104 = arith.constant 0 : index
    %c7 = arith.constant 7 : index
    %c0_105 = arith.constant 0 : index
    %134 = vector.load %arg12[%c0_104, %c7, %c0_105] : memref<2x8x256xbf16, #tpu.memory_space<vmem>>, vector<2x1x256xbf16>
    %135 = vector.shape_cast %134 : vector<2x1x256xbf16> to vector<2x256xbf16>
    %c7_106 = arith.constant 7 : index
    %c0_107 = arith.constant 0 : index
    %c0_108 = arith.constant 0 : index
    %136 = vector.load %arg7[%c7_106, %c0_107, %c0_108] : memref<8x256x128xbf16, #tpu.memory_space<vmem>>, vector<1x256x128xbf16>
    %137 = vector.shape_cast %136 : vector<1x256x128xbf16> to vector<256x128xbf16>
    %cst_109 = arith.constant dense<0.000000e+00> : vector<2x128xf32>
    %138 = tpu.matmul %135, %137, %cst_109 {dimension_numbers = #tpu.dot_dimension_numbers<[1], [0], [0], [1], [0, 0, 1, 1], [], []>} : vector<2x256xbf16>, vector<256x128xbf16>, vector<2x128xf32> -> vector<2x128xf32>
    %139 = arith.addf %133, %138 : vector<2x128xf32>
    %c0_110 = arith.constant 0 : index
    %c0_111 = arith.constant 0 : index
    %140 = vector.load %arg8[%c0_110, %c0_111] : memref<1x128xf32, #tpu.memory_space<vmem>>, vector<1x128xf32>
    %141 = vector.broadcast %140 : vector<1x128xf32> to vector<2x128xf32>
    %142 = arith.addf %139, %141 : vector<2x128xf32>
    %cst_112 = arith.constant 0.000000e+00 : f32
    %143 = vector.broadcast %cst_112 : f32 to vector<2x128xf32>
    %144 = arith.maximumf %142, %143 : vector<2x128xf32>
    %145 = arith.truncf %144 : vector<2x128xf32> to vector<2x128xbf16>
    %c0_113 = arith.constant 0 : index
    %c0_114 = arith.constant 0 : index
    %146 = vector.load %arg9[%c0_113, %c0_114] : memref<128x10xbf16, #tpu.memory_space<vmem>>, vector<128x10xbf16>
    %cst_115 = arith.constant dense<0.000000e+00> : vector<2x10xf32>
    %147 = tpu.matmul %145, %146, %cst_115 {dimension_numbers = #tpu.dot_dimension_numbers<[1], [0], [0], [1], [0, 0, 1, 1], [], []>} : vector<2x128xbf16>, vector<128x10xbf16>, vector<2x10xf32> -> vector<2x10xf32>
    %c0_116 = arith.constant 0 : index
    %c0_117 = arith.constant 0 : index
    %148 = vector.load %arg10[%c0_116, %c0_117] : memref<1x10xf32, #tpu.memory_space<vmem>>, vector<1x10xf32>
    %149 = vector.broadcast %148 : vector<1x10xf32> to vector<2x10xf32>
    %150 = arith.addf %147, %149 : vector<2x10xf32>
    %c0_118 = arith.constant 0 : index
    %c0_119 = arith.constant 0 : index
    %151 = vector.load %arg11[%c0_118, %c0_119] : memref<2x10xf32, #tpu.memory_space<vmem>>, vector<2x10xf32>
    tpu.vector_store %arg11[%c0_118, %c0_119], %150 {strides = array<i32>} : memref<2x10xf32, #tpu.memory_space<vmem>>, vector<2x10xf32>,
    return
  }
}

</mosaic_0001>

<llo_original>
// kernel: forward.1
$region0: #{forward.1}
  #allocation0 [shape = 'u32[]', space=smem, size = 0x4, offset = 0x4, fixed_abs, tag = 'smem constant byte address 0x4 - core index']
  #allocation1 [shape = 'u32[144,128]{1,0:T(1,128)}', space=vmem, size = 0x12000, scoped, tag = 'internal scratch']
  #allocation2 [shape = 'bf16[2,8,256]{2,1,0:T(8,128)(2,1)}', space=vmem, size = 0x2000, scoped, tag = 'scratch operand']
  %s0 = inlined_call_operand.vmem [shape: f32[2,32,96], index: 0, kind: input, shape index: {}]
  %s1 = inlined_call_operand.vmem [shape: bf16[3,32,32], index: 1, kind: input, shape index: {}]
  %s2 = inlined_call_operand.vmem [shape: bf16[3,96,512], index: 2, kind: input, shape index: {}]
  %s3 = inlined_call_operand.vmem [shape: f32[1,512], index: 3, kind: input, shape index: {}]
  %s4 = inlined_call_operand.vmem [shape: bf16[3,8,32], index: 4, kind: input, shape index: {}]
  %s5 = inlined_call_operand.hbm [shape: bf16[3,512,256], index: 5, kind: input, shape index: {}]
  %s6 = inlined_call_operand.vmem [shape: f32[1,256], index: 6, kind: input, shape index: {}]
  %s7 = inlined_call_operand.hbm [shape: bf16[8,256,128], index: 7, kind: input, shape index: {}]
  %s8 = inlined_call_operand.vmem [shape: f32[1,128], index: 8, kind: input, shape index: {}]
  %s9 = inlined_call_operand.vmem [shape: bf16[128,10], index: 9, kind: input, shape index: {}]
  %s10 = inlined_call_operand.vmem [shape: f32[1,10], index: 10, kind: input, shape index: {}]
  %s11 = inlined_call_operand.hbm [shape: f32[2,10], index: 11, kind: output, shape index: {}]
  %s12 = sld [smem:[#allocation0]]
  $region62: #{forward.1} parent=0
    _
  %s14 = ssub.s32 1, %s12
  %s15 = scalar_select 0, %s14, %s12
  $region1: #{forward.1} parent=0
    #allocation3 [shape = 'u8[786432]{0}', space=vmem, size = 0xc0000, scoped, tag = 'input window, operand 5, single buffered']
    #allocation4 [shape = 's32[1]{0}', space=sflag, size = 0x4, scoped, tag = 'scoped memory for forward.1']
    #allocation5 [shape = 's32[1]{0}', space=sflag, size = 0x4, scoped, tag = 'scoped memory for forward.1']
    #allocation6 [shape = 'u8[524288]{0}', space=vmem, size = 0x80000, scoped, tag = 'input window, operand 7, single buffered']
    #allocation7 [shape = 's32[1]{0}', space=sflag, size = 0x4, scoped, tag = 'scoped memory for forward.1']
    #allocation8 [shape = 'u8[1024]{0}', space=vmem, size = 0x400, scoped, tag = 'output window, operand 0, single buffered']
    %16 = vsyncpa [#allocation4], 0
    %17 = vsyncpa [#allocation7], 0
    %18 = vsyncpa [#allocation5], 0
    // Predicated region
    $region2: #{forward.1} parent=1 // pred_check
      _
    $region3: #{forward.1} parent=1 // pred_check_branch
      %20 = sbr.rel (0) target = $region5
    $region4: #{forward.1} parent=1 // pred_region
      _
    $region5: #{forward.1} parent=1 // pred_fallthru
      _
    // Predicated region
    $region6: #{forward.1} parent=1 // pred_check
      _
    $region7: #{forward.1} parent=1 // pred_check_branch
      %22 = sbr.rel (0) target = $region9
    $region8: #{forward.1} parent=1 // pred_region
      _
    $region9: #{forward.1} parent=1 // pred_fallthru
      _
    // Predicated region
    $region10: #{forward.1} parent=1 // pred_check
      _
    $region11: #{forward.1} parent=1 // pred_check_branch
      %24 = sbr.rel (0) target = $region13
    $region12: #{forward.1} parent=1 // pred_region
      _
    $region13: #{forward.1} parent=1 // pred_fallthru
      _
    // Predicated region
    $region14: #{forward.1} parent=1 // pred_check
      _
    $region15: #{forward.1} parent=1 // pred_check_branch
      %26 = sbr.rel (0) target = $region17
    $region16: #{forward.1} parent=1 // pred_region
      _
    $region17: #{forward.1} parent=1 // pred_fallthru
      _
    // Predicated region
    $region18: #{forward.1} parent=1 // pred_check
      _
    $region19: #{forward.1} parent=1 // pred_check_branch
      %28 = sbr.rel (0) target = $region21
    $region20: #{forward.1} parent=1 // pred_region
      _
    $region21: #{forward.1} parent=1 // pred_fallthru
      _
    // Predicated region
    $region22: #{forward.1} parent=1 // pred_check
      _
    $region23: #{forward.1} parent=1 // pred_check_branch
      %30 = sbr.rel (0) target = $region25
    $region24: #{forward.1} parent=1 // pred_region
      %s32 = ssub.s32 24576, 24576
      %33 = vsyncadd [#allocation4], %s32
      %s34 = sshll.u32 [#allocation3], 4
      %s35 = int_to_ptr.vmem [resolvable:$true] %s34
      %40 = dma.hbm_to_vmem [thread:$0]  %s5, 24576, %s35, [#allocation4], 128, 128, 8
    $region25: #{forward.1} parent=1 // pred_fallthru
      _
    // Predicated region
    $region26: #{forward.1} parent=1 // pred_check
      _
    $region27: #{forward.1} parent=1 // pred_check_branch
      %42 = sbr.rel (0) target = $region29
    $region28: #{forward.1} parent=1 // pred_region
      _
    $region29: #{forward.1} parent=1 // pred_fallthru
      _
    // Predicated region
    $region30: #{forward.1} parent=1 // pred_check
      _
    $region31: #{forward.1} parent=1 // pred_check_branch
      %44 = sbr.rel (0) target = $region33
    $region32: #{forward.1} parent=1 // pred_region
      %s46 = ssub.s32 16384, 16384
      %47 = vsyncadd [#allocation7], %s46
      %s48 = sshll.u32 [#allocation6], 4
      %s49 = int_to_ptr.vmem [resolvable:$true] %s48
      %54 = dma.hbm_to_vmem [thread:$0]  %s7, 16384, %s49, [#allocation7], 64, 64, 4
    $region33: #{forward.1} parent=1 // pred_fallthru
      _
    // Predicated region
    $region34: #{forward.1} parent=1 // pred_check
      _
    $region35: #{forward.1} parent=1 // pred_check_branch
      %56 = sbr.rel (0) target = $region37
    $region36: #{forward.1} parent=1 // pred_region
      _
    $region37: #{forward.1} parent=1 // pred_fallthru
      _
    // Predicated region
    $region38: #{forward.1} parent=1 // pred_check
      _
    $region39: #{forward.1} parent=1 // pred_check_branch
      %58 = sbr.rel (0) target = $region41
    $region40: #{forward.1} parent=1 // pred_region
      _
    $region41: #{forward.1} parent=1 // pred_fallthru
      _
    // Predicated region
    $region42: #{forward.1} parent=1 // pred_check
      _
    $region43: #{forward.1} parent=1 // pred_check_branch
      %60 = sbr.rel (0) target = $region45
    $region44: #{forward.1} parent=1 // pred_region
      _
    $region45: #{forward.1} parent=1 // pred_fallthru
      _
    // Predicated region
    $region46: #{forward.1} parent=1 // pred_check
      _
    $region47: #{forward.1} parent=1 // pred_check_branch
      %62 = sbr.rel (0) target = $region49
    $region48: #{forward.1} parent=1 // pred_region
      %63 = dma.done [#allocation4], 24576
    $region49: #{forward.1} parent=1 // pred_fallthru
      _
    // Predicated region
    $region50: #{forward.1} parent=1 // pred_check
      _
    $region51: #{forward.1} parent=1 // pred_check_branch
      %65 = sbr.rel (0) target = $region53
    $region52: #{forward.1} parent=1 // pred_region
      %66 = dma.done [#allocation7], 16384
    $region53: #{forward.1} parent=1 // pred_fallthru
      _
    %v68 = vld [vmem:[%s0] sm:$0xff]
    %v69 = vld [vmem:[%s0 + $0x8] sm:$0xff]
    %v70 = vld [vmem:[%s0 + $0x10] sm:$0xff]
    %v71 = vld [vmem:[%s0 + $0x18] sm:$0xff]
    %v72 = vld [vmem:[%s0 + $0x20] sm:$0xff]
    %v73 = vld [vmem:[%s0 + $0x28] sm:$0xff]
    %v74 = vld [vmem:[%s0 + $0x30] sm:$0xff]
    %v75 = vld [vmem:[%s0 + $0x38] sm:$0xff]
    %v76 = vpack.c.bf16 %v69, %v68
    %v77 = vpack.c.bf16 %v71, %v70
    %v78 = vpack.c.bf16 %v73, %v72
    %v79 = vpack.c.bf16 %v75, %v74
    %v80 = vld [vmem:[%s1] sm:$0xf]
    %v81 = vld [vmem:[%s1 + $0x4] sm:$0xf]
    %v82 = vld [vmem:[%s1 + $0x8] sm:$0xf]
    %v83 = vld [vmem:[%s1 + $0xc] sm:$0xf]
    %v88 = vunpack.c.l.b16 %v80
    %v89 = vunpack.c.l.b16 %v81
    %v90 = vunpack.c.l.b16 %v82
    %v91 = vunpack.c.l.b16 %v83
    %v92 = vpack.c.b16 %v89, %v88
    %v93 = vpack.c.b16 %v91, %v90
    %vm94 = vcmask 261120
    %v96 = vsel %vm94, %v92, 0
    %v99 = vsel %vm94, %v93, 0
    %101 = vmatprep.subr.bf16.mxu0 0
    %102 = vmatpush1.bf16.msra.mxu0 %v76
    %103 = vmatprep.subr.bf16.mxu0 0
    %104 = vmatpush1.bf16.msra.mxu0 %v77
    %105 = vmatprep.subr.bf16.mxu0 0
    %106 = vmatpush1.bf16.msra.mxu0 0
    %107 = vmatprep.subr.bf16.mxu0 0
    %108 = vmatpush1.bf16.msra.mxu0 0
    %109 = vmatprep.subr.bf16.mxu0 0
    %110 = vmatpush1.bf16.msra.mxu0 0
    %111 = vmatprep.subr.bf16.mxu0 0
    %112 = vmatpush1.bf16.msra.mxu0 0
    %113 = vmatprep.subr.bf16.mxu0 0
    %114 = vmatpush1.bf16.msra.mxu0 0
    %115 = vmatprep.subr.bf16.mxu0 0
    %116 = vmatpush1.bf16.msra.mxu0 0
    %117 = vmatprep.subr.bf16.mxu0 0
    %118 = vmatpush1.bf16.msra.mxu0 0
    %119 = vmatprep.subr.bf16.mxu0 0
    %120 = vmatpush1.bf16.msra.mxu0 0
    %121 = vmatprep.subr.bf16.mxu0 0
    %122 = vmatpush1.bf16.msra.mxu0 0
    %123 = vmatprep.subr.bf16.mxu0 0
    %124 = vmatpush1.bf16.msra.mxu0 0
    %125 = vmatprep.subr.bf16.mxu0 0
    %126 = vmatpush1.bf16.msra.mxu0 0
    %127 = vmatprep.subr.bf16.mxu0 0
    %128 = vmatpush1.bf16.msra.mxu0 0
    %129 = vmatprep.subr.bf16.mxu0 0
    %130 = vmatpush1.bf16.msra.mxu0 0
    %131 = vmatprep.subr.bf16.mxu0 0
    %132 = vmatpush1.bf16.msra.mxu0 0
    %133 = vmatprep.mubr.bf16.mxu0 0
    %134 = vmatmul.mubr.bf16.gmra.mrb[0].mxu0 %v96
    %v135 = vpop.f32.mrb[0].mxu0
    %v136 = vadd.f32 0.0, %v135
    %v137 = vpop.f32.mrb[0].mxu0
    %v138 = vpop.f32.mrb[0].mxu0
    %v139 = vadd.f32 0.0, %v138
    %v140 = vpop.f32.mrb[0].mxu0
    %141 = vmatprep.mubr.bf16.mxu0 0
    %142 = vmatmul.mubr.bf16.gmra.mrb[0].mxu0 %v99
    %v143 = vpop.f32.mrb[0].mxu0
    %v144 = vadd.f32 0.0, %v143
    %v145 = vpop.f32.mrb[0].mxu0
    %v146 = vpop.f32.mrb[0].mxu0
    %v147 = vadd.f32 0.0, %v146
    %v148 = vpop.f32.mrb[0].mxu0
    %149 = vdwg.mxu0
    %150 = vmatprep.subr.bf16.mxu0 0
    %151 = vmatpush1.bf16.msra.mxu0 %v78
    %152 = vmatprep.subr.bf16.mxu0 0
    %153 = vmatpush1.bf16.msra.mxu0 %v79
    %154 = vmatprep.subr.bf16.mxu0 0
    %155 = vmatpush1.bf16.msra.mxu0 0
    %156 = vmatprep.subr.bf16.mxu0 0
    %157 = vmatpush1.bf16.msra.mxu0 0
    %158 = vmatprep.subr.bf16.mxu0 0
    %159 = vmatpush1.bf16.msra.mxu0 0
    %160 = vmatprep.subr.bf16.mxu0 0
    %161 = vmatpush1.bf16.msra.mxu0 0
    %162 = vmatprep.subr.bf16.mxu0 0
    %163 = vmatpush1.bf16.msra.mxu0 0
    %164 = vmatprep.subr.bf16.mxu0 0
    %165 = vmatpush1.bf16.msra.mxu0 0
    %166 = vmatprep.subr.bf16.mxu0 0
    %167 = vmatpush1.bf16.msra.mxu0 0
    %168 = vmatprep.subr.bf16.mxu0 0
    %169 = vmatpush1.bf16.msra.mxu0 0
    %170 = vmatprep.subr.bf16.mxu0 0
    %171 = vmatpush1.bf16.msra.mxu0 0
    %172 = vmatprep.subr.bf16.mxu0 0
    %173 = vmatpush1.bf16.msra.mxu0 0
    %174 = vmatprep.subr.bf16.mxu0 0
    %175 = vmatpush1.bf16.msra.mxu0 0
    %176 = vmatprep.subr.bf16.mxu0 0
    %177 = vmatpush1.bf16.msra.mxu0 0
    %178 = vmatprep.subr.bf16.mxu0 0
    %179 = vmatpush1.bf16.msra.mxu0 0
    %180 = vmatprep.subr.bf16.mxu0 0
    %181 = vmatpush1.bf16.msra.mxu0 0
    %182 = vmatprep.mubr.bf16.mxu0 0
    %183 = vmatmul.mubr.bf16.gmra.mrb[0].mxu0 %v96
    %v184 = vpop.f32.mrb[0].mxu0
    %v185 = vadd.f32 0.0, %v184
    %v186 = vpop.f32.mrb[0].mxu0
    %v187 = vpop.f32.mrb[0].mxu0
    %v188 = vadd.f32 0.0, %v187
    %v189 = vpop.f32.mrb[0].mxu0
    %190 = vmatprep.mubr.bf16.mxu0 0
    %191 = vmatmul.mubr.bf16.gmra.mrb[0].mxu0 %v99
    %v192 = vpop.f32.mrb[0].mxu0
    %v193 = vadd.f32 0.0, %v192
    %v194 = vpop.f32.mrb[0].mxu0
    %v195 = vpop.f32.mrb[0].mxu0
    %v196 = vadd.f32 0.0, %v195
    %v197 = vpop.f32.mrb[0].mxu0
    %198 = vdwg.mxu0
    %v199 = vpack.c.bf16 %v139, %v136
    %v200 = vpack.c.bf16 %v147, %v144
    %v201 = vpack.c.bf16 %v188, %v185
    %v202 = vpack.c.bf16 %v196, %v193
    %v203 = vld [vmem:[%s2] sm:$0xff]
    %v204 = vld [vmem:[%s2 + $0x8] sm:$0xff]
    %v205 = vld [vmem:[%s2 + $0x10] sm:$0xff]
    %v206 = vld [vmem:[%s2 + $0x18] sm:$0xff]
    %v207 = vld [vmem:[%s2 + $0x20] sm:$0xff]
    %v208 = vld [vmem:[%s2 + $0x28] sm:$0xff]
    %v209 = vld [vmem:[%s2 + $0x30] sm:$0xff]
    %v210 = vld [vmem:[%s2 + $0x38] sm:$0xff]
    %v211 = vld [vmem:[%s2 + $0x40] sm:$0xff]
    %v212 = vld [vmem:[%s2 + $0x48] sm:$0xff]
    %v213 = vld [vmem:[%s2 + $0x50] sm:$0xff]
    %v214 = vld [vmem:[%s2 + $0x58] sm:$0xff]
    %v215 = vld [vmem:[%s2 + $0x60] sm:$0xff]
    %v216 = vld [vmem:[%s2 + $0x68] sm:$0xff]
    %v217 = vld [vmem:[%s2 + $0x70] sm:$0xff]
    %v218 = vld [vmem:[%s2 + $0x78] sm:$0xff]
    %v219 = vld [vmem:[%s2 + $0x80] sm:$0xff]
    %v220 = vld [vmem:[%s2 + $0x88] sm:$0xff]
    %v221 = vld [vmem:[%s2 + $0x90] sm:$0xff]
    %v222 = vld [vmem:[%s2 + $0x98] sm:$0xff]
    %v223 = vld [vmem:[%s2 + $0xa0] sm:$0xff]
    %v224 = vld [vmem:[%s2 + $0xa8] sm:$0xff]
    %v225 = vld [vmem:[%s2 + $0xb0] sm:$0xff]
    %v226 = vld [vmem:[%s2 + $0xb8] sm:$0xff]
    %s227 = scalar_lea.vmem %s1, 16
    %v228 = vld [vmem:[%s227] sm:$0xf]
    %v229 = vld [vmem:[%s227 + $0x4] sm:$0xf]
    %v230 = vld [vmem:[%s227 + $0x8] sm:$0xf]
    %v231 = vld [vmem:[%s227 + $0xc] sm:$0xf]
    %v236 = vunpack.c.l.b16 %v228
    %v237 = vunpack.c.l.b16 %v229
    %v238 = vunpack.c.l.b16 %v230
    %v239 = vunpack.c.l.b16 %v231
    %v240 = vpack.c.b16 %v237, %v236
    %v241 = vpack.c.b16 %v239, %v238
    %v243 = vsel %vm94, %v240, 0
    %v246 = vsel %vm94, %v241, 0
    %248 = vmatprep.subr.bf16.mxu0 0
    %249 = vmatpush1.bf16.msra.mxu0 %v76
    %250 = vmatprep.subr.bf16.mxu0 0
    %251 = vmatpush1.bf16.msra.mxu0 %v77
    %252 = vmatprep.subr.bf16.mxu0 0
    %253 = vmatpush1.bf16.msra.mxu0 0
    %254 = vmatprep.subr.bf16.mxu0 0
    %255 = vmatpush1.bf16.msra.mxu0 0
    %256 = vmatprep.subr.bf16.mxu0 0
    %257 = vmatpush1.bf16.msra.mxu0 0
    %258 = vmatprep.subr.bf16.mxu0 0
    %259 = vmatpush1.bf16.msra.mxu0 0
    %260 = vmatprep.subr.bf16.mxu0 0
    %261 = vmatpush1.bf16.msra.mxu0 0
    %262 = vmatprep.subr.bf16.mxu0 0
    %263 = vmatpush1.bf16.msra.mxu0 0
    %264 = vmatprep.subr.bf16.mxu0 0
    %265 = vmatpush1.bf16.msra.mxu0 0
    %266 = vmatprep.subr.bf16.mxu0 0
    %267 = vmatpush1.bf16.msra.mxu0 0
    %268 = vmatprep.subr.bf16.mxu0 0
    %269 = vmatpush1.bf16.msra.mxu0 0
    %270 = vmatprep.subr.bf16.mxu0 0
    %271 = vmatpush1.bf16.msra.mxu0 0
    %272 = vmatprep.subr.bf16.mxu0 0
    %273 = vmatpush1.bf16.msra.mxu0 0
    %274 = vmatprep.subr.bf16.mxu0 0
    %275 = vmatpush1.bf16.msra.mxu0 0
    %276 = vmatprep.subr.bf16.mxu0 0
    %277 = vmatpush1.bf16.msra.mxu0 0
    %278 = vmatprep.subr.bf16.mxu0 0
    %279 = vmatpush1.bf16.msra.mxu0 0
    %280 = vmatprep.mubr.bf16.mxu0 0
    %281 = vmatmul.mubr.bf16.gmra.mrb[0].mxu0 %v243
    %v282 = vpop.f32.mrb[0].mxu0
    %v283 = vadd.f32 0.0, %v282
    %v284 = vpop.f32.mrb[0].mxu0
    %v285 = vpop.f32.mrb[0].mxu0
    %v286 = vadd.f32 0.0, %v285
    %v287 = vpop.f32.mrb[0].mxu0
    %288 = vmatprep.mubr.bf16.mxu0 0
    %289 = vmatmul.mubr.bf16.gmra.mrb[0].mxu0 %v246
    %v290 = vpop.f32.mrb[0].mxu0
    %v291 = vadd.f32 0.0, %v290
    %v292 = vpop.f32.mrb[0].mxu0
    %v293 = vpop.f32.mrb[0].mxu0
    %v294 = vadd.f32 0.0, %v293
    %v295 = vpop.f32.mrb[0].mxu0
    %296 = vdwg.mxu0
    %297 = vmatprep.subr.bf16.mxu0 0
    %298 = vmatpush1.bf16.msra.mxu0 %v78
    %299 = vmatprep.subr.bf16.mxu0 0
    %300 = vmatpush1.bf16.msra.mxu0 %v79
    %301 = vmatprep.subr.bf16.mxu0 0
    %302 = vmatpush1.bf16.msra.mxu0 0
    %303 = vmatprep.subr.bf16.mxu0 0
    %304 = vmatpush1.bf16.msra.mxu0 0
    %305 = vmatprep.subr.bf16.mxu0 0
    %306 = vmatpush1.bf16.msra.mxu0 0
    %307 = vmatprep.subr.bf16.mxu0 0
    %308 = vmatpush1.bf16.msra.mxu0 0
    %309 = vmatprep.subr.bf16.mxu0 0
    %310 = vmatpush1.bf16.msra.mxu0 0
    %311 = vmatprep.subr.bf16.mxu0 0
    %312 = vmatpush1.bf16.msra.mxu0 0
    %313 = vmatprep.subr.bf16.mxu0 0
    %314 = vmatpush1.bf16.msra.mxu0 0
    %315 = vmatprep.subr.bf16.mxu0 0
    %316 = vmatpush1.bf16.msra.mxu0 0
    %317 = vmatprep.subr.bf16.mxu0 0
    %318 = vmatpush1.bf16.msra.mxu0 0
    %319 = vmatprep.subr.bf16.mxu0 0
    %320 = vmatpush1.bf16.msra.mxu0 0
    %321 = vmatprep.subr.bf16.mxu0 0
    %322 = vmatpush1.bf16.msra.mxu0 0
    %323 = vmatprep.subr.bf16.mxu0 0
    %324 = vmatpush1.bf16.msra.mxu0 0
    %325 = vmatprep.subr.bf16.mxu0 0
    %326 = vmatpush1.bf16.msra.mxu0 0
    %327 = vmatprep.subr.bf16.mxu0 0
    %328 = vmatpush1.bf16.msra.mxu0 0
    %329 = vmatprep.mubr.bf16.mxu0 0
    %330 = vmatmul.mubr.bf16.gmra.mrb[0].mxu0 %v243
    %v331 = vpop.f32.mrb[0].mxu0
    %v332 = vadd.f32 0.0, %v331
    %v333 = vpop.f32.mrb[0].mxu0
    %v334 = vpop.f32.mrb[0].mxu0
    %v335 = vadd.f32 0.0, %v334
    %v336 = vpop.f32.mrb[0].mxu0
    %337 = vmatprep.mubr.bf16.mxu0 0
    %338 = vmatmul.mubr.bf16.gmra.mrb[0].mxu0 %v246
    %v339 = vpop.f32.mrb[0].mxu0
    %v340 = vadd.f32 0.0, %v339
    %v341 = vpop.f32.mrb[0].mxu0
    %v342 = vpop.f32.mrb[0].mxu0
    %v343 = vadd.f32 0.0, %v342
    %v344 = vpop.f32.mrb[0].mxu0
    %345 = vdwg.mxu0
    %v346 = vpack.c.bf16 %v286, %v283
    %v347 = vpack.c.bf16 %v294, %v291
    %v348 = vpack.c.bf16 %v335, %v332
    %v349 = vpack.c.bf16 %v343, %v340
    %s350 = scalar_lea.vmem %s2, 192
    %v351 = vld [vmem:[%s350] sm:$0xff]
    %v352 = vld [vmem:[%s350 + $0x8] sm:$0xff]
    %v353 = vld [vmem:[%s350 + $0x10] sm:$0xff]
    %v354 = vld [vmem:[%s350 + $0x18] sm:$0xff]
    %v355 = vld [vmem:[%s350 + $0x20] sm:$0xff]
    %v356 = vld [vmem:[%s350 + $0x28] sm:$0xff]
    %v357 = vld [vmem:[%s350 + $0x30] sm:$0xff]
    %v358 = vld [vmem:[%s350 + $0x38] sm:$0xff]
    %v359 = vld [vmem:[%s350 + $0x40] sm:$0xff]
    %v360 = vld [vmem:[%s350 + $0x48] sm:$0xff]
    %v361 = vld [vmem:[%s350 + $0x50] sm:$0xff]
    %v362 = vld [vmem:[%s350 + $0x58] sm:$0xff]
    %v363 = vld [vmem:[%s350 + $0x60] sm:$0xff]
    %v364 = vld [vmem:[%s350 + $0x68] sm:$0xff]
    %v365 = vld [vmem:[%s350 + $0x70] sm:$0xff]
    %v366 = vld [vmem:[%s350 + $0x78] sm:$0xff]
    %v367 = vld [vmem:[%s350 + $0x80] sm:$0xff]
    %v368 = vld [vmem:[%s350 + $0x88] sm:$0xff]
    %v369 = vld [vmem:[%s350 + $0x90] sm:$0xff]
    %v370 = vld [vmem:[%s350 + $0x98] sm:$0xff]
    %v371 = vld [vmem:[%s350 + $0xa0] sm:$0xff]
    %v372 = vld [vmem:[%s350 + $0xa8] sm:$0xff]
    %v373 = vld [vmem:[%s350 + $0xb0] sm:$0xff]
    %v374 = vld [vmem:[%s350 + $0xb8] sm:$0xff]
    %v399 = vunpack.c.l.b16 %v351
    %v400 = vunpack.c.h.b16 %v351
    %v401 = vunpack.c.l.b16 %v352
    %v402 = vunpack.c.h.b16 %v352
    %v403 = vunpack.c.l.b16 %v353
    %v404 = vunpack.c.h.b16 %v353
    %v405 = vunpack.c.l.b16 %v354
    %v406 = vunpack.c.h.b16 %v354
    %v407 = vunpack.c.l.b16 %v355
    %v408 = vunpack.c.h.b16 %v355
    %v409 = vunpack.c.l.b16 %v356
    %v410 = vunpack.c.h.b16 %v356
    %v411 = vunpack.c.l.b16 %v357
    %v412 = vunpack.c.h.b16 %v357
    %v413 = vunpack.c.l.b16 %v358
    %v414 = vunpack.c.h.b16 %v358
    %v415 = vunpack.c.l.b16 %v359
    %v416 = vunpack.c.h.b16 %v359
    %v417 = vunpack.c.l.b16 %v360
    %v418 = vunpack.c.h.b16 %v360
    %v419 = vunpack.c.l.b16 %v361
    %v420 = vunpack.c.h.b16 %v361
    %v421 = vunpack.c.l.b16 %v362
    %v422 = vunpack.c.h.b16 %v362
    %v423 = vunpack.c.l.b16 %v363
    %v424 = vunpack.c.h.b16 %v363
    %v425 = vunpack.c.l.b16 %v364
    %v426 = vunpack.c.h.b16 %v364
    %v427 = vunpack.c.l.b16 %v365
    %v428 = vunpack.c.h.b16 %v365
    %v429 = vunpack.c.l.b16 %v366
    %v430 = vunpack.c.h.b16 %v366
    %v431 = vunpack.c.l.b16 %v367
    %v432 = vunpack.c.h.b16 %v367
    %v433 = vunpack.c.l.b16 %v368
    %v434 = vunpack.c.h.b16 %v368
    %v435 = vunpack.c.l.b16 %v369
    %v436 = vunpack.c.h.b16 %v369
    %v437 = vunpack.c.l.b16 %v370
    %v438 = vunpack.c.h.b16 %v370
    %v439 = vunpack.c.l.b16 %v371
    %v440 = vunpack.c.h.b16 %v371
    %v441 = vunpack.c.l.b16 %v372
    %v442 = vunpack.c.h.b16 %v372
    %v443 = vunpack.c.l.b16 %v373
    %v444 = vunpack.c.h.b16 %v373
    %v445 = vunpack.c.l.b16 %v374
    %v446 = vunpack.c.h.b16 %v374
    %v447 = vpack.c.b16 %v403, %v399
    %v448 = vpack.c.b16 %v404, %v400
    %v449 = vpack.c.b16 %v405, %v401
    %v450 = vpack.c.b16 %v406, %v402
    %v451 = vpack.c.b16 %v411, %v407
    %v452 = vpack.c.b16 %v412, %v408
    %v453 = vpack.c.b16 %v413, %v409
    %v454 = vpack.c.b16 %v414, %v410
    %v455 = vpack.c.b16 %v419, %v415
    %v456 = vpack.c.b16 %v420, %v416
    %v457 = vpack.c.b16 %v421, %v417
    %v458 = vpack.c.b16 %v422, %v418
    %v459 = vpack.c.b16 %v427, %v423
    %v460 = vpack.c.b16 %v428, %v424
    %v461 = vpack.c.b16 %v429, %v425
    %v462 = vpack.c.b16 %v430, %v426
    %v463 = vpack.c.b16 %v435, %v431
    %v464 = vpack.c.b16 %v436, %v432
    %v465 = vpack.c.b16 %v437, %v433
    %v466 = vpack.c.b16 %v438, %v434
    %v467 = vpack.c.b16 %v443, %v439
    %v468 = vpack.c.b16 %v444, %v440
    %v469 = vpack.c.b16 %v445, %v441
    %v470 = vpack.c.b16 %v446, %v442
    %vm495 = vcmask 785408
    %v497 = vsel %vm495, %v346, 0
    %v500 = vsel %vm495, %v347, 0
    %v503 = vsel %vm495, %v348, 0
    %v506 = vsel %vm495, %v349, 0
    %508 = vmatprep.subr.bf16.mxu0 %v448
    %509 = vmatpush1.bf16.msra.mxu0 %v447
    %510 = vmatprep.subr.bf16.mxu0 %v452
    %511 = vmatpush1.bf16.msra.mxu0 %v451
    %512 = vmatprep.subr.bf16.mxu0 %v456
    %513 = vmatpush1.bf16.msra.mxu0 %v455
    %514 = vmatprep.subr.bf16.mxu0 %v460
    %515 = vmatpush1.bf16.msra.mxu0 %v459
    %516 = vmatprep.subr.bf16.mxu0 %v464
    %517 = vmatpush1.bf16.msra.mxu0 %v463
    %518 = vmatprep.subr.bf16.mxu0 %v468
    %519 = vmatpush1.bf16.msra.mxu0 %v467
    %520 = vmatprep.subr.bf16.mxu0 0
    %521 = vmatpush1.bf16.msra.mxu0 0
    %522 = vmatprep.subr.bf16.mxu0 0
    %523 = vmatpush1.bf16.msra.mxu0 0
    %524 = vmatprep.subr.bf16.mxu0 0
    %525 = vmatpush1.bf16.msra.mxu0 0
    %526 = vmatprep.subr.bf16.mxu0 0
    %527 = vmatpush1.bf16.msra.mxu0 0
    %528 = vmatprep.subr.bf16.mxu0 0
    %529 = vmatpush1.bf16.msra.mxu0 0
    %530 = vmatprep.subr.bf16.mxu0 0
    %531 = vmatpush1.bf16.msra.mxu0 0
    %532 = vmatprep.subr.bf16.mxu0 0
    %533 = vmatpush1.bf16.msra.mxu0 0
    %534 = vmatprep.subr.bf16.mxu0 0
    %535 = vmatpush1.bf16.msra.mxu0 0
    %536 = vmatprep.subr.bf16.mxu0 0
    %537 = vmatpush1.bf16.msra.mxu0 0
    %538 = vmatprep.subr.bf16.mxu0 0
    %539 = vmatpush1.bf16.msra.mxu0 0
    %540 = vmatprep.mubr.bf16.mxu0 0
    %541 = vmatmul.mubr.bf16.gmra.mrb[0].mxu0 %v497
    %v542 = vpop.f32.mrb[0].mxu0
    %v543 = vadd.f32 0.0, %v542
    %v544 = vpop.f32.mrb[0].mxu0
    %v545 = vadd.f32 0.0, %v544
    %v546 = vpop.f32.mrb[0].mxu0
    %v547 = vadd.f32 0.0, %v546
    %v548 = vpop.f32.mrb[0].mxu0
    %v549 = vadd.f32 0.0, %v548
    %550 = vmatprep.mubr.bf16.mxu0 0
    %551 = vmatmul.mubr.bf16.gmra.mrb[0].mxu0 %v500
    %v552 = vpop.f32.mrb[0].mxu0
    %v553 = vadd.f32 0.0, %v552
    %v554 = vpop.f32.mrb[0].mxu0
    %v555 = vadd.f32 0.0, %v554
    %v556 = vpop.f32.mrb[0].mxu0
    %v557 = vadd.f32 0.0, %v556
    %v558 = vpop.f32.mrb[0].mxu0
    %v559 = vadd.f32 0.0, %v558
    %560 = vmatprep.mubr.bf16.mxu0 0
    %561 = vmatmul.mubr.bf16.gmra.mrb[0].mxu0 %v503
    %v562 = vpop.f32.mrb[0].mxu0
    %v563 = vadd.f32 0.0, %v562
    %v564 = vpop.f32.mrb[0].mxu0
    %v565 = vadd.f32 0.0, %v564
    %v566 = vpop.f32.mrb[0].mxu0
    %v567 = vadd.f32 0.0, %v566
    %v568 = vpop.f32.mrb[0].mxu0
    %v569 = vadd.f32 0.0, %v568
    %570 = vmatprep.mubr.bf16.mxu0 0
    %571 = vmatmul.mubr.bf16.gmra.mrb[0].mxu0 %v506
    %v572 = vpop.f32.mrb[0].mxu0
    %v573 = vadd.f32 0.0, %v572
    %v574 = vpop.f32.mrb[0].mxu0
    %v575 = vadd.f32 0.0, %v574
    %v576 = vpop.f32.mrb[0].mxu0
    %v577 = vadd.f32 0.0, %v576
    %v578 = vpop.f32.mrb[0].mxu0
    %v579 = vadd.f32 0.0, %v578
    %580 = vdwg.mxu0
    %581 = vmatprep.subr.bf16.mxu0 %v450
    %582 = vmatpush1.bf16.msra.mxu0 %v449
    %583 = vmatprep.subr.bf16.mxu0 %v454
    %584 = vmatpush1.bf16.msra.mxu0 %v453
    %585 = vmatprep.subr.bf16.mxu0 %v458
    %586 = vmatpush1.bf16.msra.mxu0 %v457
    %587 = vmatprep.subr.bf16.mxu0 %v462
    %588 = vmatpush1.bf16.msra.mxu0 %v461
    %589 = vmatprep.subr.bf16.mxu0 %v466
    %590 = vmatpush1.bf16.msra.mxu0 %v465
    %591 = vmatprep.subr.bf16.mxu0 %v470
    %592 = vmatpush1.bf16.msra.mxu0 %v469
    %593 = vmatprep.subr.bf16.mxu0 0
    %594 = vmatpush1.bf16.msra.mxu0 0
    %595 = vmatprep.subr.bf16.mxu0 0
    %596 = vmatpush1.bf16.msra.mxu0 0
    %597 = vmatprep.subr.bf16.mxu0 0
    %598 = vmatpush1.bf16.msra.mxu0 0
    %599 = vmatprep.subr.bf16.mxu0 0
    %600 = vmatpush1.bf16.msra.mxu0 0
    %601 = vmatprep.subr.bf16.mxu0 0
    %602 = vmatpush1.bf16.msra.mxu0 0
    %603 = vmatprep.subr.bf16.mxu0 0
    %604 = vmatpush1.bf16.msra.mxu0 0
    %605 = vmatprep.subr.bf16.mxu0 0
    %606 = vmatpush1.bf16.msra.mxu0 0
    %607 = vmatprep.subr.bf16.mxu0 0
    %608 = vmatpush1.bf16.msra.mxu0 0
    %609 = vmatprep.subr.bf16.mxu0 0
    %610 = vmatpush1.bf16.msra.mxu0 0
    %611 = vmatprep.subr.bf16.mxu0 0
    %612 = vmatpush1.bf16.msra.mxu0 0
    %613 = vmatprep.mubr.bf16.mxu0 0
    %614 = vmatmul.mubr.bf16.gmra.mrb[0].mxu0 %v497
    %v615 = vpop.f32.mrb[0].mxu0
    %v616 = vadd.f32 0.0, %v615
    %v617 = vpop.f32.mrb[0].mxu0
    %v618 = vadd.f32 0.0, %v617
    %v619 = vpop.f32.mrb[0].mxu0
    %v620 = vadd.f32 0.0, %v619
    %v621 = vpop.f32.mrb[0].mxu0
    %v622 = vadd.f32 0.0, %v621
    %623 = vmatprep.mubr.bf16.mxu0 0
    %624 = vmatmul.mubr.bf16.gmra.mrb[0].mxu0 %v500
    %v625 = vpop.f32.mrb[0].mxu0
    %v626 = vadd.f32 0.0, %v625
    %v627 = vpop.f32.mrb[0].mxu0
    %v628 = vadd.f32 0.0, %v627
    %v629 = vpop.f32.mrb[0].mxu0
    %v630 = vadd.f32 0.0, %v629
    %v631 = vpop.f32.mrb[0].mxu0
    %v632 = vadd.f32 0.0, %v631
    %633 = vmatprep.mubr.bf16.mxu0 0
    %634 = vmatmul.mubr.bf16.gmra.mrb[0].mxu0 %v503
    %v635 = vpop.f32.mrb[0].mxu0
    %v636 = vadd.f32 0.0, %v635
    %v637 = vpop.f32.mrb[0].mxu0
    %v638 = vadd.f32 0.0, %v637
    %v639 = vpop.f32.mrb[0].mxu0
    %v640 = vadd.f32 0.0, %v639
    %v641 = vpop.f32.mrb[0].mxu0
    %v642 = vadd.f32 0.0, %v641
    %643 = vmatprep.mubr.bf16.mxu0 0
    %644 = vmatmul.mubr.bf16.gmra.mrb[0].mxu0 %v506
    %v645 = vpop.f32.mrb[0].mxu0
    %v646 = vadd.f32 0.0, %v645
    %v647 = vpop.f32.mrb[0].mxu0
    %v648 = vadd.f32 0.0, %v647
    %v649 = vpop.f32.mrb[0].mxu0
    %v650 = vadd.f32 0.0, %v649
    %v651 = vpop.f32.mrb[0].mxu0
    %v652 = vadd.f32 0.0, %v651
    %653 = vdwg.mxu0
    %v678 = vunpack.c.l.b16 %v203
    %v679 = vunpack.c.h.b16 %v203
    %v680 = vunpack.c.l.b16 %v204
    %v681 = vunpack.c.h.b16 %v204
    %v682 = vunpack.c.l.b16 %v205
    %v683 = vunpack.c.h.b16 %v205
    %v684 = vunpack.c.l.b16 %v206
    %v685 = vunpack.c.h.b16 %v206
    %v686 = vunpack.c.l.b16 %v207
    %v687 = vunpack.c.h.b16 %v207
    %v688 = vunpack.c.l.b16 %v208
    %v689 = vunpack.c.h.b16 %v208
    %v690 = vunpack.c.l.b16 %v209
    %v691 = vunpack.c.h.b16 %v209
    %v692 = vunpack.c.l.b16 %v210
    %v693 = vunpack.c.h.b16 %v210
    %v694 = vunpack.c.l.b16 %v211
    %v695 = vunpack.c.h.b16 %v211
    %v696 = vunpack.c.l.b16 %v212
    %v697 = vunpack.c.h.b16 %v212
    %v698 = vunpack.c.l.b16 %v213
    %v699 = vunpack.c.h.b16 %v213
    %v700 = vunpack.c.l.b16 %v214
    %v701 = vunpack.c.h.b16 %v214
    %v702 = vunpack.c.l.b16 %v215
    %v703 = vunpack.c.h.b16 %v215
    %v704 = vunpack.c.l.b16 %v216
    %v705 = vunpack.c.h.b16 %v216
    %v706 = vunpack.c.l.b16 %v217
    %v707 = vunpack.c.h.b16 %v217
    %v708 = vunpack.c.l.b16 %v218
    %v709 = vunpack.c.h.b16 %v218
    %v710 = vunpack.c.l.b16 %v219
    %v711 = vunpack.c.h.b16 %v219
    %v712 = vunpack.c.l.b16 %v220
    %v713 = vunpack.c.h.b16 %v220
    %v714 = vunpack.c.l.b16 %v221
    %v715 = vunpack.c.h.b16 %v221
    %v716 = vunpack.c.l.b16 %v222
    %v717 = vunpack.c.h.b16 %v222
    %v718 = vunpack.c.l.b16 %v223
    %v719 = vunpack.c.h.b16 %v223
    %v720 = vunpack.c.l.b16 %v224
    %v721 = vunpack.c.h.b16 %v224
    %v722 = vunpack.c.l.b16 %v225
    %v723 = vunpack.c.h.b16 %v225
    %v724 = vunpack.c.l.b16 %v226
    %v725 = vunpack.c.h.b16 %v226
    %v726 = vpack.c.b16 %v682, %v678
    %v727 = vpack.c.b16 %v683, %v679
    %v728 = vpack.c.b16 %v684, %v680
    %v729 = vpack.c.b16 %v685, %v681
    %v730 = vpack.c.b16 %v690, %v686
    %v731 = vpack.c.b16 %v691, %v687
    %v732 = vpack.c.b16 %v692, %v688
    %v733 = vpack.c.b16 %v693, %v689
    %v734 = vpack.c.b16 %v698, %v694
    %v735 = vpack.c.b16 %v699, %v695
    %v736 = vpack.c.b16 %v700, %v696
    %v737 = vpack.c.b16 %v701, %v697
    %v738 = vpack.c.b16 %v706, %v702
    %v739 = vpack.c.b16 %v707, %v703
    %v740 = vpack.c.b16 %v708, %v704
    %v741 = vpack.c.b16 %v709, %v705
    %v742 = vpack.c.b16 %v714, %v710
    %v743 = vpack.c.b16 %v715, %v711
    %v744 = vpack.c.b16 %v716, %v712
    %v745 = vpack.c.b16 %v717, %v713
    %v746 = vpack.c.b16 %v722, %v718
    %v747 = vpack.c.b16 %v723, %v719
    %v748 = vpack.c.b16 %v724, %v720
    %v749 = vpack.c.b16 %v725, %v721
    %v775 = vsel %vm495, %v199, 0
    %v778 = vsel %vm495, %v200, 0
    %v781 = vsel %vm495, %v201, 0
    %v784 = vsel %vm495, %v202, 0
    %786 = vmatprep.subr.bf16.mxu0 %v727
    %787 = vmatpush1.bf16.msra.mxu0 %v726
    %788 = vmatprep.subr.bf16.mxu0 %v731
    %789 = vmatpush1.bf16.msra.mxu0 %v730
    %790 = vmatprep.subr.bf16.mxu0 %v735
    %791 = vmatpush1.bf16.msra.mxu0 %v734
    %792 = vmatprep.subr.bf16.mxu0 %v739
    %793 = vmatpush1.bf16.msra.mxu0 %v738
    %794 = vmatprep.subr.bf16.mxu0 %v743
    %795 = vmatpush1.bf16.msra.mxu0 %v742
    %796 = vmatprep.subr.bf16.mxu0 %v747
    %797 = vmatpush1.bf16.msra.mxu0 %v746
    %798 = vmatprep.subr.bf16.mxu0 0
    %799 = vmatpush1.bf16.msra.mxu0 0
    %800 = vmatprep.subr.bf16.mxu0 0
    %801 = vmatpush1.bf16.msra.mxu0 0
    %802 = vmatprep.subr.bf16.mxu0 0
    %803 = vmatpush1.bf16.msra.mxu0 0
    %804 = vmatprep.subr.bf16.mxu0 0
    %805 = vmatpush1.bf16.msra.mxu0 0
    %806 = vmatprep.subr.bf16.mxu0 0
    %807 = vmatpush1.bf16.msra.mxu0 0
    %808 = vmatprep.subr.bf16.mxu0 0
    %809 = vmatpush1.bf16.msra.mxu0 0
    %810 = vmatprep.subr.bf16.mxu0 0
    %811 = vmatpush1.bf16.msra.mxu0 0
    %812 = vmatprep.subr.bf16.mxu0 0
    %813 = vmatpush1.bf16.msra.mxu0 0
    %814 = vmatprep.subr.bf16.mxu0 0
    %815 = vmatpush1.bf16.msra.mxu0 0
    %816 = vmatprep.subr.bf16.mxu0 0
    %817 = vmatpush1.bf16.msra.mxu0 0
    %818 = vmatprep.mubr.bf16.mxu0 0
    %819 = vmatmul.mubr.bf16.gmra.mrb[0].mxu0 %v775
    %v820 = vpop.f32.mrb[0].mxu0
    %v821 = vadd.f32 %v543, %v820
    %v822 = vpop.f32.mrb[0].mxu0
    %v823 = vadd.f32 %v545, %v822
    %v824 = vpop.f32.mrb[0].mxu0
    %v825 = vadd.f32 %v547, %v824
    %v826 = vpop.f32.mrb[0].mxu0
    %v827 = vadd.f32 %v549, %v826
    %828 = vmatprep.mubr.bf16.mxu0 0
    %829 = vmatmul.mubr.bf16.gmra.mrb[0].mxu0 %v778
    %v830 = vpop.f32.mrb[0].mxu0
    %v831 = vadd.f32 %v553, %v830
    %v832 = vpop.f32.mrb[0].mxu0
    %v833 = vadd.f32 %v555, %v832
    %v834 = vpop.f32.mrb[0].mxu0
    %v835 = vadd.f32 %v557, %v834
    %v836 = vpop.f32.mrb[0].mxu0
    %v837 = vadd.f32 %v559, %v836
    %838 = vmatprep.mubr.bf16.mxu0 0
    %839 = vmatmul.mubr.bf16.gmra.mrb[0].mxu0 %v781
    %v840 = vpop.f32.mrb[0].mxu0
    %v841 = vadd.f32 %v563, %v840
    %v842 = vpop.f32.mrb[0].mxu0
    %v843 = vadd.f32 %v565, %v842
    %v844 = vpop.f32.mrb[0].mxu0
    %v845 = vadd.f32 %v567, %v844
    %v846 = vpop.f32.mrb[0].mxu0
    %v847 = vadd.f32 %v569, %v846
    %848 = vmatprep.mubr.bf16.mxu0 0
    %849 = vmatmul.mubr.bf16.gmra.mrb[0].mxu0 %v784
    %v850 = vpop.f32.mrb[0].mxu0
    %v851 = vadd.f32 %v573, %v850
    %v852 = vpop.f32.mrb[0].mxu0
    %v853 = vadd.f32 %v575, %v852
    %v854 = vpop.f32.mrb[0].mxu0
    %v855 = vadd.f32 %v577, %v854
    %v856 = vpop.f32.mrb[0].mxu0
    %v857 = vadd.f32 %v579, %v856
    %858 = vdwg.mxu0
    %859 = vmatprep.subr.bf16.mxu0 %v729
    %860 = vmatpush1.bf16.msra.mxu0 %v728
    %861 = vmatprep.subr.bf16.mxu0 %v733
    %862 = vmatpush1.bf16.msra.mxu0 %v732
    %863 = vmatprep.subr.bf16.mxu0 %v737
    %864 = vmatpush1.bf16.msra.mxu0 %v736
    %865 = vmatprep.subr.bf16.mxu0 %v741
    %866 = vmatpush1.bf16.msra.mxu0 %v740
    %867 = vmatprep.subr.bf16.mxu0 %v745
    %868 = vmatpush1.bf16.msra.mxu0 %v744
    %869 = vmatprep.subr.bf16.mxu0 %v749
    %870 = vmatpush1.bf16.msra.mxu0 %v748
    %871 = vmatprep.subr.bf16.mxu0 0
    %872 = vmatpush1.bf16.msra.mxu0 0
    %873 = vmatprep.subr.bf16.mxu0 0
    %874 = vmatpush1.bf16.msra.mxu0 0
    %875 = vmatprep.subr.bf16.mxu0 0
    %876 = vmatpush1.bf16.msra.mxu0 0
    %877 = vmatprep.subr.bf16.mxu0 0
    %878 = vmatpush1.bf16.msra.mxu0 0
    %879 = vmatprep.subr.bf16.mxu0 0
    %880 = vmatpush1.bf16.msra.mxu0 0
    %881 = vmatprep.subr.bf16.mxu0 0
    %882 = vmatpush1.bf16.msra.mxu0 0
    %883 = vmatprep.subr.bf16.mxu0 0
    %884 = vmatpush1.bf16.msra.mxu0 0
    %885 = vmatprep.subr.bf16.mxu0 0
    %886 = vmatpush1.bf16.msra.mxu0 0
    %887 = vmatprep.subr.bf16.mxu0 0
    %888 = vmatpush1.bf16.msra.mxu0 0
    %889 = vmatprep.subr.bf16.mxu0 0
    %890 = vmatpush1.bf16.msra.mxu0 0
    %891 = vmatprep.mubr.bf16.mxu0 0
    %892 = vmatmul.mubr.bf16.gmra.mrb[0].mxu0 %v775
    %v893 = vpop.f32.mrb[0].mxu0
    %v894 = vadd.f32 %v616, %v893
    %v895 = vpop.f32.mrb[0].mxu0
    %v896 = vadd.f32 %v618, %v895
    %v897 = vpop.f32.mrb[0].mxu0
    %v898 = vadd.f32 %v620, %v897
    %v899 = vpop.f32.mrb[0].mxu0
    %v900 = vadd.f32 %v622, %v899
    %901 = vmatprep.mubr.bf16.mxu0 0
    %902 = vmatmul.mubr.bf16.gmra.mrb[0].mxu0 %v778
    %v903 = vpop.f32.mrb[0].mxu0
    %v904 = vadd.f32 %v626, %v903
    %v905 = vpop.f32.mrb[0].mxu0
    %v906 = vadd.f32 %v628, %v905
    %v907 = vpop.f32.mrb[0].mxu0
    %v908 = vadd.f32 %v630, %v907
    %v909 = vpop.f32.mrb[0].mxu0
    %v910 = vadd.f32 %v632, %v909
    %911 = vmatprep.mubr.bf16.mxu0 0
    %912 = vmatmul.mubr.bf16.gmra.mrb[0].mxu0 %v781
    %v913 = vpop.f32.mrb[0].mxu0
    %v914 = vadd.f32 %v636, %v913
    %v915 = vpop.f32.mrb[0].mxu0
    %v916 = vadd.f32 %v638, %v915
    %v917 = vpop.f32.mrb[0].mxu0
    %v918 = vadd.f32 %v640, %v917
    %v919 = vpop.f32.mrb[0].mxu0
    %v920 = vadd.f32 %v642, %v919
    %921 = vmatprep.mubr.bf16.mxu0 0
    %922 = vmatmul.mubr.bf16.gmra.mrb[0].mxu0 %v784
    %v923 = vpop.f32.mrb[0].mxu0
    %v924 = vadd.f32 %v646, %v923
    %v925 = vpop.f32.mrb[0].mxu0
    %v926 = vadd.f32 %v648, %v925
    %v927 = vpop.f32.mrb[0].mxu0
    %v928 = vadd.f32 %v650, %v927
    %v929 = vpop.f32.mrb[0].mxu0
    %v930 = vadd.f32 %v652, %v929
    %931 = vdwg.mxu0
    %s932 = scalar_lea.vmem %s1, 32
    %v933 = vld [vmem:[%s932] sm:$0xf]
    %v934 = vld [vmem:[%s932 + $0x4] sm:$0xf]
    %v935 = vld [vmem:[%s932 + $0x8] sm:$0xf]
    %v936 = vld [vmem:[%s932 + $0xc] sm:$0xf]
    %v941 = vunpack.c.l.b16 %v933
    %v942 = vunpack.c.l.b16 %v934
    %v943 = vunpack.c.l.b16 %v935
    %v944 = vunpack.c.l.b16 %v936
    %v945 = vpack.c.b16 %v942, %v941
    %v946 = vpack.c.b16 %v944, %v943
    %v948 = vsel %vm94, %v945, 0
    %v951 = vsel %vm94, %v946, 0
    %953 = vmatprep.subr.bf16.mxu0 0
    %954 = vmatpush1.bf16.msra.mxu0 %v76
    %955 = vmatprep.subr.bf16.mxu0 0
    %956 = vmatpush1.bf16.msra.mxu0 %v77
    %957 = vmatprep.subr.bf16.mxu0 0
    %958 = vmatpush1.bf16.msra.mxu0 0
    %959 = vmatprep.subr.bf16.mxu0 0
    %960 = vmatpush1.bf16.msra.mxu0 0
    %961 = vmatprep.subr.bf16.mxu0 0
    %962 = vmatpush1.bf16.msra.mxu0 0
    %963 = vmatprep.subr.bf16.mxu0 0
    %964 = vmatpush1.bf16.msra.mxu0 0
    %965 = vmatprep.subr.bf16.mxu0 0
    %966 = vmatpush1.bf16.msra.mxu0 0
    %967 = vmatprep.subr.bf16.mxu0 0
    %968 = vmatpush1.bf16.msra.mxu0 0
    %969 = vmatprep.subr.bf16.mxu0 0
    %970 = vmatpush1.bf16.msra.mxu0 0
    %971 = vmatprep.subr.bf16.mxu0 0
    %972 = vmatpush1.bf16.msra.mxu0 0
    %973 = vmatprep.subr.bf16.mxu0 0
    %974 = vmatpush1.bf16.msra.mxu0 0
    %975 = vmatprep.subr.bf16.mxu0 0
    %976 = vmatpush1.bf16.msra.mxu0 0
    %977 = vmatprep.subr.bf16.mxu0 0
    %978 = vmatpush1.bf16.msra.mxu0 0
    %979 = vmatprep.subr.bf16.mxu0 0
    %980 = vmatpush1.bf16.msra.mxu0 0
    %981 = vmatprep.subr.bf16.mxu0 0
    %982 = vmatpush1.bf16.msra.mxu0 0
    %983 = vmatprep.subr.bf16.mxu0 0
    %984 = vmatpush1.bf16.msra.mxu0 0
    %985 = vmatprep.mubr.bf16.mxu0 0
    %986 = vmatmul.mubr.bf16.gmra.mrb[0].mxu0 %v948
    %v987 = vpop.f32.mrb[0].mxu0
    %v988 = vadd.f32 0.0, %v987
    %v989 = vpop.f32.mrb[0].mxu0
    %v990 = vpop.f32.mrb[0].mxu0
    %v991 = vadd.f32 0.0, %v990
    %v992 = vpop.f32.mrb[0].mxu0
    %993 = vmatprep.mubr.bf16.mxu0 0
    %994 = vmatmul.mubr.bf16.gmra.mrb[0].mxu0 %v951
    %v995 = vpop.f32.mrb[0].mxu0
    %v996 = vadd.f32 0.0, %v995
    %v997 = vpop.f32.mrb[0].mxu0
    %v998 = vpop.f32.mrb[0].mxu0
    %v999 = vadd.f32 0.0, %v998
    %v1000 = vpop.f32.mrb[0].mxu0
    %1001 = vdwg.mxu0
    %1002 = vmatprep.subr.bf16.mxu0 0
    %1003 = vmatpush1.bf16.msra.mxu0 %v78
    %1004 = vmatprep.subr.bf16.mxu0 0
    %1005 = vmatpush1.bf16.msra.mxu0 %v79
    %1006 = vmatprep.subr.bf16.mxu0 0
    %1007 = vmatpush1.bf16.msra.mxu0 0
    %1008 = vmatprep.subr.bf16.mxu0 0
    %1009 = vmatpush1.bf16.msra.mxu0 0
    %1010 = vmatprep.subr.bf16.mxu0 0
    %1011 = vmatpush1.bf16.msra.mxu0 0
    %1012 = vmatprep.subr.bf16.mxu0 0
    %1013 = vmatpush1.bf16.msra.mxu0 0
    %1014 = vmatprep.subr.bf16.mxu0 0
    %1015 = vmatpush1.bf16.msra.mxu0 0
    %1016 = vmatprep.subr.bf16.mxu0 0
    %1017 = vmatpush1.bf16.msra.mxu0 0
    %1018 = vmatprep.subr.bf16.mxu0 0
    %1019 = vmatpush1.bf16.msra.mxu0 0
    %1020 = vmatprep.subr.bf16.mxu0 0
    %1021 = vmatpush1.bf16.msra.mxu0 0
    %1022 = vmatprep.subr.bf16.mxu0 0
    %1023 = vmatpush1.bf16.msra.mxu0 0
    %1024 = vmatprep.subr.bf16.mxu0 0
    %1025 = vmatpush1.bf16.msra.mxu0 0
    %1026 = vmatprep.subr.bf16.mxu0 0
    %1027 = vmatpush1.bf16.msra.mxu0 0
    %1028 = vmatprep.subr.bf16.mxu0 0
    %1029 = vmatpush1.bf16.msra.mxu0 0
    %1030 = vmatprep.subr.bf16.mxu0 0
    %1031 = vmatpush1.bf16.msra.mxu0 0
    %1032 = vmatprep.subr.bf16.mxu0 0
    %1033 = vmatpush1.bf16.msra.mxu0 0
    %1034 = vmatprep.mubr.bf16.mxu0 0
    %1035 = vmatmul.mubr.bf16.gmra.mrb[0].mxu0 %v948
    %v1036 = vpop.f32.mrb[0].mxu0
    %v1037 = vadd.f32 0.0, %v1036
    %v1038 = vpop.f32.mrb[0].mxu0
    %v1039 = vpop.f32.mrb[0].mxu0
    %v1040 = vadd.f32 0.0, %v1039
    %v1041 = vpop.f32.mrb[0].mxu0
    %1042 = vmatprep.mubr.bf16.mxu0 0
    %1043 = vmatmul.mubr.bf16.gmra.mrb[0].mxu0 %v951
    %v1044 = vpop.f32.mrb[0].mxu0
    %v1045 = vadd.f32 0.0, %v1044
    %v1046 = vpop.f32.mrb[0].mxu0
    %v1047 = vpop.f32.mrb[0].mxu0
    %v1048 = vadd.f32 0.0, %v1047
    %v1049 = vpop.f32.mrb[0].mxu0
    %1050 = vdwg.mxu0
    %v1051 = vpack.c.bf16 %v991, %v988
    %v1052 = vpack.c.bf16 %v999, %v996
    %v1053 = vpack.c.bf16 %v1040, %v1037
    %v1054 = vpack.c.bf16 %v1048, %v1045
    %s1055 = scalar_lea.vmem %s2, 384
    %v1056 = vld [vmem:[%s1055] sm:$0xff]
    %v1057 = vld [vmem:[%s1055 + $0x8] sm:$0xff]
    %v1058 = vld [vmem:[%s1055 + $0x10] sm:$0xff]
    %v1059 = vld [vmem:[%s1055 + $0x18] sm:$0xff]
    %v1060 = vld [vmem:[%s1055 + $0x20] sm:$0xff]
    %v1061 = vld [vmem:[%s1055 + $0x28] sm:$0xff]
    %v1062 = vld [vmem:[%s1055 + $0x30] sm:$0xff]
    %v1063 = vld [vmem:[%s1055 + $0x38] sm:$0xff]
    %v1064 = vld [vmem:[%s1055 + $0x40] sm:$0xff]
    %v1065 = vld [vmem:[%s1055 + $0x48] sm:$0xff]
    %v1066 = vld [vmem:[%s1055 + $0x50] sm:$0xff]
    %v1067 = vld [vmem:[%s1055 + $0x58] sm:$0xff]
    %v1068 = vld [vmem:[%s1055 + $0x60] sm:$0xff]
    %v1069 = vld [vmem:[%s1055 + $0x68] sm:$0xff]
    %v1070 = vld [vmem:[%s1055 + $0x70] sm:$0xff]
    %v1071 = vld [vmem:[%s1055 + $0x78] sm:$0xff]
    %v1072 = vld [vmem:[%s1055 + $0x80] sm:$0xff]
    %v1073 = vld [vmem:[%s1055 + $0x88] sm:$0xff]
    %v1074 = vld [vmem:[%s1055 + $0x90] sm:$0xff]
    %v1075 = vld [vmem:[%s1055 + $0x98] sm:$0xff]
    %v1076 = vld [vmem:[%s1055 + $0xa0] sm:$0xff]
    %v1077 = vld [vmem:[%s1055 + $0xa8] sm:$0xff]
    %v1078 = vld [vmem:[%s1055 + $0xb0] sm:$0xff]
    %v1079 = vld [vmem:[%s1055 + $0xb8] sm:$0xff]
    %v1104 = vunpack.c.l.b16 %v1056
    %v1105 = vunpack.c.h.b16 %v1056
    %v1106 = vunpack.c.l.b16 %v1057
    %v1107 = vunpack.c.h.b16 %v1057
    %v1108 = vunpack.c.l.b16 %v1058
    %v1109 = vunpack.c.h.b16 %v1058
    %v1110 = vunpack.c.l.b16 %v1059
    %v1111 = vunpack.c.h.b16 %v1059
    %v1112 = vunpack.c.l.b16 %v1060
    %v1113 = vunpack.c.h.b16 %v1060
    %v1114 = vunpack.c.l.b16 %v1061
    %v1115 = vunpack.c.h.b16 %v1061
    %v1116 = vunpack.c.l.b16 %v1062
    %v1117 = vunpack.c.h.b16 %v1062
    %v1118 = vunpack.c.l.b16 %v1063
    %v1119 = vunpack.c.h.b16 %v1063
    %v1120 = vunpack.c.l.b16 %v1064
    %v1121 = vunpack.c.h.b16 %v1064
    %v1122 = vunpack.c.l.b16 %v1065
    %v1123 = vunpack.c.h.b16 %v1065
    %v1124 = vunpack.c.l.b16 %v1066
    %v1125 = vunpack.c.h.b16 %v1066
    %v1126 = vunpack.c.l.b16 %v1067
    %v1127 = vunpack.c.h.b16 %v1067
    %v1128 = vunpack.c.l.b16 %v1068
    %v1129 = vunpack.c.h.b16 %v1068
    %v1130 = vunpack.c.l.b16 %v1069
    %v1131 = vunpack.c.h.b16 %v1069
    %v1132 = vunpack.c.l.b16 %v1070
    %v1133 = vunpack.c.h.b16 %v1070
    %v1134 = vunpack.c.l.b16 %v1071
    %v1135 = vunpack.c.h.b16 %v1071
    %v1136 = vunpack.c.l.b16 %v1072
    %v1137 = vunpack.c.h.b16 %v1072
    %v1138 = vunpack.c.l.b16 %v1073
    %v1139 = vunpack.c.h.b16 %v1073
    %v1140 = vunpack.c.l.b16 %v1074
    %v1141 = vunpack.c.h.b16 %v1074
    %v1142 = vunpack.c.l.b16 %v1075
    %v1143 = vunpack.c.h.b16 %v1075
    %v1144 = vunpack.c.l.b16 %v1076
    %v1145 = vunpack.c.h.b16 %v1076
    %v1146 = vunpack.c.l.b16 %v1077
    %v1147 = vunpack.c.h.b16 %v1077
    %v1148 = vunpack.c.l.b16 %v1078
    %v1149 = vunpack.c.h.b16 %v1078
    %v1150 = vunpack.c.l.b16 %v1079
    %v1151 = vunpack.c.h.b16 %v1079
    %v1152 = vpack.c.b16 %v1108, %v1104
    %v1153 = vpack.c.b16 %v1109, %v1105
    %v1154 = vpack.c.b16 %v1110, %v1106
    %v1155 = vpack.c.b16 %v1111, %v1107
    %v1156 = vpack.c.b16 %v1116, %v1112
    %v1157 = vpack.c.b16 %v1117, %v1113
    %v1158 = vpack.c.b16 %v1118, %v1114
    %v1159 = vpack.c.b16 %v1119, %v1115
    %v1160 = vpack.c.b16 %v1124, %v1120
    %v1161 = vpack.c.b16 %v1125, %v1121
    %v1162 = vpack.c.b16 %v1126, %v1122
    %v1163 = vpack.c.b16 %v1127, %v1123
    %v1164 = vpack.c.b16 %v1132, %v1128
    %v1165 = vpack.c.b16 %v1133, %v1129
    %v1166 = vpack.c.b16 %v1134, %v1130
    %v1167 = vpack.c.b16 %v1135, %v1131
    %v1168 = vpack.c.b16 %v1140, %v1136
    %v1169 = vpack.c.b16 %v1141, %v1137
    %v1170 = vpack.c.b16 %v1142, %v1138
    %v1171 = vpack.c.b16 %v1143, %v1139
    %v1172 = vpack.c.b16 %v1148, %v1144
    %v1173 = vpack.c.b16 %v1149, %v1145
    %v1174 = vpack.c.b16 %v1150, %v1146
    %v1175 = vpack.c.b16 %v1151, %v1147
    %v1201 = vsel %vm495, %v1051, 0
    %v1204 = vsel %vm495, %v1052, 0
    %v1207 = vsel %vm495, %v1053, 0
    %v1210 = vsel %vm495, %v1054, 0
    %1212 = vmatprep.subr.bf16.mxu0 %v1153
    %1213 = vmatpush1.bf16.msra.mxu0 %v1152
    %1214 = vmatprep.subr.bf16.mxu0 %v1157
    %1215 = vmatpush1.bf16.msra.mxu0 %v1156
    %1216 = vmatprep.subr.bf16.mxu0 %v1161
    %1217 = vmatpush1.bf16.msra.mxu0 %v1160
    %1218 = vmatprep.subr.bf16.mxu0 %v1165
    %1219 = vmatpush1.bf16.msra.mxu0 %v1164
    %1220 = vmatprep.subr.bf16.mxu0 %v1169
    %1221 = vmatpush1.bf16.msra.mxu0 %v1168
    %1222 = vmatprep.subr.bf16.mxu0 %v1173
    %1223 = vmatpush1.bf16.msra.mxu0 %v1172
    %1224 = vmatprep.subr.bf16.mxu0 0
    %1225 = vmatpush1.bf16.msra.mxu0 0
    %1226 = vmatprep.subr.bf16.mxu0 0
    %1227 = vmatpush1.bf16.msra.mxu0 0
    %1228 = vmatprep.subr.bf16.mxu0 0
    %1229 = vmatpush1.bf16.msra.mxu0 0
    %1230 = vmatprep.subr.bf16.mxu0 0
    %1231 = vmatpush1.bf16.msra.mxu0 0
    %1232 = vmatprep.subr.bf16.mxu0 0
    %1233 = vmatpush1.bf16.msra.mxu0 0
    %1234 = vmatprep.subr.bf16.mxu0 0
    %1235 = vmatpush1.bf16.msra.mxu0 0
    %1236 = vmatprep.subr.bf16.mxu0 0
    %1237 = vmatpush1.bf16.msra.mxu0 0
    %1238 = vmatprep.subr.bf16.mxu0 0
    %1239 = vmatpush1.bf16.msra.mxu0 0
    %1240 = vmatprep.subr.bf16.mxu0 0
    %1241 = vmatpush1.bf16.msra.mxu0 0
    %1242 = vmatprep.subr.bf16.mxu0 0
    %1243 = vmatpush1.bf16.msra.mxu0 0
    %1244 = vmatprep.mubr.bf16.mxu0 0
    %1245 = vmatmul.mubr.bf16.gmra.mrb[0].mxu0 %v1201
    %v1246 = vpop.f32.mrb[0].mxu0
    %v1247 = vadd.f32 0.0, %v1246
    %v1248 = vpop.f32.mrb[0].mxu0
    %v1249 = vadd.f32 0.0, %v1248
    %v1250 = vpop.f32.mrb[0].mxu0
    %v1251 = vadd.f32 0.0, %v1250
    %v1252 = vpop.f32.mrb[0].mxu0
    %v1253 = vadd.f32 0.0, %v1252
    %1254 = vmatprep.mubr.bf16.mxu0 0
    %1255 = vmatmul.mubr.bf16.gmra.mrb[0].mxu0 %v1204
    %v1256 = vpop.f32.mrb[0].mxu0
    %v1257 = vadd.f32 0.0, %v1256
    %v1258 = vpop.f32.mrb[0].mxu0
    %v1259 = vadd.f32 0.0, %v1258
    %v1260 = vpop.f32.mrb[0].mxu0
    %v1261 = vadd.f32 0.0, %v1260
    %v1262 = vpop.f32.mrb[0].mxu0
    %v1263 = vadd.f32 0.0, %v1262
    %1264 = vmatprep.mubr.bf16.mxu0 0
    %1265 = vmatmul.mubr.bf16.gmra.mrb[0].mxu0 %v1207
    %v1266 = vpop.f32.mrb[0].mxu0
    %v1267 = vadd.f32 0.0, %v1266
    %v1268 = vpop.f32.mrb[0].mxu0
    %v1269 = vadd.f32 0.0, %v1268
    %v1270 = vpop.f32.mrb[0].mxu0
    %v1271 = vadd.f32 0.0, %v1270
    %v1272 = vpop.f32.mrb[0].mxu0
    %v1273 = vadd.f32 0.0, %v1272
    %1274 = vmatprep.mubr.bf16.mxu0 0
    %1275 = vmatmul.mubr.bf16.gmra.mrb[0].mxu0 %v1210
    %v1276 = vpop.f32.mrb[0].mxu0
    %v1277 = vadd.f32 0.0, %v1276
    %v1278 = vpop.f32.mrb[0].mxu0
    %v1279 = vadd.f32 0.0, %v1278
    %v1280 = vpop.f32.mrb[0].mxu0
    %v1281 = vadd.f32 0.0, %v1280
    %v1282 = vpop.f32.mrb[0].mxu0
    %v1283 = vadd.f32 0.0, %v1282
    %1284 = vdwg.mxu0
    %1285 = vmatprep.subr.bf16.mxu0 %v1155
    %1286 = vmatpush1.bf16.msra.mxu0 %v1154
    %1287 = vmatprep.subr.bf16.mxu0 %v1159
    %1288 = vmatpush1.bf16.msra.mxu0 %v1158
    %1289 = vmatprep.subr.bf16.mxu0 %v1163
    %1290 = vmatpush1.bf16.msra.mxu0 %v1162
    %1291 = vmatprep.subr.bf16.mxu0 %v1167
    %1292 = vmatpush1.bf16.msra.mxu0 %v1166
    %1293 = vmatprep.subr.bf16.mxu0 %v1171
    %1294 = vmatpush1.bf16.msra.mxu0 %v1170
    %1295 = vmatprep.subr.bf16.mxu0 %v1175
    %1296 = vmatpush1.bf16.msra.mxu0 %v1174
    %1297 = vmatprep.subr.bf16.mxu0 0
    %1298 = vmatpush1.bf16.msra.mxu0 0
    %1299 = vmatprep.subr.bf16.mxu0 0
    %1300 = vmatpush1.bf16.msra.mxu0 0
    %1301 = vmatprep.subr.bf16.mxu0 0
    %1302 = vmatpush1.bf16.msra.mxu0 0
    %1303 = vmatprep.subr.bf16.mxu0 0
    %1304 = vmatpush1.bf16.msra.mxu0 0
    %1305 = vmatprep.subr.bf16.mxu0 0
    %1306 = vmatpush1.bf16.msra.mxu0 0
    %1307 = vmatprep.subr.bf16.mxu0 0
    %1308 = vmatpush1.bf16.msra.mxu0 0
    %1309 = vmatprep.subr.bf16.mxu0 0
    %1310 = vmatpush1.bf16.msra.mxu0 0
    %1311 = vmatprep.subr.bf16.mxu0 0
    %1312 = vmatpush1.bf16.msra.mxu0 0
    %1313 = vmatprep.subr.bf16.mxu0 0
    %1314 = vmatpush1.bf16.msra.mxu0 0
    %1315 = vmatprep.subr.bf16.mxu0 0
    %1316 = vmatpush1.bf16.msra.mxu0 0
    %1317 = vmatprep.mubr.bf16.mxu0 0
    %1318 = vmatmul.mubr.bf16.gmra.mrb[0].mxu0 %v1201
    %v1319 = vpop.f32.mrb[0].mxu0
    %v1320 = vadd.f32 0.0, %v1319
    %v1321 = vpop.f32.mrb[0].mxu0
    %v1322 = vadd.f32 0.0, %v1321
    %v1323 = vpop.f32.mrb[0].mxu0
    %v1324 = vadd.f32 0.0, %v1323
    %v1325 = vpop.f32.mrb[0].mxu0
    %v1326 = vadd.f32 0.0, %v1325
    %1327 = vmatprep.mubr.bf16.mxu0 0
    %1328 = vmatmul.mubr.bf16.gmra.mrb[0].mxu0 %v1204
    %v1329 = vpop.f32.mrb[0].mxu0
    %v1330 = vadd.f32 0.0, %v1329
    %v1331 = vpop.f32.mrb[0].mxu0
    %v1332 = vadd.f32 0.0, %v1331
    %v1333 = vpop.f32.mrb[0].mxu0
    %v1334 = vadd.f32 0.0, %v1333
    %v1335 = vpop.f32.mrb[0].mxu0
    %v1336 = vadd.f32 0.0, %v1335
    %1337 = vmatprep.mubr.bf16.mxu0 0
    %1338 = vmatmul.mubr.bf16.gmra.mrb[0].mxu0 %v1207
    %v1339 = vpop.f32.mrb[0].mxu0
    %v1340 = vadd.f32 0.0, %v1339
    %v1341 = vpop.f32.mrb[0].mxu0
    %v1342 = vadd.f32 0.0, %v1341
    %v1343 = vpop.f32.mrb[0].mxu0
    %v1344 = vadd.f32 0.0, %v1343
    %v1345 = vpop.f32.mrb[0].mxu0
    %v1346 = vadd.f32 0.0, %v1345
    %1347 = vmatprep.mubr.bf16.mxu0 0
    %1348 = vmatmul.mubr.bf16.gmra.mrb[0].mxu0 %v1210
    %v1349 = vpop.f32.mrb[0].mxu0
    %v1350 = vadd.f32 0.0, %v1349
    %v1351 = vpop.f32.mrb[0].mxu0
    %v1352 = vadd.f32 0.0, %v1351
    %v1353 = vpop.f32.mrb[0].mxu0
    %v1354 = vadd.f32 0.0, %v1353
    %v1355 = vpop.f32.mrb[0].mxu0
    %v1356 = vadd.f32 0.0, %v1355
    %1357 = vdwg.mxu0
    %v1358 = vadd.f32 %v821, %v1247
    %v1359 = vadd.f32 %v823, %v1249
    %v1360 = vadd.f32 %v894, %v1320
    %v1361 = vadd.f32 %v896, %v1322
    %v1362 = vadd.f32 %v825, %v1251
    %v1363 = vadd.f32 %v827, %v1253
    %v1364 = vadd.f32 %v898, %v1324
    %v1365 = vadd.f32 %v900, %v1326
    %v1366 = vadd.f32 %v831, %v1257
    %v1367 = vadd.f32 %v833, %v1259
    %v1368 = vadd.f32 %v904, %v1330
    %v1369 = vadd.f32 %v906, %v1332
    %v1370 = vadd.f32 %v835, %v1261
    %v1371 = vadd.f32 %v837, %v1263
    %v1372 = vadd.f32 %v908, %v1334
    %v1373 = vadd.f32 %v910, %v1336
    %v1374 = vadd.f32 %v841, %v1267
    %v1375 = vadd.f32 %v843, %v1269
    %v1376 = vadd.f32 %v914, %v1340
    %v1377 = vadd.f32 %v916, %v1342
    %v1378 = vadd.f32 %v845, %v1271
    %v1379 = vadd.f32 %v847, %v1273
    %v1380 = vadd.f32 %v918, %v1344
    %v1381 = vadd.f32 %v920, %v1346
    %v1382 = vadd.f32 %v851, %v1277
    %v1383 = vadd.f32 %v853, %v1279
    %v1384 = vadd.f32 %v924, %v1350
    %v1385 = vadd.f32 %v926, %v1352
    %v1386 = vadd.f32 %v855, %v1281
    %v1387 = vadd.f32 %v857, %v1283
    %v1388 = vadd.f32 %v928, %v1354
    %v1389 = vadd.f32 %v930, %v1356
    %v1390 = vld [vmem:[%s3] sm:$0xf]
    %v1392 = vlaneseq
    %v1393 = vshrl.u32 %v1392, 7
    %v1394 = vsub.s32 0, %v1393
    %v1395 = vrot.slane %v1390, %v1394
    %v1396 = vlaneseq
    %v1397 = vshrl.u32 %v1396, 7
    %v1398 = vsub.s32 1, %v1397
    %v1399 = vrot.slane %v1390, %v1398
    %v1400 = vlaneseq
    %v1401 = vshrl.u32 %v1400, 7
    %v1402 = vsub.s32 2, %v1401
    %v1403 = vrot.slane %v1390, %v1402
    %v1404 = vlaneseq
    %v1405 = vshrl.u32 %v1404, 7
    %v1406 = vsub.s32 3, %v1405
    %v1407 = vrot.slane %v1390, %v1406
    %v1412 = vadd.f32 %v1358, %v1395
    %v1413 = vadd.f32 %v1359, %v1399
    %v1414 = vadd.f32 %v1360, %v1403
    %v1415 = vadd.f32 %v1361, %v1407
    %v1416 = vadd.f32 %v1362, %v1395
    %v1417 = vadd.f32 %v1363, %v1399
    %v1418 = vadd.f32 %v1364, %v1403
    %v1419 = vadd.f32 %v1365, %v1407
    %v1420 = vadd.f32 %v1366, %v1395
    %v1421 = vadd.f32 %v1367, %v1399
    %v1422 = vadd.f32 %v1368, %v1403
    %v1423 = vadd.f32 %v1369, %v1407
    %v1424 = vadd.f32 %v1370, %v1395
    %v1425 = vadd.f32 %v1371, %v1399
    %v1426 = vadd.f32 %v1372, %v1403
    %v1427 = vadd.f32 %v1373, %v1407
    %v1428 = vadd.f32 %v1374, %v1395
    %v1429 = vadd.f32 %v1375, %v1399
    %v1430 = vadd.f32 %v1376, %v1403
    %v1431 = vadd.f32 %v1377, %v1407
    %v1432 = vadd.f32 %v1378, %v1395
    %v1433 = vadd.f32 %v1379, %v1399
    %v1434 = vadd.f32 %v1380, %v1403
    %v1435 = vadd.f32 %v1381, %v1407
    %v1436 = vadd.f32 %v1382, %v1395
    %v1437 = vadd.f32 %v1383, %v1399
    %v1438 = vadd.f32 %v1384, %v1403
    %v1439 = vadd.f32 %v1385, %v1407
    %v1440 = vadd.f32 %v1386, %v1395
    %v1441 = vadd.f32 %v1387, %v1399
    %v1442 = vadd.f32 %v1388, %v1403
    %v1443 = vadd.f32 %v1389, %v1407
    %v1444 = vmax.f32 %v1412, 0.0
    %v1445 = vmax.f32 %v1413, 0.0
    %v1446 = vmax.f32 %v1414, 0.0
    %v1447 = vmax.f32 %v1415, 0.0
    %v1448 = vmax.f32 %v1416, 0.0
    %v1449 = vmax.f32 %v1417, 0.0
    %v1450 = vmax.f32 %v1418, 0.0
    %v1451 = vmax.f32 %v1419, 0.0
    %v1452 = vmax.f32 %v1420, 0.0
    %v1453 = vmax.f32 %v1421, 0.0
    %v1454 = vmax.f32 %v1422, 0.0
    %v1455 = vmax.f32 %v1423, 0.0
    %v1456 = vmax.f32 %v1424, 0.0
    %v1457 = vmax.f32 %v1425, 0.0
    %v1458 = vmax.f32 %v1426, 0.0
    %v1459 = vmax.f32 %v1427, 0.0
    %v1460 = vmax.f32 %v1428, 0.0
    %v1461 = vmax.f32 %v1429, 0.0
    %v1462 = vmax.f32 %v1430, 0.0
    %v1463 = vmax.f32 %v1431, 0.0
    %v1464 = vmax.f32 %v1432, 0.0
    %v1465 = vmax.f32 %v1433, 0.0
    %v1466 = vmax.f32 %v1434, 0.0
    %v1467 = vmax.f32 %v1435, 0.0
    %v1468 = vmax.f32 %v1436, 0.0
    %v1469 = vmax.f32 %v1437, 0.0
    %v1470 = vmax.f32 %v1438, 0.0
    %v1471 = vmax.f32 %v1439, 0.0
    %v1472 = vmax.f32 %v1440, 0.0
    %v1473 = vmax.f32 %v1441, 0.0
    %v1474 = vmax.f32 %v1442, 0.0
    %v1475 = vmax.f32 %v1443, 0.0
    %v1476 = vpack.c.bf16 %v1448, %v1444
    %v1477 = vpack.c.bf16 %v1449, %v1445
    %v1478 = vpack.c.bf16 %v1450, %v1446
    %v1479 = vpack.c.bf16 %v1451, %v1447
    %v1480 = vpack.c.bf16 %v1456, %v1452
    %v1481 = vpack.c.bf16 %v1457, %v1453
    %v1482 = vpack.c.bf16 %v1458, %v1454
    %v1483 = vpack.c.bf16 %v1459, %v1455
    %v1484 = vpack.c.bf16 %v1464, %v1460
    %v1485 = vpack.c.bf16 %v1465, %v1461
    %v1486 = vpack.c.bf16 %v1466, %v1462
    %v1487 = vpack.c.bf16 %v1467, %v1463
    %v1488 = vpack.c.bf16 %v1472, %v1468
    %v1489 = vpack.c.bf16 %v1473, %v1469
    %v1490 = vpack.c.bf16 %v1474, %v1470
    %v1491 = vpack.c.bf16 %v1475, %v1471
    %v1492 = vld [vmem:[%s4] sm:$0xf]
    %v1494 = vsel %vm94, %v1492, 0
    %1496 = vmatprep.subr.bf16.mxu0 %v1477
    %1497 = vmatpush1.bf16.msra.mxu0 %v1476
    %1498 = vmatprep.subr.bf16.mxu0 %v1481
    %1499 = vmatpush1.bf16.msra.mxu0 %v1480
    %1500 = vmatprep.subr.bf16.mxu0 0
    %1501 = vmatpush1.bf16.msra.mxu0 0
    %1502 = vmatprep.subr.bf16.mxu0 0
    %1503 = vmatpush1.bf16.msra.mxu0 0
    %1504 = vmatprep.subr.bf16.mxu0 0
    %1505 = vmatpush1.bf16.msra.mxu0 0
    %1506 = vmatprep.subr.bf16.mxu0 0
    %1507 = vmatpush1.bf16.msra.mxu0 0
    %1508 = vmatprep.subr.bf16.mxu0 0
    %1509 = vmatpush1.bf16.msra.mxu0 0
    %1510 = vmatprep.subr.bf16.mxu0 0
    %1511 = vmatpush1.bf16.msra.mxu0 0
    %1512 = vmatprep.subr.bf16.mxu0 0
    %1513 = vmatpush1.bf16.msra.mxu0 0
    %1514 = vmatprep.subr.bf16.mxu0 0
    %1515 = vmatpush1.bf16.msra.mxu0 0
    %1516 = vmatprep.subr.bf16.mxu0 0
    %1517 = vmatpush1.bf16.msra.mxu0 0
    %1518 = vmatprep.subr.bf16.mxu0 0
    %1519 = vmatpush1.bf16.msra.mxu0 0
    %1520 = vmatprep.subr.bf16.mxu0 0
    %1521 = vmatpush1.bf16.msra.mxu0 0
    %1522 = vmatprep.subr.bf16.mxu0 0
    %1523 = vmatpush1.bf16.msra.mxu0 0
    %1524 = vmatprep.subr.bf16.mxu0 0
    %1525 = vmatpush1.bf16.msra.mxu0 0
    %1526 = vmatprep.subr.bf16.mxu0 0
    %1527 = vmatpush1.bf16.msra.mxu0 0
    %1528 = vmatprep.mubr.bf16.mxu0 0
    %1529 = vmatmul.mubr.bf16.gmra.mrb[0].mxu0 %v1494
    %v1530 = vpop.f32.mrb[0].mxu0
    %v1531 = vadd.f32 0.0, %v1530
    %v1532 = vpop.f32.mrb[0].mxu0
    %v1533 = vadd.f32 0.0, %v1532
    %v1534 = vpop.f32.mrb[0].mxu0
    %v1535 = vpop.f32.mrb[0].mxu0
    %1536 = vdwg.mxu0
    %1537 = vmatprep.subr.bf16.mxu0 %v1479
    %1538 = vmatpush1.bf16.msra.mxu0 %v1478
    %1539 = vmatprep.subr.bf16.mxu0 %v1483
    %1540 = vmatpush1.bf16.msra.mxu0 %v1482
    %1541 = vmatprep.subr.bf16.mxu0 0
    %1542 = vmatpush1.bf16.msra.mxu0 0
    %1543 = vmatprep.subr.bf16.mxu0 0
    %1544 = vmatpush1.bf16.msra.mxu0 0
    %1545 = vmatprep.subr.bf16.mxu0 0
    %1546 = vmatpush1.bf16.msra.mxu0 0
    %1547 = vmatprep.subr.bf16.mxu0 0
    %1548 = vmatpush1.bf16.msra.mxu0 0
    %1549 = vmatprep.subr.bf16.mxu0 0
    %1550 = vmatpush1.bf16.msra.mxu0 0
    %1551 = vmatprep.subr.bf16.mxu0 0
    %1552 = vmatpush1.bf16.msra.mxu0 0
    %1553 = vmatprep.subr.bf16.mxu0 0
    %1554 = vmatpush1.bf16.msra.mxu0 0
    %1555 = vmatprep.subr.bf16.mxu0 0
    %1556 = vmatpush1.bf16.msra.mxu0 0
    %1557 = vmatprep.subr.bf16.mxu0 0
    %1558 = vmatpush1.bf16.msra.mxu0 0
    %1559 = vmatprep.subr.bf16.mxu0 0
    %1560 = vmatpush1.bf16.msra.mxu0 0
    %1561 = vmatprep.subr.bf16.mxu0 0
    %1562 = vmatpush1.bf16.msra.mxu0 0
    %1563 = vmatprep.subr.bf16.mxu0 0
    %1564 = vmatpush1.bf16.msra.mxu0 0
    %1565 = vmatprep.subr.bf16.mxu0 0
    %1566 = vmatpush1.bf16.msra.mxu0 0
    %1567 = vmatprep.subr.bf16.mxu0 0
    %1568 = vmatpush1.bf16.msra.mxu0 0
    %1569 = vmatprep.mubr.bf16.mxu0 0
    %1570 = vmatmul.mubr.bf16.gmra.mrb[0].mxu0 %v1494
    %v1571 = vpop.f32.mrb[0].mxu0
    %v1572 = vadd.f32 0.0, %v1571
    %v1573 = vpop.f32.mrb[0].mxu0
    %v1574 = vadd.f32 0.0, %v1573
    %v1575 = vpop.f32.mrb[0].mxu0
    %v1576 = vpop.f32.mrb[0].mxu0
    %1577 = vdwg.mxu0
    %1578 = vmatprep.subr.bf16.mxu0 %v1485
    %1579 = vmatpush1.bf16.msra.mxu0 %v1484
    %1580 = vmatprep.subr.bf16.mxu0 %v1489
    %1581 = vmatpush1.bf16.msra.mxu0 %v1488
    %1582 = vmatprep.subr.bf16.mxu0 0
    %1583 = vmatpush1.bf16.msra.mxu0 0
    %1584 = vmatprep.subr.bf16.mxu0 0
    %1585 = vmatpush1.bf16.msra.mxu0 0
    %1586 = vmatprep.subr.bf16.mxu0 0
    %1587 = vmatpush1.bf16.msra.mxu0 0
    %1588 = vmatprep.subr.bf16.mxu0 0
    %1589 = vmatpush1.bf16.msra.mxu0 0
    %1590 = vmatprep.subr.bf16.mxu0 0
    %1591 = vmatpush1.bf16.msra.mxu0 0
    %1592 = vmatprep.subr.bf16.mxu0 0
    %1593 = vmatpush1.bf16.msra.mxu0 0
    %1594 = vmatprep.subr.bf16.mxu0 0
    %1595 = vmatpush1.bf16.msra.mxu0 0
    %1596 = vmatprep.subr.bf16.mxu0 0
    %1597 = vmatpush1.bf16.msra.mxu0 0
    %1598 = vmatprep.subr.bf16.mxu0 0
    %1599 = vmatpush1.bf16.msra.mxu0 0
    %1600 = vmatprep.subr.bf16.mxu0 0
    %1601 = vmatpush1.bf16.msra.mxu0 0
    %1602 = vmatprep.subr.bf16.mxu0 0
    %1603 = vmatpush1.bf16.msra.mxu0 0
    %1604 = vmatprep.subr.bf16.mxu0 0
    %1605 = vmatpush1.bf16.msra.mxu0 0
    %1606 = vmatprep.subr.bf16.mxu0 0
    %1607 = vmatpush1.bf16.msra.mxu0 0
    %1608 = vmatprep.subr.bf16.mxu0 0
    %1609 = vmatpush1.bf16.msra.mxu0 0
    %1610 = vmatprep.mubr.bf16.mxu0 0
    %1611 = vmatmul.mubr.bf16.gmra.mrb[0].mxu0 %v1494
    %v1612 = vpop.f32.mrb[0].mxu0
    %v1613 = vadd.f32 0.0, %v1612
    %v1614 = vpop.f32.mrb[0].mxu0
    %v1615 = vadd.f32 0.0, %v1614
    %v1616 = vpop.f32.mrb[0].mxu0
    %v1617 = vpop.f32.mrb[0].mxu0
    %1618 = vdwg.mxu0
    %1619 = vmatprep.subr.bf16.mxu0 %v1487
    %1620 = vmatpush1.bf16.msra.mxu0 %v1486
    %1621 = vmatprep.subr.bf16.mxu0 %v1491
    %1622 = vmatpush1.bf16.msra.mxu0 %v1490
    %1623 = vmatprep.subr.bf16.mxu0 0
    %1624 = vmatpush1.bf16.msra.mxu0 0
    %1625 = vmatprep.subr.bf16.mxu0 0
    %1626 = vmatpush1.bf16.msra.mxu0 0
    %1627 = vmatprep.subr.bf16.mxu0 0
    %1628 = vmatpush1.bf16.msra.mxu0 0
    %1629 = vmatprep.subr.bf16.mxu0 0
    %1630 = vmatpush1.bf16.msra.mxu0 0
    %1631 = vmatprep.subr.bf16.mxu0 0
    %1632 = vmatpush1.bf16.msra.mxu0 0
    %1633 = vmatprep.subr.bf16.mxu0 0
    %1634 = vmatpush1.bf16.msra.mxu0 0
    %1635 = vmatprep.subr.bf16.mxu0 0
    %1636 = vmatpush1.bf16.msra.mxu0 0
    %1637 = vmatprep.subr.bf16.mxu0 0
    %1638 = vmatpush1.bf16.msra.mxu0 0
    %1639 = vmatprep.subr.bf16.mxu0 0
    %1640 = vmatpush1.bf16.msra.mxu0 0
    %1641 = vmatprep.subr.bf16.mxu0 0
    %1642 = vmatpush1.bf16.msra.mxu0 0
    %1643 = vmatprep.subr.bf16.mxu0 0
    %1644 = vmatpush1.bf16.msra.mxu0 0
    %1645 = vmatprep.subr.bf16.mxu0 0
    %1646 = vmatpush1.bf16.msra.mxu0 0
    %1647 = vmatprep.subr.bf16.mxu0 0
    %1648 = vmatpush1.bf16.msra.mxu0 0
    %1649 = vmatprep.subr.bf16.mxu0 0
    %1650 = vmatpush1.bf16.msra.mxu0 0
    %1651 = vmatprep.mubr.bf16.mxu0 0
    %1652 = vmatmul.mubr.bf16.gmra.mrb[0].mxu0 %v1494
    %v1653 = vpop.f32.mrb[0].mxu0
    %v1654 = vadd.f32 0.0, %v1653
    %v1655 = vpop.f32.mrb[0].mxu0
    %v1656 = vadd.f32 0.0, %v1655
    %v1657 = vpop.f32.mrb[0].mxu0
    %v1658 = vpop.f32.mrb[0].mxu0
    %1659 = vdwg.mxu0
    %v1660 = vpack.c.bf16 %v1531, %v1531
    %v1661 = vpack.c.bf16 %v1533, %v1533
    %v1662 = vpack.c.bf16 %v1572, %v1572
    %v1663 = vpack.c.bf16 %v1574, %v1574
    %v1664 = vpack.c.bf16 %v1613, %v1613
    %v1665 = vpack.c.bf16 %v1615, %v1615
    %v1666 = vpack.c.bf16 %v1654, %v1654
    %v1667 = vpack.c.bf16 %v1656, %v1656
    %v1676 = vunpack.c.l.b16 %v1660
    %v1677 = vunpack.c.l.b16 %v1661
    %v1678 = vunpack.c.l.b16 %v1662
    %v1679 = vunpack.c.l.b16 %v1663
    %v1680 = vunpack.c.l.b16 %v1664
    %v1681 = vunpack.c.l.b16 %v1665
    %v1682 = vunpack.c.l.b16 %v1666
    %v1683 = vunpack.c.l.b16 %v1667
    %v1684 = vld [vmem:[#allocation3] sm:$0xff]
    %v1685 = vld [vmem:[#allocation3 + $0x8] sm:$0xff]
    %v1686 = vld [vmem:[#allocation3 + $0x10] sm:$0xff]
    %v1687 = vld [vmem:[#allocation3 + $0x18] sm:$0xff]
    %v1688 = vld [vmem:[#allocation3 + $0x20] sm:$0xff]
    %v1689 = vld [vmem:[#allocation3 + $0x28] sm:$0xff]
    %v1690 = vld [vmem:[#allocation3 + $0x30] sm:$0xff]
    %v1691 = vld [vmem:[#allocation3 + $0x38] sm:$0xff]
    %v1692 = vld [vmem:[#allocation3 + $0x40] sm:$0xff]
    %v1693 = vld [vmem:[#allocation3 + $0x48] sm:$0xff]
    %v1694 = vld [vmem:[#allocation3 + $0x50] sm:$0xff]
    %v1695 = vld [vmem:[#allocation3 + $0x58] sm:$0xff]
    %v1696 = vld [vmem:[#allocation3 + $0x60] sm:$0xff]
    %v1697 = vld [vmem:[#allocation3 + $0x68] sm:$0xff]
    %v1698 = vld [vmem:[#allocation3 + $0x70] sm:$0xff]
    %v1699 = vld [vmem:[#allocation3 + $0x78] sm:$0xff]
    %v1700 = vld [vmem:[#allocation3 + $0x80] sm:$0xff]
    %v1701 = vld [vmem:[#allocation3 + $0x88] sm:$0xff]
    %v1702 = vld [vmem:[#allocation3 + $0x90] sm:$0xff]
    %v1703 = vld [vmem:[#allocation3 + $0x98] sm:$0xff]
    %v1704 = vld [vmem:[#allocation3 + $0xa0] sm:$0xff]
    %v1705 = vld [vmem:[#allocation3 + $0xa8] sm:$0xff]
    %v1706 = vld [vmem:[#allocation3 + $0xb0] sm:$0xff]
    %v1707 = vld [vmem:[#allocation3 + $0xb8] sm:$0xff]
    %v1708 = vld [vmem:[#allocation3 + $0xc0] sm:$0xff]
    %v1709 = vld [vmem:[#allocation3 + $0xc8] sm:$0xff]
    %v1710 = vld [vmem:[#allocation3 + $0xd0] sm:$0xff]
    %v1711 = vld [vmem:[#allocation3 + $0xd8] sm:$0xff]
    %v1712 = vld [vmem:[#allocation3 + $0xe0] sm:$0xff]
    %v1713 = vld [vmem:[#allocation3 + $0xe8] sm:$0xff]
    %v1714 = vld [vmem:[#allocation3 + $0xf0] sm:$0xff]
    %v1715 = vld [vmem:[#allocation3 + $0xf8] sm:$0xff]
    %v1716 = vld [vmem:[#allocation3 + $0x100] sm:$0xff]
    %v1717 = vld [vmem:[#allocation3 + $0x108] sm:$0xff]
    %v1718 = vld [vmem:[#allocation3 + $0x110] sm:$0xff]
    %v1719 = vld [vmem:[#allocation3 + $0x118] sm:$0xff]
    %v1720 = vld [vmem:[#allocation3 + $0x120] sm:$0xff]
    %v1721 = vld [vmem:[#allocation3 + $0x128] sm:$0xff]
    %v1722 = vld [vmem:[#allocation3 + $0x130] sm:$0xff]
    %v1723 = vld [vmem:[#allocation3 + $0x138] sm:$0xff]
    %v1724 = vld [vmem:[#allocation3 + $0x140] sm:$0xff]
    %v1725 = vld [vmem:[#allocation3 + $0x148] sm:$0xff]
    %v1726 = vld [vmem:[#allocation3 + $0x150] sm:$0xff]
    %v1727 = vld [vmem:[#allocation3 + $0x158] sm:$0xff]
    %v1728 = vld [vmem:[#allocation3 + $0x160] sm:$0xff]
    %v1729 = vld [vmem:[#allocation3 + $0x168] sm:$0xff]
    %v1730 = vld [vmem:[#allocation3 + $0x170] sm:$0xff]
    %v1731 = vld [vmem:[#allocation3 + $0x178] sm:$0xff]
    %v1732 = vld [vmem:[#allocation3 + $0x180] sm:$0xff]
    %v1733 = vld [vmem:[#allocation3 + $0x188] sm:$0xff]
    %v1734 = vld [vmem:[#allocation3 + $0x190] sm:$0xff]
    %v1735 = vld [vmem:[#allocation3 + $0x198] sm:$0xff]
    %v1736 = vld [vmem:[#allocation3 + $0x1a0] sm:$0xff]
    %v1737 = vld [vmem:[#allocation3 + $0x1a8] sm:$0xff]
    %v1738 = vld [vmem:[#allocation3 + $0x1b0] sm:$0xff]
    %v1739 = vld [vmem:[#allocation3 + $0x1b8] sm:$0xff]
    %v1740 = vld [vmem:[#allocation3 + $0x1c0] sm:$0xff]
    %v1741 = vld [vmem:[#allocation3 + $0x1c8] sm:$0xff]
    %v1742 = vld [vmem:[#allocation3 + $0x1d0] sm:$0xff]
    %v1743 = vld [vmem:[#allocation3 + $0x1d8] sm:$0xff]
    %v1744 = vld [vmem:[#allocation3 + $0x1e0] sm:$0xff]
    %v1745 = vld [vmem:[#allocation3 + $0x1e8] sm:$0xff]
    %v1746 = vld [vmem:[#allocation3 + $0x1f0] sm:$0xff]
    %v1747 = vld [vmem:[#allocation3 + $0x1f8] sm:$0xff]
    %s1748 = scalar_lea.vmem %s4, 4
    %v1749 = vld [vmem:[%s1748] sm:$0xf]
    %v1751 = vsel %vm94, %v1749, 0
    %1753 = vmatprep.subr.bf16.mxu0 %v1477
    %1754 = vmatpush1.bf16.msra.mxu0 %v1476
    %1755 = vmatprep.subr.bf16.mxu0 %v1481
    %1756 = vmatpush1.bf16.msra.mxu0 %v1480
    %1757 = vmatprep.subr.bf16.mxu0 0
    %1758 = vmatpush1.bf16.msra.mxu0 0
    %1759 = vmatprep.subr.bf16.mxu0 0
    %1760 = vmatpush1.bf16.msra.mxu0 0
    %1761 = vmatprep.subr.bf16.mxu0 0
    %1762 = vmatpush1.bf16.msra.mxu0 0
    %1763 = vmatprep.subr.bf16.mxu0 0
    %1764 = vmatpush1.bf16.msra.mxu0 0
    %1765 = vmatprep.subr.bf16.mxu0 0
    %1766 = vmatpush1.bf16.msra.mxu0 0
    %1767 = vmatprep.subr.bf16.mxu0 0
    %1768 = vmatpush1.bf16.msra.mxu0 0
    %1769 = vmatprep.subr.bf16.mxu0 0
    %1770 = vmatpush1.bf16.msra.mxu0 0
    %1771 = vmatprep.subr.bf16.mxu0 0
    %1772 = vmatpush1.bf16.msra.mxu0 0
    %1773 = vmatprep.subr.bf16.mxu0 0
    %1774 = vmatpush1.bf16.msra.mxu0 0
    %1775 = vmatprep.subr.bf16.mxu0 0
    %1776 = vmatpush1.bf16.msra.mxu0 0
    %1777 = vmatprep.subr.bf16.mxu0 0
    %1778 = vmatpush1.bf16.msra.mxu0 0
    %1779 = vmatprep.subr.bf16.mxu0 0
    %1780 = vmatpush1.bf16.msra.mxu0 0
    %1781 = vmatprep.subr.bf16.mxu0 0
    %1782 = vmatpush1.bf16.msra.mxu0 0
    %1783 = vmatprep.subr.bf16.mxu0 0
    %1784 = vmatpush1.bf16.msra.mxu0 0
    %1785 = vmatprep.mubr.bf16.mxu0 0
    %1786 = vmatmul.mubr.bf16.gmra.mrb[0].mxu0 %v1751
    %v1787 = vpop.f32.mrb[0].mxu0
    %v1788 = vadd.f32 0.0, %v1787
    %v1789 = vpop.f32.mrb[0].mxu0
    %v1790 = vadd.f32 0.0, %v1789
    %v1791 = vpop.f32.mrb[0].mxu0
    %v1792 = vpop.f32.mrb[0].mxu0
    %1793 = vdwg.mxu0
    %1794 = vmatprep.subr.bf16.mxu0 %v1479
    %1795 = vmatpush1.bf16.msra.mxu0 %v1478
    %1796 = vmatprep.subr.bf16.mxu0 %v1483
    %1797 = vmatpush1.bf16.msra.mxu0 %v1482
    %1798 = vmatprep.subr.bf16.mxu0 0
    %1799 = vmatpush1.bf16.msra.mxu0 0
    %1800 = vmatprep.subr.bf16.mxu0 0
    %1801 = vmatpush1.bf16.msra.mxu0 0
    %1802 = vmatprep.subr.bf16.mxu0 0
    %1803 = vmatpush1.bf16.msra.mxu0 0
    %1804 = vmatprep.subr.bf16.mxu0 0
    %1805 = vmatpush1.bf16.msra.mxu0 0
    %1806 = vmatprep.subr.bf16.mxu0 0
    %1807 = vmatpush1.bf16.msra.mxu0 0
    %1808 = vmatprep.subr.bf16.mxu0 0
    %1809 = vmatpush1.bf16.msra.mxu0 0
    %1810 = vmatprep.subr.bf16.mxu0 0
    %1811 = vmatpush1.bf16.msra.mxu0 0
    %1812 = vmatprep.subr.bf16.mxu0 0
    %1813 = vmatpush1.bf16.msra.mxu0 0
    %1814 = vmatprep.subr.bf16.mxu0 0
    %1815 = vmatpush1.bf16.msra.mxu0 0
    %1816 = vmatprep.subr.bf16.mxu0 0
    %1817 = vmatpush1.bf16.msra.mxu0 0
    %1818 = vmatprep.subr.bf16.mxu0 0
    %1819 = vmatpush1.bf16.msra.mxu0 0
    %1820 = vmatprep.subr.bf16.mxu0 0
    %1821 = vmatpush1.bf16.msra.mxu0 0
    %1822 = vmatprep.subr.bf16.mxu0 0
    %1823 = vmatpush1.bf16.msra.mxu0 0
    %1824 = vmatprep.subr.bf16.mxu0 0
    %1825 = vmatpush1.bf16.msra.mxu0 0
    %1826 = vmatprep.mubr.bf16.mxu0 0
    %1827 = vmatmul.mubr.bf16.gmra.mrb[0].mxu0 %v1751
    %v1828 = vpop.f32.mrb[0].mxu0
    %v1829 = vadd.f32 0.0, %v1828
    %v1830 = vpop.f32.mrb[0].mxu0
    %v1831 = vadd.f32 0.0, %v1830
    %v1832 = vpop.f32.mrb[0].mxu0
    %v1833 = vpop.f32.mrb[0].mxu0
    %1834 = vdwg.mxu0
    %1835 = vmatprep.subr.bf16.mxu0 %v1485
    %1836 = vmatpush1.bf16.msra.mxu0 %v1484
    %1837 = vmatprep.subr.bf16.mxu0 %v1489
    %1838 = vmatpush1.bf16.msra.mxu0 %v1488
    %1839 = vmatprep.subr.bf16.mxu0 0
    %1840 = vmatpush1.bf16.msra.mxu0 0
    %1841 = vmatprep.subr.bf16.mxu0 0
    %1842 = vmatpush1.bf16.msra.mxu0 0
    %1843 = vmatprep.subr.bf16.mxu0 0
    %1844 = vmatpush1.bf16.msra.mxu0 0
    %1845 = vmatprep.subr.bf16.mxu0 0
    %1846 = vmatpush1.bf16.msra.mxu0 0
    %1847 = vmatprep.subr.bf16.mxu0 0
    %1848 = vmatpush1.bf16.msra.mxu0 0
    %1849 = vmatprep.subr.bf16.mxu0 0
    %1850 = vmatpush1.bf16.msra.mxu0 0
    %1851 = vmatprep.subr.bf16.mxu0 0
    %1852 = vmatpush1.bf16.msra.mxu0 0
    %1853 = vmatprep.subr.bf16.mxu0 0
    %1854 = vmatpush1.bf16.msra.mxu0 0
    %1855 = vmatprep.subr.bf16.mxu0 0
    %1856 = vmatpush1.bf16.msra.mxu0 0
    %1857 = vmatprep.subr.bf16.mxu0 0
    %1858 = vmatpush1.bf16.msra.mxu0 0
    %1859 = vmatprep.subr.bf16.mxu0 0
    %1860 = vmatpush1.bf16.msra.mxu0 0
    %1861 = vmatprep.subr.bf16.mxu0 0
    %1862 = vmatpush1.bf16.msra.mxu0 0
    %1863 = vmatprep.subr.bf16.mxu0 0
    %1864 = vmatpush1.bf16.msra.mxu0 0
    %1865 = vmatprep.subr.bf16.mxu0 0
    %1866 = vmatpush1.bf16.msra.mxu0 0
    %1867 = vmatprep.mubr.bf16.mxu0 0
    %1868 = vmatmul.mubr.bf16.gmra.mrb[0].mxu0 %v1751
    %v1869 = vpop.f32.mrb[0].mxu0
    %v1870 = vadd.f32 0.0, %v1869
    %v1871 = vpop.f32.mrb[0].mxu0
    %v1872 = vadd.f32 0.0, %v1871
    %v1873 = vpop.f32.mrb[0].mxu0
    %v1874 = vpop.f32.mrb[0].mxu0
    %1875 = vdwg.mxu0
    %1876 = vmatprep.subr.bf16.mxu0 %v1487
    %1877 = vmatpush1.bf16.msra.mxu0 %v1486
    %1878 = vmatprep.subr.bf16.mxu0 %v1491
    %1879 = vmatpush1.bf16.msra.mxu0 %v1490
    %1880 = vmatprep.subr.bf16.mxu0 0
    %1881 = vmatpush1.bf16.msra.mxu0 0
    %1882 = vmatprep.subr.bf16.mxu0 0
    %1883 = vmatpush1.bf16.msra.mxu0 0
    %1884 = vmatprep.subr.bf16.mxu0 0
    %1885 = vmatpush1.bf16.msra.mxu0 0
    %1886 = vmatprep.subr.bf16.mxu0 0
    %1887 = vmatpush1.bf16.msra.mxu0 0
    %1888 = vmatprep.subr.bf16.mxu0 0
    %1889 = vmatpush1.bf16.msra.mxu0 0
    %1890 = vmatprep.subr.bf16.mxu0 0
    %1891 = vmatpush1.bf16.msra.mxu0 0
    %1892 = vmatprep.subr.bf16.mxu0 0
    %1893 = vmatpush1.bf16.msra.mxu0 0
    %1894 = vmatprep.subr.bf16.mxu0 0
    %1895 = vmatpush1.bf16.msra.mxu0 0
    %1896 = vmatprep.subr.bf16.mxu0 0
    %1897 = vmatpush1.bf16.msra.mxu0 0
    %1898 = vmatprep.subr.bf16.mxu0 0
    %1899 = vmatpush1.bf16.msra.mxu0 0
    %1900 = vmatprep.subr.bf16.mxu0 0
    %1901 = vmatpush1.bf16.msra.mxu0 0
    %1902 = vmatprep.subr.bf16.mxu0 0
    %1903 = vmatpush1.bf16.msra.mxu0 0
    %1904 = vmatprep.subr.bf16.mxu0 0
    %1905 = vmatpush1.bf16.msra.mxu0 0
    %1906 = vmatprep.subr.bf16.mxu0 0
    %1907 = vmatpush1.bf16.msra.mxu0 0
    %1908 = vmatprep.mubr.bf16.mxu0 0
    %1909 = vmatmul.mubr.bf16.gmra.mrb[0].mxu0 %v1751
    %v1910 = vpop.f32.mrb[0].mxu0
    %v1911 = vadd.f32 0.0, %v1910
    %v1912 = vpop.f32.mrb[0].mxu0
    %v1913 = vadd.f32 0.0, %v1912
    %v1914 = vpop.f32.mrb[0].mxu0
    %v1915 = vpop.f32.mrb[0].mxu0
    %1916 = vdwg.mxu0
    %v1917 = vpack.c.bf16 %v1788, %v1788
    %v1918 = vpack.c.bf16 %v1790, %v1790
    %v1919 = vpack.c.bf16 %v1829, %v1829
    %v1920 = vpack.c.bf16 %v1831, %v1831
    %v1921 = vpack.c.bf16 %v1870, %v1870
    %v1922 = vpack.c.bf16 %v1872, %v1872
    %v1923 = vpack.c.bf16 %v1911, %v1911
    %v1924 = vpack.c.bf16 %v1913, %v1913
    %v1933 = vunpack.c.l.b16 %v1917
    %v1934 = vunpack.c.l.b16 %v1918
    %v1935 = vunpack.c.l.b16 %v1919
    %v1936 = vunpack.c.l.b16 %v1920
    %v1937 = vunpack.c.l.b16 %v1921
    %v1938 = vunpack.c.l.b16 %v1922
    %v1939 = vunpack.c.l.b16 %v1923
    %v1940 = vunpack.c.l.b16 %v1924
    %s1941 = scalar_lea.vmem [#allocation3], 512
    %v1942 = vld [vmem:[%s1941] sm:$0xff]
    %v1943 = vld [vmem:[%s1941 + $0x8] sm:$0xff]
    %v1944 = vld [vmem:[%s1941 + $0x10] sm:$0xff]
    %v1945 = vld [vmem:[%s1941 + $0x18] sm:$0xff]
    %v1946 = vld [vmem:[%s1941 + $0x20] sm:$0xff]
    %v1947 = vld [vmem:[%s1941 + $0x28] sm:$0xff]
    %v1948 = vld [vmem:[%s1941 + $0x30] sm:$0xff]
    %v1949 = vld [vmem:[%s1941 + $0x38] sm:$0xff]
    %v1950 = vld [vmem:[%s1941 + $0x40] sm:$0xff]
    %v1951 = vld [vmem:[%s1941 + $0x48] sm:$0xff]
    %v1952 = vld [vmem:[%s1941 + $0x50] sm:$0xff]
    %v1953 = vld [vmem:[%s1941 + $0x58] sm:$0xff]
    %v1954 = vld [vmem:[%s1941 + $0x60] sm:$0xff]
    %v1955 = vld [vmem:[%s1941 + $0x68] sm:$0xff]
    %v1956 = vld [vmem:[%s1941 + $0x70] sm:$0xff]
    %v1957 = vld [vmem:[%s1941 + $0x78] sm:$0xff]
    %v1958 = vld [vmem:[%s1941 + $0x80] sm:$0xff]
    %v1959 = vld [vmem:[%s1941 + $0x88] sm:$0xff]
    %v1960 = vld [vmem:[%s1941 + $0x90] sm:$0xff]
    %v1961 = vld [vmem:[%s1941 + $0x98] sm:$0xff]
    %v1962 = vld [vmem:[%s1941 + $0xa0] sm:$0xff]
    %v1963 = vld [vmem:[%s1941 + $0xa8] sm:$0xff]
    %v1964 = vld [vmem:[%s1941 + $0xb0] sm:$0xff]
    %v1965 = vld [vmem:[%s1941 + $0xb8] sm:$0xff]
    %v1966 = vld [vmem:[%s1941 + $0xc0] sm:$0xff]
    %v1967 = vld [vmem:[%s1941 + $0xc8] sm:$0xff]
    %v1968 = vld [vmem:[%s1941 + $0xd0] sm:$0xff]
    %v1969 = vld [vmem:[%s1941 + $0xd8] sm:$0xff]
    %v1970 = vld [vmem:[%s1941 + $0xe0] sm:$0xff]
    %v1971 = vld [vmem:[%s1941 + $0xe8] sm:$0xff]
    %v1972 = vld [vmem:[%s1941 + $0xf0] sm:$0xff]
    %v1973 = vld [vmem:[%s1941 + $0xf8] sm:$0xff]
    %v1974 = vld [vmem:[%s1941 + $0x100] sm:$0xff]
    %v1975 = vld [vmem:[%s1941 + $0x108] sm:$0xff]
    %v1976 = vld [vmem:[%s1941 + $0x110] sm:$0xff]
    %v1977 = vld [vmem:[%s1941 + $0x118] sm:$0xff]
    %v1978 = vld [vmem:[%s1941 + $0x120] sm:$0xff]
    %v1979 = vld [vmem:[%s1941 + $0x128] sm:$0xff]
    %v1980 = vld [vmem:[%s1941 + $0x130] sm:$0xff]
    %v1981 = vld [vmem:[%s1941 + $0x138] sm:$0xff]
    %v1982 = vld [vmem:[%s1941 + $0x140] sm:$0xff]
    %v1983 = vld [vmem:[%s1941 + $0x148] sm:$0xff]
    %v1984 = vld [vmem:[%s1941 + $0x150] sm:$0xff]
    %v1985 = vld [vmem:[%s1941 + $0x158] sm:$0xff]
    %v1986 = vld [vmem:[%s1941 + $0x160] sm:$0xff]
    %v1987 = vld [vmem:[%s1941 + $0x168] sm:$0xff]
    %v1988 = vld [vmem:[%s1941 + $0x170] sm:$0xff]
    %v1989 = vld [vmem:[%s1941 + $0x178] sm:$0xff]
    %v1990 = vld [vmem:[%s1941 + $0x180] sm:$0xff]
    %v1991 = vld [vmem:[%s1941 + $0x188] sm:$0xff]
    %v1992 = vld [vmem:[%s1941 + $0x190] sm:$0xff]
    %v1993 = vld [vmem:[%s1941 + $0x198] sm:$0xff]
    %v1994 = vld [vmem:[%s1941 + $0x1a0] sm:$0xff]
    %v1995 = vld [vmem:[%s1941 + $0x1a8] sm:$0xff]
    %v1996 = vld [vmem:[%s1941 + $0x1b0] sm:$0xff]
    %v1997 = vld [vmem:[%s1941 + $0x1b8] sm:$0xff]
    %v1998 = vld [vmem:[%s1941 + $0x1c0] sm:$0xff]
    %v1999 = vld [vmem:[%s1941 + $0x1c8] sm:$0xff]
    %v2000 = vld [vmem:[%s1941 + $0x1d0] sm:$0xff]
    %v2001 = vld [vmem:[%s1941 + $0x1d8] sm:$0xff]
    %v2002 = vld [vmem:[%s1941 + $0x1e0] sm:$0xff]
    %v2003 = vld [vmem:[%s1941 + $0x1e8] sm:$0xff]
    %v2004 = vld [vmem:[%s1941 + $0x1f0] sm:$0xff]
    %v2005 = vld [vmem:[%s1941 + $0x1f8] sm:$0xff]
    %v2006 = vpack.c.b16 %v1937, %v1933
    %v2007 = vpack.c.b16 %v1938, %v1934
    %v2008 = vpack.c.b16 %v1939, %v1935
    %v2009 = vpack.c.b16 %v1940, %v1936
    %v2078 = vunpack.c.l.b16 %v1942
    %v2079 = vunpack.c.h.b16 %v1942
    %v2080 = vunpack.c.l.b16 %v1943
    %v2081 = vunpack.c.h.b16 %v1943
    %v2082 = vunpack.c.l.b16 %v1944
    %v2083 = vunpack.c.h.b16 %v1944
    %v2084 = vunpack.c.l.b16 %v1945
    %v2085 = vunpack.c.h.b16 %v1945
    %v2086 = vunpack.c.l.b16 %v1946
    %v2087 = vunpack.c.h.b16 %v1946
    %v2088 = vunpack.c.l.b16 %v1947
    %v2089 = vunpack.c.h.b16 %v1947
    %v2090 = vunpack.c.l.b16 %v1948
    %v2091 = vunpack.c.h.b16 %v1948
    %v2092 = vunpack.c.l.b16 %v1949
    %v2093 = vunpack.c.h.b16 %v1949
    %v2094 = vunpack.c.l.b16 %v1950
    %v2095 = vunpack.c.h.b16 %v1950
    %v2096 = vunpack.c.l.b16 %v1951
    %v2097 = vunpack.c.h.b16 %v1951
    %v2098 = vunpack.c.l.b16 %v1952
    %v2099 = vunpack.c.h.b16 %v1952
    %v2100 = vunpack.c.l.b16 %v1953
    %v2101 = vunpack.c.h.b16 %v1953
    %v2102 = vunpack.c.l.b16 %v1954
    %v2103 = vunpack.c.h.b16 %v1954
    %v2104 = vunpack.c.l.b16 %v1955
    %v2105 = vunpack.c.h.b16 %v1955
    %v2106 = vunpack.c.l.b16 %v1956
    %v2107 = vunpack.c.h.b16 %v1956
    %v2108 = vunpack.c.l.b16 %v1957
    %v2109 = vunpack.c.h.b16 %v1957
    %v2110 = vunpack.c.l.b16 %v1958
    %v2111 = vunpack.c.h.b16 %v1958
    %v2112 = vunpack.c.l.b16 %v1959
    %v2113 = vunpack.c.h.b16 %v1959
    %v2114 = vunpack.c.l.b16 %v1960
    %v2115 = vunpack.c.h.b16 %v1960
    %v2116 = vunpack.c.l.b16 %v1961
    %v2117 = vunpack.c.h.b16 %v1961
    %v2118 = vunpack.c.l.b16 %v1962
    %v2119 = vunpack.c.h.b16 %v1962
    %v2120 = vunpack.c.l.b16 %v1963
    %v2121 = vunpack.c.h.b16 %v1963
    %v2122 = vunpack.c.l.b16 %v1964
    %v2123 = vunpack.c.h.b16 %v1964
    %v2124 = vunpack.c.l.b16 %v1965
    %v2125 = vunpack.c.h.b16 %v1965
    %v2126 = vunpack.c.l.b16 %v1966
    %v2127 = vunpack.c.h.b16 %v1966
    %v2128 = vunpack.c.l.b16 %v1967
    %v2129 = vunpack.c.h.b16 %v1967
    %v2130 = vunpack.c.l.b16 %v1968
    %v2131 = vunpack.c.h.b16 %v1968
    %v2132 = vunpack.c.l.b16 %v1969
    %v2133 = vunpack.c.h.b16 %v1969
    %v2134 = vunpack.c.l.b16 %v1970
    %v2135 = vunpack.c.h.b16 %v1970
    %v2136 = vunpack.c.l.b16 %v1971
    %v2137 = vunpack.c.h.b16 %v1971
    %v2138 = vunpack.c.l.b16 %v1972
    %v2139 = vunpack.c.h.b16 %v1972
    %v2140 = vunpack.c.l.b16 %v1973
    %v2141 = vunpack.c.h.b16 %v1973
    %v2142 = vunpack.c.l.b16 %v1974
    %v2143 = vunpack.c.h.b16 %v1974
    %v2144 = vunpack.c.l.b16 %v1975
    %v2145 = vunpack.c.h.b16 %v1975
    %v2146 = vunpack.c.l.b16 %v1976
    %v2147 = vunpack.c.h.b16 %v1976
    %v2148 = vunpack.c.l.b16 %v1977
    %v2149 = vunpack.c.h.b16 %v1977
    %v2150 = vunpack.c.l.b16 %v1978
    %v2151 = vunpack.c.h.b16 %v1978
    %v2152 = vunpack.c.l.b16 %v1979
    %v2153 = vunpack.c.h.b16 %v1979
    %v2154 = vunpack.c.l.b16 %v1980
    %v2155 = vunpack.c.h.b16 %v1980
    %v2156 = vunpack.c.l.b16 %v1981
    %v2157 = vunpack.c.h.b16 %v1981
    %v2158 = vunpack.c.l.b16 %v1982
    %v2159 = vunpack.c.h.b16 %v1982
    %v2160 = vunpack.c.l.b16 %v1983
    %v2161 = vunpack.c.h.b16 %v1983
    %v2162 = vunpack.c.l.b16 %v1984
    %v2163 = vunpack.c.h.b16 %v1984
    %v2164 = vunpack.c.l.b16 %v1985
    %v2165 = vunpack.c.h.b16 %v1985
    %v2166 = vunpack.c.l.b16 %v1986
    %v2167 = vunpack.c.h.b16 %v1986
    %v2168 = vunpack.c.l.b16 %v1987
    %v2169 = vunpack.c.h.b16 %v1987
    %v2170 = vunpack.c.l.b16 %v1988
    %v2171 = vunpack.c.h.b16 %v1988
    %v2172 = vunpack.c.l.b16 %v1989
    %v2173 = vunpack.c.h.b16 %v1989
    %v2174 = vunpack.c.l.b16 %v1990
    %v2175 = vunpack.c.h.b16 %v1990
    %v2176 = vunpack.c.l.b16 %v1991
    %v2177 = vunpack.c.h.b16 %v1991
    %v2178 = vunpack.c.l.b16 %v1992
    %v2179 = vunpack.c.h.b16 %v1992
    %v2180 = vunpack.c.l.b16 %v1993
    %v2181 = vunpack.c.h.b16 %v1993
    %v2182 = vunpack.c.l.b16 %v1994
    %v2183 = vunpack.c.h.b16 %v1994
    %v2184 = vunpack.c.l.b16 %v1995
    %v2185 = vunpack.c.h.b16 %v1995
    %v2186 = vunpack.c.l.b16 %v1996
    %v2187 = vunpack.c.h.b16 %v1996
    %v2188 = vunpack.c.l.b16 %v1997
    %v2189 = vunpack.c.h.b16 %v1997
    %v2190 = vunpack.c.l.b16 %v1998
    %v2191 = vunpack.c.h.b16 %v1998
    %v2192 = vunpack.c.l.b16 %v1999
    %v2193 = vunpack.c.h.b16 %v1999
    %v2194 = vunpack.c.l.b16 %v2000
    %v2195 = vunpack.c.h.b16 %v2000
    %v2196 = vunpack.c.l.b16 %v2001
    %v2197 = vunpack.c.h.b16 %v2001
    %v2198 = vunpack.c.l.b16 %v2002
    %v2199 = vunpack.c.h.b16 %v2002
    %v2200 = vunpack.c.l.b16 %v2003
    %v2201 = vunpack.c.h.b16 %v2003
    %v2202 = vunpack.c.l.b16 %v2004
    %v2203 = vunpack.c.h.b16 %v2004
    %v2204 = vunpack.c.l.b16 %v2005
    %v2205 = vunpack.c.h.b16 %v2005
    %v2206 = vpack.c.b16 %v2080, %v2078
    %v2207 = vpack.c.b16 %v2081, %v2079
    %v2208 = vpack.c.b16 %v2084, %v2082
    %v2209 = vpack.c.b16 %v2085, %v2083
    %v2210 = vpack.c.b16 %v2088, %v2086
    %v2211 = vpack.c.b16 %v2089, %v2087
    %v2212 = vpack.c.b16 %v2092, %v2090
    %v2213 = vpack.c.b16 %v2093, %v2091
    %v2214 = vpack.c.b16 %v2096, %v2094
    %v2215 = vpack.c.b16 %v2097, %v2095
    %v2216 = vpack.c.b16 %v2100, %v2098
    %v2217 = vpack.c.b16 %v2101, %v2099
    %v2218 = vpack.c.b16 %v2104, %v2102
    %v2219 = vpack.c.b16 %v2105, %v2103
    %v2220 = vpack.c.b16 %v2108, %v2106
    %v2221 = vpack.c.b16 %v2109, %v2107
    %v2222 = vpack.c.b16 %v2112, %v2110
    %v2223 = vpack.c.b16 %v2113, %v2111
    %v2224 = vpack.c.b16 %v2116, %v2114
    %v2225 = vpack.c.b16 %v2117, %v2115
    %v2226 = vpack.c.b16 %v2120, %v2118
    %v2227 = vpack.c.b16 %v2121, %v2119
    %v2228 = vpack.c.b16 %v2124, %v2122
    %v2229 = vpack.c.b16 %v2125, %v2123
    %v2230 = vpack.c.b16 %v2128, %v2126
    %v2231 = vpack.c.b16 %v2129, %v2127
    %v2232 = vpack.c.b16 %v2132, %v2130
    %v2233 = vpack.c.b16 %v2133, %v2131
    %v2234 = vpack.c.b16 %v2136, %v2134
    %v2235 = vpack.c.b16 %v2137, %v2135
    %v2236 = vpack.c.b16 %v2140, %v2138
    %v2237 = vpack.c.b16 %v2141, %v2139
    %v2238 = vpack.c.b16 %v2144, %v2142
    %v2239 = vpack.c.b16 %v2145, %v2143
    %v2240 = vpack.c.b16 %v2148, %v2146
    %v2241 = vpack.c.b16 %v2149, %v2147
    %v2242 = vpack.c.b16 %v2152, %v2150
    %v2243 = vpack.c.b16 %v2153, %v2151
    %v2244 = vpack.c.b16 %v2156, %v2154
    %v2245 = vpack.c.b16 %v2157, %v2155
    %v2246 = vpack.c.b16 %v2160, %v2158
    %v2247 = vpack.c.b16 %v2161, %v2159
    %v2248 = vpack.c.b16 %v2164, %v2162
    %v2249 = vpack.c.b16 %v2165, %v2163
    %v2250 = vpack.c.b16 %v2168, %v2166
    %v2251 = vpack.c.b16 %v2169, %v2167
    %v2252 = vpack.c.b16 %v2172, %v2170
    %v2253 = vpack.c.b16 %v2173, %v2171
    %v2254 = vpack.c.b16 %v2176, %v2174
    %v2255 = vpack.c.b16 %v2177, %v2175
    %v2256 = vpack.c.b16 %v2180, %v2178
    %v2257 = vpack.c.b16 %v2181, %v2179
    %v2258 = vpack.c.b16 %v2184, %v2182
    %v2259 = vpack.c.b16 %v2185, %v2183
    %v2260 = vpack.c.b16 %v2188, %v2186
    %v2261 = vpack.c.b16 %v2189, %v2187
    %v2262 = vpack.c.b16 %v2192, %v2190
    %v2263 = vpack.c.b16 %v2193, %v2191
    %v2264 = vpack.c.b16 %v2196, %v2194
    %v2265 = vpack.c.b16 %v2197, %v2195
    %v2266 = vpack.c.b16 %v2200, %v2198
    %v2267 = vpack.c.b16 %v2201, %v2199
    %v2268 = vpack.c.b16 %v2204, %v2202
    %v2269 = vpack.c.b16 %v2205, %v2203
    %2334 = vmatprep.subr.bf16.mxu0 %v2207
    %2335 = vmatpush1.bf16.msra.mxu0 %v2206
    %2336 = vmatprep.subr.bf16.mxu0 %v2209
    %2337 = vmatpush1.bf16.msra.mxu0 %v2208
    %2338 = vmatprep.subr.bf16.mxu0 %v2211
    %2339 = vmatpush1.bf16.msra.mxu0 %v2210
    %2340 = vmatprep.subr.bf16.mxu0 %v2213
    %2341 = vmatpush1.bf16.msra.mxu0 %v2212
    %2342 = vmatprep.subr.bf16.mxu0 %v2215
    %2343 = vmatpush1.bf16.msra.mxu0 %v2214
    %2344 = vmatprep.subr.bf16.mxu0 %v2217
    %2345 = vmatpush1.bf16.msra.mxu0 %v2216
    %2346 = vmatprep.subr.bf16.mxu0 %v2219
    %2347 = vmatpush1.bf16.msra.mxu0 %v2218
    %2348 = vmatprep.subr.bf16.mxu0 %v2221
    %2349 = vmatpush1.bf16.msra.mxu0 %v2220
    %2350 = vmatprep.subr.bf16.mxu0 %v2223
    %2351 = vmatpush1.bf16.msra.mxu0 %v2222
    %2352 = vmatprep.subr.bf16.mxu0 %v2225
    %2353 = vmatpush1.bf16.msra.mxu0 %v2224
    %2354 = vmatprep.subr.bf16.mxu0 %v2227
    %2355 = vmatpush1.bf16.msra.mxu0 %v2226
    %2356 = vmatprep.subr.bf16.mxu0 %v2229
    %2357 = vmatpush1.bf16.msra.mxu0 %v2228
    %2358 = vmatprep.subr.bf16.mxu0 %v2231
    %2359 = vmatpush1.bf16.msra.mxu0 %v2230
    %2360 = vmatprep.subr.bf16.mxu0 %v2233
    %2361 = vmatpush1.bf16.msra.mxu0 %v2232
    %2362 = vmatprep.subr.bf16.mxu0 %v2235
    %2363 = vmatpush1.bf16.msra.mxu0 %v2234
    %2364 = vmatprep.subr.bf16.mxu0 %v2237
    %2365 = vmatpush1.bf16.msra.mxu0 %v2236
    %2366 = vmatprep.mubr.bf16.mxu0 %v2007
    %2367 = vmatmul.mubr.bf16.gmra.mrb[0].mxu0 %v2006
    %v2368 = vpop.f32.mrb[0].mxu0
    %v2369 = vadd.f32 0.0, %v2368
    %v2370 = vpop.f32.mrb[0].mxu0
    %v2371 = vadd.f32 0.0, %v2370
    %v2372 = vpop.f32.mrb[0].mxu0
    %v2373 = vadd.f32 0.0, %v2372
    %v2374 = vpop.f32.mrb[0].mxu0
    %v2375 = vadd.f32 0.0, %v2374
    %2376 = vdwg.mxu0
    %2377 = vmatprep.subr.bf16.mxu0 %v2239
    %2378 = vmatpush1.bf16.msra.mxu0 %v2238
    %2379 = vmatprep.subr.bf16.mxu0 %v2241
    %2380 = vmatpush1.bf16.msra.mxu0 %v2240
    %2381 = vmatprep.subr.bf16.mxu0 %v2243
    %2382 = vmatpush1.bf16.msra.mxu0 %v2242
    %2383 = vmatprep.subr.bf16.mxu0 %v2245
    %2384 = vmatpush1.bf16.msra.mxu0 %v2244
    %2385 = vmatprep.subr.bf16.mxu0 %v2247
    %2386 = vmatpush1.bf16.msra.mxu0 %v2246
    %2387 = vmatprep.subr.bf16.mxu0 %v2249
    %2388 = vmatpush1.bf16.msra.mxu0 %v2248
    %2389 = vmatprep.subr.bf16.mxu0 %v2251
    %2390 = vmatpush1.bf16.msra.mxu0 %v2250
    %2391 = vmatprep.subr.bf16.mxu0 %v2253
    %2392 = vmatpush1.bf16.msra.mxu0 %v2252
    %2393 = vmatprep.subr.bf16.mxu0 %v2255
    %2394 = vmatpush1.bf16.msra.mxu0 %v2254
    %2395 = vmatprep.subr.bf16.mxu0 %v2257
    %2396 = vmatpush1.bf16.msra.mxu0 %v2256
    %2397 = vmatprep.subr.bf16.mxu0 %v2259
    %2398 = vmatpush1.bf16.msra.mxu0 %v2258
    %2399 = vmatprep.subr.bf16.mxu0 %v2261
    %2400 = vmatpush1.bf16.msra.mxu0 %v2260
    %2401 = vmatprep.subr.bf16.mxu0 %v2263
    %2402 = vmatpush1.bf16.msra.mxu0 %v2262
    %2403 = vmatprep.subr.bf16.mxu0 %v2265
    %2404 = vmatpush1.bf16.msra.mxu0 %v2264
    %2405 = vmatprep.subr.bf16.mxu0 %v2267
    %2406 = vmatpush1.bf16.msra.mxu0 %v2266
    %2407 = vmatprep.subr.bf16.mxu0 %v2269
    %2408 = vmatpush1.bf16.msra.mxu0 %v2268
    %2409 = vmatprep.mubr.bf16.mxu0 %v2009
    %2410 = vmatmul.mubr.bf16.gmra.mrb[0].mxu0 %v2008
    %v2411 = vpop.f32.mrb[0].mxu0
    %v2412 = vadd.f32 %v2369, %v2411
    %v2413 = vpop.f32.mrb[0].mxu0
    %v2414 = vadd.f32 %v2371, %v2413
    %v2415 = vpop.f32.mrb[0].mxu0
    %v2416 = vadd.f32 %v2373, %v2415
    %v2417 = vpop.f32.mrb[0].mxu0
    %v2418 = vadd.f32 %v2375, %v2417
    %2419 = vdwg.mxu0
    %v2420 = vpack.c.b16 %v1680, %v1676
    %v2421 = vpack.c.b16 %v1681, %v1677
    %v2422 = vpack.c.b16 %v1682, %v1678
    %v2423 = vpack.c.b16 %v1683, %v1679
    %v2492 = vunpack.c.l.b16 %v1684
    %v2493 = vunpack.c.h.b16 %v1684
    %v2494 = vunpack.c.l.b16 %v1685
    %v2495 = vunpack.c.h.b16 %v1685
    %v2496 = vunpack.c.l.b16 %v1686
    %v2497 = vunpack.c.h.b16 %v1686
    %v2498 = vunpack.c.l.b16 %v1687
    %v2499 = vunpack.c.h.b16 %v1687
    %v2500 = vunpack.c.l.b16 %v1688
    %v2501 = vunpack.c.h.b16 %v1688
    %v2502 = vunpack.c.l.b16 %v1689
    %v2503 = vunpack.c.h.b16 %v1689
    %v2504 = vunpack.c.l.b16 %v1690
    %v2505 = vunpack.c.h.b16 %v1690
    %v2506 = vunpack.c.l.b16 %v1691
    %v2507 = vunpack.c.h.b16 %v1691
    %v2508 = vunpack.c.l.b16 %v1692
    %v2509 = vunpack.c.h.b16 %v1692
    %v2510 = vunpack.c.l.b16 %v1693
    %v2511 = vunpack.c.h.b16 %v1693
    %v2512 = vunpack.c.l.b16 %v1694
    %v2513 = vunpack.c.h.b16 %v1694
    %v2514 = vunpack.c.l.b16 %v1695
    %v2515 = vunpack.c.h.b16 %v1695
    %v2516 = vunpack.c.l.b16 %v1696
    %v2517 = vunpack.c.h.b16 %v1696
    %v2518 = vunpack.c.l.b16 %v1697
    %v2519 = vunpack.c.h.b16 %v1697
    %v2520 = vunpack.c.l.b16 %v1698
    %v2521 = vunpack.c.h.b16 %v1698
    %v2522 = vunpack.c.l.b16 %v1699
    %v2523 = vunpack.c.h.b16 %v1699
    %v2524 = vunpack.c.l.b16 %v1700
    %v2525 = vunpack.c.h.b16 %v1700
    %v2526 = vunpack.c.l.b16 %v1701
    %v2527 = vunpack.c.h.b16 %v1701
    %v2528 = vunpack.c.l.b16 %v1702
    %v2529 = vunpack.c.h.b16 %v1702
    %v2530 = vunpack.c.l.b16 %v1703
    %v2531 = vunpack.c.h.b16 %v1703
    %v2532 = vunpack.c.l.b16 %v1704
    %v2533 = vunpack.c.h.b16 %v1704
    %v2534 = vunpack.c.l.b16 %v1705
    %v2535 = vunpack.c.h.b16 %v1705
    %v2536 = vunpack.c.l.b16 %v1706
    %v2537 = vunpack.c.h.b16 %v1706
    %v2538 = vunpack.c.l.b16 %v1707
    %v2539 = vunpack.c.h.b16 %v1707
    %v2540 = vunpack.c.l.b16 %v1708
    %v2541 = vunpack.c.h.b16 %v1708
    %v2542 = vunpack.c.l.b16 %v1709
    %v2543 = vunpack.c.h.b16 %v1709
    %v2544 = vunpack.c.l.b16 %v1710
    %v2545 = vunpack.c.h.b16 %v1710
    %v2546 = vunpack.c.l.b16 %v1711
    %v2547 = vunpack.c.h.b16 %v1711
    %v2548 = vunpack.c.l.b16 %v1712
    %v2549 = vunpack.c.h.b16 %v1712
    %v2550 = vunpack.c.l.b16 %v1713
    %v2551 = vunpack.c.h.b16 %v1713
    %v2552 = vunpack.c.l.b16 %v1714
    %v2553 = vunpack.c.h.b16 %v1714
    %v2554 = vunpack.c.l.b16 %v1715
    %v2555 = vunpack.c.h.b16 %v1715
    %v2556 = vunpack.c.l.b16 %v1716
    %v2557 = vunpack.c.h.b16 %v1716
    %v2558 = vunpack.c.l.b16 %v1717
    %v2559 = vunpack.c.h.b16 %v1717
    %v2560 = vunpack.c.l.b16 %v1718
    %v2561 = vunpack.c.h.b16 %v1718
    %v2562 = vunpack.c.l.b16 %v1719
    %v2563 = vunpack.c.h.b16 %v1719
    %v2564 = vunpack.c.l.b16 %v1720
    %v2565 = vunpack.c.h.b16 %v1720
    %v2566 = vunpack.c.l.b16 %v1721
    %v2567 = vunpack.c.h.b16 %v1721
    %v2568 = vunpack.c.l.b16 %v1722
    %v2569 = vunpack.c.h.b16 %v1722
    %v2570 = vunpack.c.l.b16 %v1723
    %v2571 = vunpack.c.h.b16 %v1723
    %v2572 = vunpack.c.l.b16 %v1724
    %v2573 = vunpack.c.h.b16 %v1724
    %v2574 = vunpack.c.l.b16 %v1725
    %v2575 = vunpack.c.h.b16 %v1725
    %v2576 = vunpack.c.l.b16 %v1726
    %v2577 = vunpack.c.h.b16 %v1726
    %v2578 = vunpack.c.l.b16 %v1727
    %v2579 = vunpack.c.h.b16 %v1727
    %v2580 = vunpack.c.l.b16 %v1728
    %v2581 = vunpack.c.h.b16 %v1728
    %v2582 = vunpack.c.l.b16 %v1729
    %v2583 = vunpack.c.h.b16 %v1729
    %v2584 = vunpack.c.l.b16 %v1730
    %v2585 = vunpack.c.h.b16 %v1730
    %v2586 = vunpack.c.l.b16 %v1731
    %v2587 = vunpack.c.h.b16 %v1731
    %v2588 = vunpack.c.l.b16 %v1732
    %v2589 = vunpack.c.h.b16 %v1732
    %v2590 = vunpack.c.l.b16 %v1733
    %v2591 = vunpack.c.h.b16 %v1733
    %v2592 = vunpack.c.l.b16 %v1734
    %v2593 = vunpack.c.h.b16 %v1734
    %v2594 = vunpack.c.l.b16 %v1735
    %v2595 = vunpack.c.h.b16 %v1735
    %v2596 = vunpack.c.l.b16 %v1736
    %v2597 = vunpack.c.h.b16 %v1736
    %v2598 = vunpack.c.l.b16 %v1737
    %v2599 = vunpack.c.h.b16 %v1737
    %v2600 = vunpack.c.l.b16 %v1738
    %v2601 = vunpack.c.h.b16 %v1738
    %v2602 = vunpack.c.l.b16 %v1739
    %v2603 = vunpack.c.h.b16 %v1739
    %v2604 = vunpack.c.l.b16 %v1740
    %v2605 = vunpack.c.h.b16 %v1740
    %v2606 = vunpack.c.l.b16 %v1741
    %v2607 = vunpack.c.h.b16 %v1741
    %v2608 = vunpack.c.l.b16 %v1742
    %v2609 = vunpack.c.h.b16 %v1742
    %v2610 = vunpack.c.l.b16 %v1743
    %v2611 = vunpack.c.h.b16 %v1743
    %v2612 = vunpack.c.l.b16 %v1744
    %v2613 = vunpack.c.h.b16 %v1744
    %v2614 = vunpack.c.l.b16 %v1745
    %v2615 = vunpack.c.h.b16 %v1745
    %v2616 = vunpack.c.l.b16 %v1746
    %v2617 = vunpack.c.h.b16 %v1746
    %v2618 = vunpack.c.l.b16 %v1747
    %v2619 = vunpack.c.h.b16 %v1747
    %v2620 = vpack.c.b16 %v2494, %v2492
    %v2621 = vpack.c.b16 %v2495, %v2493
    %v2622 = vpack.c.b16 %v2498, %v2496
    %v2623 = vpack.c.b16 %v2499, %v2497
    %v2624 = vpack.c.b16 %v2502, %v2500
    %v2625 = vpack.c.b16 %v2503, %v2501
    %v2626 = vpack.c.b16 %v2506, %v2504
    %v2627 = vpack.c.b16 %v2507, %v2505
    %v2628 = vpack.c.b16 %v2510, %v2508
    %v2629 = vpack.c.b16 %v2511, %v2509
    %v2630 = vpack.c.b16 %v2514, %v2512
    %v2631 = vpack.c.b16 %v2515, %v2513
    %v2632 = vpack.c.b16 %v2518, %v2516
    %v2633 = vpack.c.b16 %v2519, %v2517
    %v2634 = vpack.c.b16 %v2522, %v2520
    %v2635 = vpack.c.b16 %v2523, %v2521
    %v2636 = vpack.c.b16 %v2526, %v2524
    %v2637 = vpack.c.b16 %v2527, %v2525
    %v2638 = vpack.c.b16 %v2530, %v2528
    %v2639 = vpack.c.b16 %v2531, %v2529
    %v2640 = vpack.c.b16 %v2534, %v2532
    %v2641 = vpack.c.b16 %v2535, %v2533
    %v2642 = vpack.c.b16 %v2538, %v2536
    %v2643 = vpack.c.b16 %v2539, %v2537
    %v2644 = vpack.c.b16 %v2542, %v2540
    %v2645 = vpack.c.b16 %v2543, %v2541
    %v2646 = vpack.c.b16 %v2546, %v2544
    %v2647 = vpack.c.b16 %v2547, %v2545
    %v2648 = vpack.c.b16 %v2550, %v2548
    %v2649 = vpack.c.b16 %v2551, %v2549
    %v2650 = vpack.c.b16 %v2554, %v2552
    %v2651 = vpack.c.b16 %v2555, %v2553
    %v2652 = vpack.c.b16 %v2558, %v2556
    %v2653 = vpack.c.b16 %v2559, %v2557
    %v2654 = vpack.c.b16 %v2562, %v2560
    %v2655 = vpack.c.b16 %v2563, %v2561
    %v2656 = vpack.c.b16 %v2566, %v2564
    %v2657 = vpack.c.b16 %v2567, %v2565
    %v2658 = vpack.c.b16 %v2570, %v2568
    %v2659 = vpack.c.b16 %v2571, %v2569
    %v2660 = vpack.c.b16 %v2574, %v2572
    %v2661 = vpack.c.b16 %v2575, %v2573
    %v2662 = vpack.c.b16 %v2578, %v2576
    %v2663 = vpack.c.b16 %v2579, %v2577
    %v2664 = vpack.c.b16 %v2582, %v2580
    %v2665 = vpack.c.b16 %v2583, %v2581
    %v2666 = vpack.c.b16 %v2586, %v2584
    %v2667 = vpack.c.b16 %v2587, %v2585
    %v2668 = vpack.c.b16 %v2590, %v2588
    %v2669 = vpack.c.b16 %v2591, %v2589
    %v2670 = vpack.c.b16 %v2594, %v2592
    %v2671 = vpack.c.b16 %v2595, %v2593
    %v2672 = vpack.c.b16 %v2598, %v2596
    %v2673 = vpack.c.b16 %v2599, %v2597
    %v2674 = vpack.c.b16 %v2602, %v2600
    %v2675 = vpack.c.b16 %v2603, %v2601
    %v2676 = vpack.c.b16 %v2606, %v2604
    %v2677 = vpack.c.b16 %v2607, %v2605
    %v2678 = vpack.c.b16 %v2610, %v2608
    %v2679 = vpack.c.b16 %v2611, %v2609
    %v2680 = vpack.c.b16 %v2614, %v2612
    %v2681 = vpack.c.b16 %v2615, %v2613
    %v2682 = vpack.c.b16 %v2618, %v2616
    %v2683 = vpack.c.b16 %v2619, %v2617
    %2748 = vmatprep.subr.bf16.mxu0 %v2621
    %2749 = vmatpush1.bf16.msra.mxu0 %v2620
    %2750 = vmatprep.subr.bf16.mxu0 %v2623
    %2751 = vmatpush1.bf16.msra.mxu0 %v2622
    %2752 = vmatprep.subr.bf16.mxu0 %v2625
    %2753 = vmatpush1.bf16.msra.mxu0 %v2624
    %2754 = vmatprep.subr.bf16.mxu0 %v2627
    %2755 = vmatpush1.bf16.msra.mxu0 %v2626
    %2756 = vmatprep.subr.bf16.mxu0 %v2629
    %2757 = vmatpush1.bf16.msra.mxu0 %v2628
    %2758 = vmatprep.subr.bf16.mxu0 %v2631
    %2759 = vmatpush1.bf16.msra.mxu0 %v2630
    %2760 = vmatprep.subr.bf16.mxu0 %v2633
    %2761 = vmatpush1.bf16.msra.mxu0 %v2632
    %2762 = vmatprep.subr.bf16.mxu0 %v2635
    %2763 = vmatpush1.bf16.msra.mxu0 %v2634
    %2764 = vmatprep.subr.bf16.mxu0 %v2637
    %2765 = vmatpush1.bf16.msra.mxu0 %v2636
    %2766 = vmatprep.subr.bf16.mxu0 %v2639
    %2767 = vmatpush1.bf16.msra.mxu0 %v2638
    %2768 = vmatprep.subr.bf16.mxu0 %v2641
    %2769 = vmatpush1.bf16.msra.mxu0 %v2640
    %2770 = vmatprep.subr.bf16.mxu0 %v2643
    %2771 = vmatpush1.bf16.msra.mxu0 %v2642
    %2772 = vmatprep.subr.bf16.mxu0 %v2645
    %2773 = vmatpush1.bf16.msra.mxu0 %v2644
    %2774 = vmatprep.subr.bf16.mxu0 %v2647
    %2775 = vmatpush1.bf16.msra.mxu0 %v2646
    %2776 = vmatprep.subr.bf16.mxu0 %v2649
    %2777 = vmatpush1.bf16.msra.mxu0 %v2648
    %2778 = vmatprep.subr.bf16.mxu0 %v2651
    %2779 = vmatpush1.bf16.msra.mxu0 %v2650
    %2780 = vmatprep.mubr.bf16.mxu0 %v2421
    %2781 = vmatmul.mubr.bf16.gmra.mrb[0].mxu0 %v2420
    %v2782 = vpop.f32.mrb[0].mxu0
    %v2783 = vadd.f32 %v2412, %v2782
    %v2784 = vpop.f32.mrb[0].mxu0
    %v2785 = vadd.f32 %v2414, %v2784
    %v2786 = vpop.f32.mrb[0].mxu0
    %v2787 = vadd.f32 %v2416, %v2786
    %v2788 = vpop.f32.mrb[0].mxu0
    %v2789 = vadd.f32 %v2418, %v2788
    %2790 = vdwg.mxu0
    %2791 = vmatprep.subr.bf16.mxu0 %v2653
    %2792 = vmatpush1.bf16.msra.mxu0 %v2652
    %2793 = vmatprep.subr.bf16.mxu0 %v2655
    %2794 = vmatpush1.bf16.msra.mxu0 %v2654
    %2795 = vmatprep.subr.bf16.mxu0 %v2657
    %2796 = vmatpush1.bf16.msra.mxu0 %v2656
    %2797 = vmatprep.subr.bf16.mxu0 %v2659
    %2798 = vmatpush1.bf16.msra.mxu0 %v2658
    %2799 = vmatprep.subr.bf16.mxu0 %v2661
    %2800 = vmatpush1.bf16.msra.mxu0 %v2660
    %2801 = vmatprep.subr.bf16.mxu0 %v2663
    %2802 = vmatpush1.bf16.msra.mxu0 %v2662
    %2803 = vmatprep.subr.bf16.mxu0 %v2665
    %2804 = vmatpush1.bf16.msra.mxu0 %v2664
    %2805 = vmatprep.subr.bf16.mxu0 %v2667
    %2806 = vmatpush1.bf16.msra.mxu0 %v2666
    %2807 = vmatprep.subr.bf16.mxu0 %v2669
    %2808 = vmatpush1.bf16.msra.mxu0 %v2668
    %2809 = vmatprep.subr.bf16.mxu0 %v2671
    %2810 = vmatpush1.bf16.msra.mxu0 %v2670
    %2811 = vmatprep.subr.bf16.mxu0 %v2673
    %2812 = vmatpush1.bf16.msra.mxu0 %v2672
    %2813 = vmatprep.subr.bf16.mxu0 %v2675
    %2814 = vmatpush1.bf16.msra.mxu0 %v2674
    %2815 = vmatprep.subr.bf16.mxu0 %v2677
    %2816 = vmatpush1.bf16.msra.mxu0 %v2676
    %2817 = vmatprep.subr.bf16.mxu0 %v2679
    %2818 = vmatpush1.bf16.msra.mxu0 %v2678
    %2819 = vmatprep.subr.bf16.mxu0 %v2681
    %2820 = vmatpush1.bf16.msra.mxu0 %v2680
    %2821 = vmatprep.subr.bf16.mxu0 %v2683
    %2822 = vmatpush1.bf16.msra.mxu0 %v2682
    %2823 = vmatprep.mubr.bf16.mxu0 %v2423
    %2824 = vmatmul.mubr.bf16.gmra.mrb[0].mxu0 %v2422
    %v2825 = vpop.f32.mrb[0].mxu0
    %v2826 = vadd.f32 %v2783, %v2825
    %v2827 = vpop.f32.mrb[0].mxu0
    %v2828 = vadd.f32 %v2785, %v2827
    %v2829 = vpop.f32.mrb[0].mxu0
    %v2830 = vadd.f32 %v2787, %v2829
    %v2831 = vpop.f32.mrb[0].mxu0
    %v2832 = vadd.f32 %v2789, %v2831
    %2833 = vdwg.mxu0
    %s2834 = scalar_lea.vmem %s4, 8
    %v2835 = vld [vmem:[%s2834] sm:$0xf]
    %v2837 = vsel %vm94, %v2835, 0
    %2839 = vmatprep.subr.bf16.mxu0 %v1477
    %2840 = vmatpush1.bf16.msra.mxu0 %v1476
    %2841 = vmatprep.subr.bf16.mxu0 %v1481
    %2842 = vmatpush1.bf16.msra.mxu0 %v1480
    %2843 = vmatprep.subr.bf16.mxu0 0
    %2844 = vmatpush1.bf16.msra.mxu0 0
    %2845 = vmatprep.subr.bf16.mxu0 0
    %2846 = vmatpush1.bf16.msra.mxu0 0
    %2847 = vmatprep.subr.bf16.mxu0 0
    %2848 = vmatpush1.bf16.msra.mxu0 0
    %2849 = vmatprep.subr.bf16.mxu0 0
    %2850 = vmatpush1.bf16.msra.mxu0 0
    %2851 = vmatprep.subr.bf16.mxu0 0
    %2852 = vmatpush1.bf16.msra.mxu0 0
    %2853 = vmatprep.subr.bf16.mxu0 0
    %2854 = vmatpush1.bf16.msra.mxu0 0
    %2855 = vmatprep.subr.bf16.mxu0 0
    %2856 = vmatpush1.bf16.msra.mxu0 0
    %2857 = vmatprep.subr.bf16.mxu0 0
    %2858 = vmatpush1.bf16.msra.mxu0 0
    %2859 = vmatprep.subr.bf16.mxu0 0
    %2860 = vmatpush1.bf16.msra.mxu0 0
    %2861 = vmatprep.subr.bf16.mxu0 0
    %2862 = vmatpush1.bf16.msra.mxu0 0
    %2863 = vmatprep.subr.bf16.mxu0 0
    %2864 = vmatpush1.bf16.msra.mxu0 0
    %2865 = vmatprep.subr.bf16.mxu0 0
    %2866 = vmatpush1.bf16.msra.mxu0 0
    %2867 = vmatprep.subr.bf16.mxu0 0
    %2868 = vmatpush1.bf16.msra.mxu0 0
    %2869 = vmatprep.subr.bf16.mxu0 0
    %2870 = vmatpush1.bf16.msra.mxu0 0
    %2871 = vmatprep.mubr.bf16.mxu0 0
    %2872 = vmatmul.mubr.bf16.gmra.mrb[0].mxu0 %v2837
    %v2873 = vpop.f32.mrb[0].mxu0
    %v2874 = vadd.f32 0.0, %v2873
    %v2875 = vpop.f32.mrb[0].mxu0
    %v2876 = vadd.f32 0.0, %v2875
    %v2877 = vpop.f32.mrb[0].mxu0
    %v2878 = vpop.f32.mrb[0].mxu0
    %2879 = vdwg.mxu0
    %2880 = vmatprep.subr.bf16.mxu0 %v1479
    %2881 = vmatpush1.bf16.msra.mxu0 %v1478
    %2882 = vmatprep.subr.bf16.mxu0 %v1483
    %2883 = vmatpush1.bf16.msra.mxu0 %v1482
    %2884 = vmatprep.subr.bf16.mxu0 0
    %2885 = vmatpush1.bf16.msra.mxu0 0
    %2886 = vmatprep.subr.bf16.mxu0 0
    %2887 = vmatpush1.bf16.msra.mxu0 0
    %2888 = vmatprep.subr.bf16.mxu0 0
    %2889 = vmatpush1.bf16.msra.mxu0 0
    %2890 = vmatprep.subr.bf16.mxu0 0
    %2891 = vmatpush1.bf16.msra.mxu0 0
    %2892 = vmatprep.subr.bf16.mxu0 0
    %2893 = vmatpush1.bf16.msra.mxu0 0
    %2894 = vmatprep.subr.bf16.mxu0 0
    %2895 = vmatpush1.bf16.msra.mxu0 0
    %2896 = vmatprep.subr.bf16.mxu0 0
    %2897 = vmatpush1.bf16.msra.mxu0 0
    %2898 = vmatprep.subr.bf16.mxu0 0
    %2899 = vmatpush1.bf16.msra.mxu0 0
    %2900 = vmatprep.subr.bf16.mxu0 0
    %2901 = vmatpush1.bf16.msra.mxu0 0
    %2902 = vmatprep.subr.bf16.mxu0 0
    %2903 = vmatpush1.bf16.msra.mxu0 0
    %2904 = vmatprep.subr.bf16.mxu0 0
    %2905 = vmatpush1.bf16.msra.mxu0 0
    %2906 = vmatprep.subr.bf16.mxu0 0
    %2907 = vmatpush1.bf16.msra.mxu0 0
    %2908 = vmatprep.subr.bf16.mxu0 0
    %2909 = vmatpush1.bf16.msra.mxu0 0
    %2910 = vmatprep.subr.bf16.mxu0 0
    %2911 = vmatpush1.bf16.msra.mxu0 0
    %2912 = vmatprep.mubr.bf16.mxu0 0
    %2913 = vmatmul.mubr.bf16.gmra.mrb[0].mxu0 %v2837
    %v2914 = vpop.f32.mrb[0].mxu0
    %v2915 = vadd.f32 0.0, %v2914
    %v2916 = vpop.f32.mrb[0].mxu0
    %v2917 = vadd.f32 0.0, %v2916
    %v2918 = vpop.f32.mrb[0].mxu0
    %v2919 = vpop.f32.mrb[0].mxu0
    %2920 = vdwg.mxu0
    %2921 = vmatprep.subr.bf16.mxu0 %v1485
    %2922 = vmatpush1.bf16.msra.mxu0 %v1484
    %2923 = vmatprep.subr.bf16.mxu0 %v1489
    %2924 = vmatpush1.bf16.msra.mxu0 %v1488
    %2925 = vmatprep.subr.bf16.mxu0 0
    %2926 = vmatpush1.bf16.msra.mxu0 0
    %2927 = vmatprep.subr.bf16.mxu0 0
    %2928 = vmatpush1.bf16.msra.mxu0 0
    %2929 = vmatprep.subr.bf16.mxu0 0
    %2930 = vmatpush1.bf16.msra.mxu0 0
    %2931 = vmatprep.subr.bf16.mxu0 0
    %2932 = vmatpush1.bf16.msra.mxu0 0
    %2933 = vmatprep.subr.bf16.mxu0 0
    %2934 = vmatpush1.bf16.msra.mxu0 0
    %2935 = vmatprep.subr.bf16.mxu0 0
    %2936 = vmatpush1.bf16.msra.mxu0 0
    %2937 = vmatprep.subr.bf16.mxu0 0
    %2938 = vmatpush1.bf16.msra.mxu0 0
    %2939 = vmatprep.subr.bf16.mxu0 0
    %2940 = vmatpush1.bf16.msra.mxu0 0
    %2941 = vmatprep.subr.bf16.mxu0 0
    %2942 = vmatpush1.bf16.msra.mxu0 0
    %2943 = vmatprep.subr.bf16.mxu0 0
    %2944 = vmatpush1.bf16.msra.mxu0 0
    %2945 = vmatprep.subr.bf16.mxu0 0
    %2946 = vmatpush1.bf16.msra.mxu0 0
    %2947 = vmatprep.subr.bf16.mxu0 0
    %2948 = vmatpush1.bf16.msra.mxu0 0
    %2949 = vmatprep.subr.bf16.mxu0 0
    %2950 = vmatpush1.bf16.msra.mxu0 0
    %2951 = vmatprep.subr.bf16.mxu0 0
    %2952 = vmatpush1.bf16.msra.mxu0 0
    %2953 = vmatprep.mubr.bf16.mxu0 0
    %2954 = vmatmul.mubr.bf16.gmra.mrb[0].mxu0 %v2837
    %v2955 = vpop.f32.mrb[0].mxu0
    %v2956 = vadd.f32 0.0, %v2955
    %v2957 = vpop.f32.mrb[0].mxu0
    %v2958 = vadd.f32 0.0, %v2957
    %v2959 = vpop.f32.mrb[0].mxu0
    %v2960 = vpop.f32.mrb[0].mxu0
    %2961 = vdwg.mxu0
    %2962 = vmatprep.subr.bf16.mxu0 %v1487
    %2963 = vmatpush1.bf16.msra.mxu0 %v1486
    %2964 = vmatprep.subr.bf16.mxu0 %v1491
    %2965 = vmatpush1.bf16.msra.mxu0 %v1490
    %2966 = vmatprep.subr.bf16.mxu0 0
    %2967 = vmatpush1.bf16.msra.mxu0 0
    %2968 = vmatprep.subr.bf16.mxu0 0
    %2969 = vmatpush1.bf16.msra.mxu0 0
    %2970 = vmatprep.subr.bf16.mxu0 0
    %2971 = vmatpush1.bf16.msra.mxu0 0
    %2972 = vmatprep.subr.bf16.mxu0 0
    %2973 = vmatpush1.bf16.msra.mxu0 0
    %2974 = vmatprep.subr.bf16.mxu0 0
    %2975 = vmatpush1.bf16.msra.mxu0 0
    %2976 = vmatprep.subr.bf16.mxu0 0
    %2977 = vmatpush1.bf16.msra.mxu0 0
    %2978 = vmatprep.subr.bf16.mxu0 0
    %2979 = vmatpush1.bf16.msra.mxu0 0
    %2980 = vmatprep.subr.bf16.mxu0 0
    %2981 = vmatpush1.bf16.msra.mxu0 0
    %2982 = vmatprep.subr.bf16.mxu0 0
    %2983 = vmatpush1.bf16.msra.mxu0 0
    %2984 = vmatprep.subr.bf16.mxu0 0
    %2985 = vmatpush1.bf16.msra.mxu0 0
    %2986 = vmatprep.subr.bf16.mxu0 0
    %2987 = vmatpush1.bf16.msra.mxu0 0
    %2988 = vmatprep.subr.bf16.mxu0 0
    %2989 = vmatpush1.bf16.msra.mxu0 0
    %2990 = vmatprep.subr.bf16.mxu0 0
    %2991 = vmatpush1.bf16.msra.mxu0 0
    %2992 = vmatprep.subr.bf16.mxu0 0
    %2993 = vmatpush1.bf16.msra.mxu0 0
    %2994 = vmatprep.mubr.bf16.mxu0 0
    %2995 = vmatmul.mubr.bf16.gmra.mrb[0].mxu0 %v2837
    %v2996 = vpop.f32.mrb[0].mxu0
    %v2997 = vadd.f32 0.0, %v2996
    %v2998 = vpop.f32.mrb[0].mxu0
    %v2999 = vadd.f32 0.0, %v2998
    %v3000 = vpop.f32.mrb[0].mxu0
    %v3001 = vpop.f32.mrb[0].mxu0
    %3002 = vdwg.mxu0
    %v3003 = vpack.c.bf16 %v2874, %v2874
    %v3004 = vpack.c.bf16 %v2876, %v2876
    %v3005 = vpack.c.bf16 %v2915, %v2915
    %v3006 = vpack.c.bf16 %v2917, %v2917
    %v3007 = vpack.c.bf16 %v2956, %v2956
    %v3008 = vpack.c.bf16 %v2958, %v2958
    %v3009 = vpack.c.bf16 %v2997, %v2997
    %v3010 = vpack.c.bf16 %v2999, %v2999
    %v3019 = vunpack.c.l.b16 %v3003
    %v3020 = vunpack.c.l.b16 %v3004
    %v3021 = vunpack.c.l.b16 %v3005
    %v3022 = vunpack.c.l.b16 %v3006
    %v3023 = vunpack.c.l.b16 %v3007
    %v3024 = vunpack.c.l.b16 %v3008
    %v3025 = vunpack.c.l.b16 %v3009
    %v3026 = vunpack.c.l.b16 %v3010
    %s3027 = scalar_lea.vmem [#allocation3], 1024
    %v3028 = vld [vmem:[%s3027] sm:$0xff]
    %v3029 = vld [vmem:[%s3027 + $0x8] sm:$0xff]
    %v3030 = vld [vmem:[%s3027 + $0x10] sm:$0xff]
    %v3031 = vld [vmem:[%s3027 + $0x18] sm:$0xff]
    %v3032 = vld [vmem:[%s3027 + $0x20] sm:$0xff]
    %v3033 = vld [vmem:[%s3027 + $0x28] sm:$0xff]
    %v3034 = vld [vmem:[%s3027 + $0x30] sm:$0xff]
    %v3035 = vld [vmem:[%s3027 + $0x38] sm:$0xff]
    %v3036 = vld [vmem:[%s3027 + $0x40] sm:$0xff]
    %v3037 = vld [vmem:[%s3027 + $0x48] sm:$0xff]
    %v3038 = vld [vmem:[%s3027 + $0x50] sm:$0xff]
    %v3039 = vld [vmem:[%s3027 + $0x58] sm:$0xff]
    %v3040 = vld [vmem:[%s3027 + $0x60] sm:$0xff]
    %v3041 = vld [vmem:[%s3027 + $0x68] sm:$0xff]
    %v3042 = vld [vmem:[%s3027 + $0x70] sm:$0xff]
    %v3043 = vld [vmem:[%s3027 + $0x78] sm:$0xff]
    %v3044 = vld [vmem:[%s3027 + $0x80] sm:$0xff]
    %v3045 = vld [vmem:[%s3027 + $0x88] sm:$0xff]
    %v3046 = vld [vmem:[%s3027 + $0x90] sm:$0xff]
    %v3047 = vld [vmem:[%s3027 + $0x98] sm:$0xff]
    %v3048 = vld [vmem:[%s3027 + $0xa0] sm:$0xff]
    %v3049 = vld [vmem:[%s3027 + $0xa8] sm:$0xff]
    %v3050 = vld [vmem:[%s3027 + $0xb0] sm:$0xff]
    %v3051 = vld [vmem:[%s3027 + $0xb8] sm:$0xff]
    %v3052 = vld [vmem:[%s3027 + $0xc0] sm:$0xff]
    %v3053 = vld [vmem:[%s3027 + $0xc8] sm:$0xff]
    %v3054 = vld [vmem:[%s3027 + $0xd0] sm:$0xff]
    %v3055 = vld [vmem:[%s3027 + $0xd8] sm:$0xff]
    %v3056 = vld [vmem:[%s3027 + $0xe0] sm:$0xff]
    %v3057 = vld [vmem:[%s3027 + $0xe8] sm:$0xff]
    %v3058 = vld [vmem:[%s3027 + $0xf0] sm:$0xff]
    %v3059 = vld [vmem:[%s3027 + $0xf8] sm:$0xff]
    %v3060 = vld [vmem:[%s3027 + $0x100] sm:$0xff]
    %v3061 = vld [vmem:[%s3027 + $0x108] sm:$0xff]
    %v3062 = vld [vmem:[%s3027 + $0x110] sm:$0xff]
    %v3063 = vld [vmem:[%s3027 + $0x118] sm:$0xff]
    %v3064 = vld [vmem:[%s3027 + $0x120] sm:$0xff]
    %v3065 = vld [vmem:[%s3027 + $0x128] sm:$0xff]
    %v3066 = vld [vmem:[%s3027 + $0x130] sm:$0xff]
    %v3067 = vld [vmem:[%s3027 + $0x138] sm:$0xff]
    %v3068 = vld [vmem:[%s3027 + $0x140] sm:$0xff]
    %v3069 = vld [vmem:[%s3027 + $0x148] sm:$0xff]
    %v3070 = vld [vmem:[%s3027 + $0x150] sm:$0xff]
    %v3071 = vld [vmem:[%s3027 + $0x158] sm:$0xff]
    %v3072 = vld [vmem:[%s3027 + $0x160] sm:$0xff]
    %v3073 = vld [vmem:[%s3027 + $0x168] sm:$0xff]
    %v3074 = vld [vmem:[%s3027 + $0x170] sm:$0xff]
    %v3075 = vld [vmem:[%s3027 + $0x178] sm:$0xff]
    %v3076 = vld [vmem:[%s3027 + $0x180] sm:$0xff]
    %v3077 = vld [vmem:[%s3027 + $0x188] sm:$0xff]
    %v3078 = vld [vmem:[%s3027 + $0x190] sm:$0xff]
    %v3079 = vld [vmem:[%s3027 + $0x198] sm:$0xff]
    %v3080 = vld [vmem:[%s3027 + $0x1a0] sm:$0xff]
    %v3081 = vld [vmem:[%s3027 + $0x1a8] sm:$0xff]
    %v3082 = vld [vmem:[%s3027 + $0x1b0] sm:$0xff]
    %v3083 = vld [vmem:[%s3027 + $0x1b8] sm:$0xff]
    %v3084 = vld [vmem:[%s3027 + $0x1c0] sm:$0xff]
    %v3085 = vld [vmem:[%s3027 + $0x1c8] sm:$0xff]
    %v3086 = vld [vmem:[%s3027 + $0x1d0] sm:$0xff]
    %v3087 = vld [vmem:[%s3027 + $0x1d8] sm:$0xff]
    %v3088 = vld [vmem:[%s3027 + $0x1e0] sm:$0xff]
    %v3089 = vld [vmem:[%s3027 + $0x1e8] sm:$0xff]
    %v3090 = vld [vmem:[%s3027 + $0x1f0] sm:$0xff]
    %v3091 = vld [vmem:[%s3027 + $0x1f8] sm:$0xff]
    %v3092 = vpack.c.b16 %v3023, %v3019
    %v3093 = vpack.c.b16 %v3024, %v3020
    %v3094 = vpack.c.b16 %v3025, %v3021
    %v3095 = vpack.c.b16 %v3026, %v3022
    %v3164 = vunpack.c.l.b16 %v3028
    %v3165 = vunpack.c.h.b16 %v3028
    %v3166 = vunpack.c.l.b16 %v3029
    %v3167 = vunpack.c.h.b16 %v3029
    %v3168 = vunpack.c.l.b16 %v3030
    %v3169 = vunpack.c.h.b16 %v3030
    %v3170 = vunpack.c.l.b16 %v3031
    %v3171 = vunpack.c.h.b16 %v3031
    %v3172 = vunpack.c.l.b16 %v3032
    %v3173 = vunpack.c.h.b16 %v3032
    %v3174 = vunpack.c.l.b16 %v3033
    %v3175 = vunpack.c.h.b16 %v3033
    %v3176 = vunpack.c.l.b16 %v3034
    %v3177 = vunpack.c.h.b16 %v3034
    %v3178 = vunpack.c.l.b16 %v3035
    %v3179 = vunpack.c.h.b16 %v3035
    %v3180 = vunpack.c.l.b16 %v3036
    %v3181 = vunpack.c.h.b16 %v3036
    %v3182 = vunpack.c.l.b16 %v3037
    %v3183 = vunpack.c.h.b16 %v3037
    %v3184 = vunpack.c.l.b16 %v3038
    %v3185 = vunpack.c.h.b16 %v3038
    %v3186 = vunpack.c.l.b16 %v3039
    %v3187 = vunpack.c.h.b16 %v3039
    %v3188 = vunpack.c.l.b16 %v3040
    %v3189 = vunpack.c.h.b16 %v3040
    %v3190 = vunpack.c.l.b16 %v3041
    %v3191 = vunpack.c.h.b16 %v3041
    %v3192 = vunpack.c.l.b16 %v3042
    %v3193 = vunpack.c.h.b16 %v3042
    %v3194 = vunpack.c.l.b16 %v3043
    %v3195 = vunpack.c.h.b16 %v3043
    %v3196 = vunpack.c.l.b16 %v3044
    %v3197 = vunpack.c.h.b16 %v3044
    %v3198 = vunpack.c.l.b16 %v3045
    %v3199 = vunpack.c.h.b16 %v3045
    %v3200 = vunpack.c.l.b16 %v3046
    %v3201 = vunpack.c.h.b16 %v3046
    %v3202 = vunpack.c.l.b16 %v3047
    %v3203 = vunpack.c.h.b16 %v3047
    %v3204 = vunpack.c.l.b16 %v3048
    %v3205 = vunpack.c.h.b16 %v3048
    %v3206 = vunpack.c.l.b16 %v3049
    %v3207 = vunpack.c.h.b16 %v3049
    %v3208 = vunpack.c.l.b16 %v3050
    %v3209 = vunpack.c.h.b16 %v3050
    %v3210 = vunpack.c.l.b16 %v3051
    %v3211 = vunpack.c.h.b16 %v3051
    %v3212 = vunpack.c.l.b16 %v3052
    %v3213 = vunpack.c.h.b16 %v3052
    %v3214 = vunpack.c.l.b16 %v3053
    %v3215 = vunpack.c.h.b16 %v3053
    %v3216 = vunpack.c.l.b16 %v3054
    %v3217 = vunpack.c.h.b16 %v3054
    %v3218 = vunpack.c.l.b16 %v3055
    %v3219 = vunpack.c.h.b16 %v3055
    %v3220 = vunpack.c.l.b16 %v3056
    %v3221 = vunpack.c.h.b16 %v3056
    %v3222 = vunpack.c.l.b16 %v3057
    %v3223 = vunpack.c.h.b16 %v3057
    %v3224 = vunpack.c.l.b16 %v3058
    %v3225 = vunpack.c.h.b16 %v3058
    %v3226 = vunpack.c.l.b16 %v3059
    %v3227 = vunpack.c.h.b16 %v3059
    %v3228 = vunpack.c.l.b16 %v3060
    %v3229 = vunpack.c.h.b16 %v3060
    %v3230 = vunpack.c.l.b16 %v3061
    %v3231 = vunpack.c.h.b16 %v3061
    %v3232 = vunpack.c.l.b16 %v3062
    %v3233 = vunpack.c.h.b16 %v3062
    %v3234 = vunpack.c.l.b16 %v3063
    %v3235 = vunpack.c.h.b16 %v3063
    %v3236 = vunpack.c.l.b16 %v3064
    %v3237 = vunpack.c.h.b16 %v3064
    %v3238 = vunpack.c.l.b16 %v3065
    %v3239 = vunpack.c.h.b16 %v3065
    %v3240 = vunpack.c.l.b16 %v3066
    %v3241 = vunpack.c.h.b16 %v3066
    %v3242 = vunpack.c.l.b16 %v3067
    %v3243 = vunpack.c.h.b16 %v3067
    %v3244 = vunpack.c.l.b16 %v3068
    %v3245 = vunpack.c.h.b16 %v3068
    %v3246 = vunpack.c.l.b16 %v3069
    %v3247 = vunpack.c.h.b16 %v3069
    %v3248 = vunpack.c.l.b16 %v3070
    %v3249 = vunpack.c.h.b16 %v3070
    %v3250 = vunpack.c.l.b16 %v3071
    %v3251 = vunpack.c.h.b16 %v3071
    %v3252 = vunpack.c.l.b16 %v3072
    %v3253 = vunpack.c.h.b16 %v3072
    %v3254 = vunpack.c.l.b16 %v3073
    %v3255 = vunpack.c.h.b16 %v3073
    %v3256 = vunpack.c.l.b16 %v3074
    %v3257 = vunpack.c.h.b16 %v3074
    %v3258 = vunpack.c.l.b16 %v3075
    %v3259 = vunpack.c.h.b16 %v3075
    %v3260 = vunpack.c.l.b16 %v3076
    %v3261 = vunpack.c.h.b16 %v3076
    %v3262 = vunpack.c.l.b16 %v3077
    %v3263 = vunpack.c.h.b16 %v3077
    %v3264 = vunpack.c.l.b16 %v3078
    %v3265 = vunpack.c.h.b16 %v3078
    %v3266 = vunpack.c.l.b16 %v3079
    %v3267 = vunpack.c.h.b16 %v3079
    %v3268 = vunpack.c.l.b16 %v3080
    %v3269 = vunpack.c.h.b16 %v3080
    %v3270 = vunpack.c.l.b16 %v3081
    %v3271 = vunpack.c.h.b16 %v3081
    %v3272 = vunpack.c.l.b16 %v3082
    %v3273 = vunpack.c.h.b16 %v3082
    %v3274 = vunpack.c.l.b16 %v3083
    %v3275 = vunpack.c.h.b16 %v3083
    %v3276 = vunpack.c.l.b16 %v3084
    %v3277 = vunpack.c.h.b16 %v3084
    %v3278 = vunpack.c.l.b16 %v3085
    %v3279 = vunpack.c.h.b16 %v3085
    %v3280 = vunpack.c.l.b16 %v3086
    %v3281 = vunpack.c.h.b16 %v3086
    %v3282 = vunpack.c.l.b16 %v3087
    %v3283 = vunpack.c.h.b16 %v3087
    %v3284 = vunpack.c.l.b16 %v3088
    %v3285 = vunpack.c.h.b16 %v3088
    %v3286 = vunpack.c.l.b16 %v3089
    %v3287 = vunpack.c.h.b16 %v3089
    %v3288 = vunpack.c.l.b16 %v3090
    %v3289 = vunpack.c.h.b16 %v3090
    %v3290 = vunpack.c.l.b16 %v3091
    %v3291 = vunpack.c.h.b16 %v3091
    %v3292 = vpack.c.b16 %v3166, %v3164
    %v3293 = vpack.c.b16 %v3167, %v3165
    %v3294 = vpack.c.b16 %v3170, %v3168
    %v3295 = vpack.c.b16 %v3171, %v3169
    %v3296 = vpack.c.b16 %v3174, %v3172
    %v3297 = vpack.c.b16 %v3175, %v3173
    %v3298 = vpack.c.b16 %v3178, %v3176
    %v3299 = vpack.c.b16 %v3179, %v3177
    %v3300 = vpack.c.b16 %v3182, %v3180
    %v3301 = vpack.c.b16 %v3183, %v3181
    %v3302 = vpack.c.b16 %v3186, %v3184
    %v3303 = vpack.c.b16 %v3187, %v3185
    %v3304 = vpack.c.b16 %v3190, %v3188
    %v3305 = vpack.c.b16 %v3191, %v3189
    %v3306 = vpack.c.b16 %v3194, %v3192
    %v3307 = vpack.c.b16 %v3195, %v3193
    %v3308 = vpack.c.b16 %v3198, %v3196
    %v3309 = vpack.c.b16 %v3199, %v3197
    %v3310 = vpack.c.b16 %v3202, %v3200
    %v3311 = vpack.c.b16 %v3203, %v3201
    %v3312 = vpack.c.b16 %v3206, %v3204
    %v3313 = vpack.c.b16 %v3207, %v3205
    %v3314 = vpack.c.b16 %v3210, %v3208
    %v3315 = vpack.c.b16 %v3211, %v3209
    %v3316 = vpack.c.b16 %v3214, %v3212
    %v3317 = vpack.c.b16 %v3215, %v3213
    %v3318 = vpack.c.b16 %v3218, %v3216
    %v3319 = vpack.c.b16 %v3219, %v3217
    %v3320 = vpack.c.b16 %v3222, %v3220
    %v3321 = vpack.c.b16 %v3223, %v3221
    %v3322 = vpack.c.b16 %v3226, %v3224
    %v3323 = vpack.c.b16 %v3227, %v3225
    %v3324 = vpack.c.b16 %v3230, %v3228
    %v3325 = vpack.c.b16 %v3231, %v3229
    %v3326 = vpack.c.b16 %v3234, %v3232
    %v3327 = vpack.c.b16 %v3235, %v3233
    %v3328 = vpack.c.b16 %v3238, %v3236
    %v3329 = vpack.c.b16 %v3239, %v3237
    %v3330 = vpack.c.b16 %v3242, %v3240
    %v3331 = vpack.c.b16 %v3243, %v3241
    %v3332 = vpack.c.b16 %v3246, %v3244
    %v3333 = vpack.c.b16 %v3247, %v3245
    %v3334 = vpack.c.b16 %v3250, %v3248
    %v3335 = vpack.c.b16 %v3251, %v3249
    %v3336 = vpack.c.b16 %v3254, %v3252
    %v3337 = vpack.c.b16 %v3255, %v3253
    %v3338 = vpack.c.b16 %v3258, %v3256
    %v3339 = vpack.c.b16 %v3259, %v3257
    %v3340 = vpack.c.b16 %v3262, %v3260
    %v3341 = vpack.c.b16 %v3263, %v3261
    %v3342 = vpack.c.b16 %v3266, %v3264
    %v3343 = vpack.c.b16 %v3267, %v3265
    %v3344 = vpack.c.b16 %v3270, %v3268
    %v3345 = vpack.c.b16 %v3271, %v3269
    %v3346 = vpack.c.b16 %v3274, %v3272
    %v3347 = vpack.c.b16 %v3275, %v3273
    %v3348 = vpack.c.b16 %v3278, %v3276
    %v3349 = vpack.c.b16 %v3279, %v3277
    %v3350 = vpack.c.b16 %v3282, %v3280
    %v3351 = vpack.c.b16 %v3283, %v3281
    %v3352 = vpack.c.b16 %v3286, %v3284
    %v3353 = vpack.c.b16 %v3287, %v3285
    %v3354 = vpack.c.b16 %v3290, %v3288
    %v3355 = vpack.c.b16 %v3291, %v3289
    %3420 = vmatprep.subr.bf16.mxu0 %v3293
    %3421 = vmatpush1.bf16.msra.mxu0 %v3292
    %3422 = vmatprep.subr.bf16.mxu0 %v3295
    %3423 = vmatpush1.bf16.msra.mxu0 %v3294
    %3424 = vmatprep.subr.bf16.mxu0 %v3297
    %3425 = vmatpush1.bf16.msra.mxu0 %v3296
    %3426 = vmatprep.subr.bf16.mxu0 %v3299
    %3427 = vmatpush1.bf16.msra.mxu0 %v3298
    %3428 = vmatprep.subr.bf16.mxu0 %v3301
    %3429 = vmatpush1.bf16.msra.mxu0 %v3300
    %3430 = vmatprep.subr.bf16.mxu0 %v3303
    %3431 = vmatpush1.bf16.msra.mxu0 %v3302
    %3432 = vmatprep.subr.bf16.mxu0 %v3305
    %3433 = vmatpush1.bf16.msra.mxu0 %v3304
    %3434 = vmatprep.subr.bf16.mxu0 %v3307
    %3435 = vmatpush1.bf16.msra.mxu0 %v3306
    %3436 = vmatprep.subr.bf16.mxu0 %v3309
    %3437 = vmatpush1.bf16.msra.mxu0 %v3308
    %3438 = vmatprep.subr.bf16.mxu0 %v3311
    %3439 = vmatpush1.bf16.msra.mxu0 %v3310
    %3440 = vmatprep.subr.bf16.mxu0 %v3313
    %3441 = vmatpush1.bf16.msra.mxu0 %v3312
    %3442 = vmatprep.subr.bf16.mxu0 %v3315
    %3443 = vmatpush1.bf16.msra.mxu0 %v3314
    %3444 = vmatprep.subr.bf16.mxu0 %v3317
    %3445 = vmatpush1.bf16.msra.mxu0 %v3316
    %3446 = vmatprep.subr.bf16.mxu0 %v3319
    %3447 = vmatpush1.bf16.msra.mxu0 %v3318
    %3448 = vmatprep.subr.bf16.mxu0 %v3321
    %3449 = vmatpush1.bf16.msra.mxu0 %v3320
    %3450 = vmatprep.subr.bf16.mxu0 %v3323
    %3451 = vmatpush1.bf16.msra.mxu0 %v3322
    %3452 = vmatprep.mubr.bf16.mxu0 %v3093
    %3453 = vmatmul.mubr.bf16.gmra.mrb[0].mxu0 %v3092
    %v3454 = vpop.f32.mrb[0].mxu0
    %v3455 = vadd.f32 0.0, %v3454
    %v3456 = vpop.f32.mrb[0].mxu0
    %v3457 = vadd.f32 0.0, %v3456
    %v3458 = vpop.f32.mrb[0].mxu0
    %v3459 = vadd.f32 0.0, %v3458
    %v3460 = vpop.f32.mrb[0].mxu0
    %v3461 = vadd.f32 0.0, %v3460
    %3462 = vdwg.mxu0
    %3463 = vmatprep.subr.bf16.mxu0 %v3325
    %3464 = vmatpush1.bf16.msra.mxu0 %v3324
    %3465 = vmatprep.subr.bf16.mxu0 %v3327
    %3466 = vmatpush1.bf16.msra.mxu0 %v3326
    %3467 = vmatprep.subr.bf16.mxu0 %v3329
    %3468 = vmatpush1.bf16.msra.mxu0 %v3328
    %3469 = vmatprep.subr.bf16.mxu0 %v3331
    %3470 = vmatpush1.bf16.msra.mxu0 %v3330
    %3471 = vmatprep.subr.bf16.mxu0 %v3333
    %3472 = vmatpush1.bf16.msra.mxu0 %v3332
    %3473 = vmatprep.subr.bf16.mxu0 %v3335
    %3474 = vmatpush1.bf16.msra.mxu0 %v3334
    %3475 = vmatprep.subr.bf16.mxu0 %v3337
    %3476 = vmatpush1.bf16.msra.mxu0 %v3336
    %3477 = vmatprep.subr.bf16.mxu0 %v3339
    %3478 = vmatpush1.bf16.msra.mxu0 %v3338
    %3479 = vmatprep.subr.bf16.mxu0 %v3341
    %3480 = vmatpush1.bf16.msra.mxu0 %v3340
    %3481 = vmatprep.subr.bf16.mxu0 %v3343
    %3482 = vmatpush1.bf16.msra.mxu0 %v3342
    %3483 = vmatprep.subr.bf16.mxu0 %v3345
    %3484 = vmatpush1.bf16.msra.mxu0 %v3344
    %3485 = vmatprep.subr.bf16.mxu0 %v3347
    %3486 = vmatpush1.bf16.msra.mxu0 %v3346
    %3487 = vmatprep.subr.bf16.mxu0 %v3349
    %3488 = vmatpush1.bf16.msra.mxu0 %v3348
    %3489 = vmatprep.subr.bf16.mxu0 %v3351
    %3490 = vmatpush1.bf16.msra.mxu0 %v3350
    %3491 = vmatprep.subr.bf16.mxu0 %v3353
    %3492 = vmatpush1.bf16.msra.mxu0 %v3352
    %3493 = vmatprep.subr.bf16.mxu0 %v3355
    %3494 = vmatpush1.bf16.msra.mxu0 %v3354
    %3495 = vmatprep.mubr.bf16.mxu0 %v3095
    %3496 = vmatmul.mubr.bf16.gmra.mrb[0].mxu0 %v3094
    %v3497 = vpop.f32.mrb[0].mxu0
    %v3498 = vadd.f32 %v3455, %v3497
    %v3499 = vpop.f32.mrb[0].mxu0
    %v3500 = vadd.f32 %v3457, %v3499
    %v3501 = vpop.f32.mrb[0].mxu0
    %v3502 = vadd.f32 %v3459, %v3501
    %v3503 = vpop.f32.mrb[0].mxu0
    %v3504 = vadd.f32 %v3461, %v3503
    %3505 = vdwg.mxu0
    %v3506 = vadd.f32 %v2826, %v3498
    %v3507 = vadd.f32 %v2828, %v3500
    %v3508 = vadd.f32 %v2830, %v3502
    %v3509 = vadd.f32 %v2832, %v3504
    %v3510 = vld [vmem:[%s6] sm:$0x3]
    %v3512 = vlaneseq
    %v3513 = vshrl.u32 %v3512, 7
    %v3514 = vsub.s32 0, %v3513
    %v3515 = vrot.slane %v3510, %v3514
    %v3516 = vlaneseq
    %v3517 = vshrl.u32 %v3516, 7
    %v3518 = vsub.s32 1, %v3517
    %v3519 = vrot.slane %v3510, %v3518
    %v3522 = vadd.f32 %v3506, %v3515
    %v3523 = vadd.f32 %v3507, %v3519
    %v3524 = vadd.f32 %v3508, %v3515
    %v3525 = vadd.f32 %v3509, %v3519
    %v3526 = vmax.f32 %v3522, 0.0
    %v3527 = vmax.f32 %v3523, 0.0
    %v3528 = vmax.f32 %v3524, 0.0
    %v3529 = vmax.f32 %v3525, 0.0
    %v3530 = vpack.c.bf16 %v3528, %v3526
    %v3531 = vpack.c.bf16 %v3529, %v3527
    %v3534 = vunpack.c.l.b16 %v3530
    %v3535 = vunpack.c.l.b16 %v3531
    %v3536 = vunpack.c.h.b16 %v3530
    %v3537 = vunpack.c.h.b16 %v3531
    %v3538 = vpack.c.b16 %v3535, %v3534
    %v3539 = vpack.c.b16 %v3537, %v3536
    %3542 = vst [vmem:[#allocation2] sm:$0xff] %v3538
    %3543 = vst [vmem:[#allocation2 + $0x8] sm:$0xff] %v3539
    %v3544 = vld [vmem:[#allocation2] sm:$0x11]
    %v3545 = vld [vmem:[#allocation2 + $0x8] sm:$0x11]
    %v3546 = vld [vmem:[#allocation6] sm:$0xf]
    %v3547 = vld [vmem:[#allocation6 + $0x4] sm:$0xf]
    %v3548 = vld [vmem:[#allocation6 + $0x8] sm:$0xf]
    %v3549 = vld [vmem:[#allocation6 + $0xc] sm:$0xf]
    %v3550 = vld [vmem:[#allocation6 + $0x10] sm:$0xf]
    %v3551 = vld [vmem:[#allocation6 + $0x14] sm:$0xf]
    %v3552 = vld [vmem:[#allocation6 + $0x18] sm:$0xf]
    %v3553 = vld [vmem:[#allocation6 + $0x1c] sm:$0xf]
    %v3554 = vld [vmem:[#allocation6 + $0x20] sm:$0xf]
    %v3555 = vld [vmem:[#allocation6 + $0x24] sm:$0xf]
    %v3556 = vld [vmem:[#allocation6 + $0x28] sm:$0xf]
    %v3557 = vld [vmem:[#allocation6 + $0x2c] sm:$0xf]
    %v3558 = vld [vmem:[#allocation6 + $0x30] sm:$0xf]
    %v3559 = vld [vmem:[#allocation6 + $0x34] sm:$0xf]
    %v3560 = vld [vmem:[#allocation6 + $0x38] sm:$0xf]
    %v3561 = vld [vmem:[#allocation6 + $0x3c] sm:$0xf]
    %v3562 = vld [vmem:[#allocation6 + $0x40] sm:$0xf]
    %v3563 = vld [vmem:[#allocation6 + $0x44] sm:$0xf]
    %v3564 = vld [vmem:[#allocation6 + $0x48] sm:$0xf]
    %v3565 = vld [vmem:[#allocation6 + $0x4c] sm:$0xf]
    %v3566 = vld [vmem:[#allocation6 + $0x50] sm:$0xf]
    %v3567 = vld [vmem:[#allocation6 + $0x54] sm:$0xf]
    %v3568 = vld [vmem:[#allocation6 + $0x58] sm:$0xf]
    %v3569 = vld [vmem:[#allocation6 + $0x5c] sm:$0xf]
    %v3570 = vld [vmem:[#allocation6 + $0x60] sm:$0xf]
    %v3571 = vld [vmem:[#allocation6 + $0x64] sm:$0xf]
    %v3572 = vld [vmem:[#allocation6 + $0x68] sm:$0xf]
    %v3573 = vld [vmem:[#allocation6 + $0x6c] sm:$0xf]
    %v3574 = vld [vmem:[#allocation6 + $0x70] sm:$0xf]
    %v3575 = vld [vmem:[#allocation6 + $0x74] sm:$0xf]
    %v3576 = vld [vmem:[#allocation6 + $0x78] sm:$0xf]
    %v3577 = vld [vmem:[#allocation6 + $0x7c] sm:$0xf]
    %s3578 = scalar_lea.vmem [#allocation6], 128
    %v3579 = vld [vmem:[%s3578] sm:$0xf]
    %v3580 = vld [vmem:[%s3578 + $0x4] sm:$0xf]
    %v3581 = vld [vmem:[%s3578 + $0x8] sm:$0xf]
    %v3582 = vld [vmem:[%s3578 + $0xc] sm:$0xf]
    %v3583 = vld [vmem:[%s3578 + $0x10] sm:$0xf]
    %v3584 = vld [vmem:[%s3578 + $0x14] sm:$0xf]
    %v3585 = vld [vmem:[%s3578 + $0x18] sm:$0xf]
    %v3586 = vld [vmem:[%s3578 + $0x1c] sm:$0xf]
    %v3587 = vld [vmem:[%s3578 + $0x20] sm:$0xf]
    %v3588 = vld [vmem:[%s3578 + $0x24] sm:$0xf]
    %v3589 = vld [vmem:[%s3578 + $0x28] sm:$0xf]
    %v3590 = vld [vmem:[%s3578 + $0x2c] sm:$0xf]
    %v3591 = vld [vmem:[%s3578 + $0x30] sm:$0xf]
    %v3592 = vld [vmem:[%s3578 + $0x34] sm:$0xf]
    %v3593 = vld [vmem:[%s3578 + $0x38] sm:$0xf]
    %v3594 = vld [vmem:[%s3578 + $0x3c] sm:$0xf]
    %v3595 = vld [vmem:[%s3578 + $0x40] sm:$0xf]
    %v3596 = vld [vmem:[%s3578 + $0x44] sm:$0xf]
    %v3597 = vld [vmem:[%s3578 + $0x48] sm:$0xf]
    %v3598 = vld [vmem:[%s3578 + $0x4c] sm:$0xf]
    %v3599 = vld [vmem:[%s3578 + $0x50] sm:$0xf]
    %v3600 = vld [vmem:[%s3578 + $0x54] sm:$0xf]
    %v3601 = vld [vmem:[%s3578 + $0x58] sm:$0xf]
    %v3602 = vld [vmem:[%s3578 + $0x5c] sm:$0xf]
    %v3603 = vld [vmem:[%s3578 + $0x60] sm:$0xf]
    %v3604 = vld [vmem:[%s3578 + $0x64] sm:$0xf]
    %v3605 = vld [vmem:[%s3578 + $0x68] sm:$0xf]
    %v3606 = vld [vmem:[%s3578 + $0x6c] sm:$0xf]
    %v3607 = vld [vmem:[%s3578 + $0x70] sm:$0xf]
    %v3608 = vld [vmem:[%s3578 + $0x74] sm:$0xf]
    %v3609 = vld [vmem:[%s3578 + $0x78] sm:$0xf]
    %v3610 = vld [vmem:[%s3578 + $0x7c] sm:$0xf]
    %v3613 = vunpack.c.l.b16 %v3544
    %v3614 = vunpack.c.h.b16 %v3544
    %v3615 = vunpack.c.l.b16 %v3545
    %v3616 = vunpack.c.h.b16 %v3545
    %v3617 = vpack.c.b16 %v3613, %v3613
    %v3618 = vpack.c.b16 %v3614, %v3614
    %v3619 = vpack.c.b16 %v3615, %v3615
    %v3620 = vpack.c.b16 %v3616, %v3616
    %v3621 = vunpack.c.l.b16 %v3617
    %v3622 = vunpack.c.l.b16 %v3618
    %v3623 = vunpack.c.l.b16 %v3619
    %v3624 = vunpack.c.l.b16 %v3620
    %v3625 = vrot.slane %v3621, 1
    %vm3626 = vcmask 1041409
    %v3627 = vsel %vm3626, %v3623, %v3625
    %v3628 = vrot.slane %v3622, 1
    %v3629 = vsel %vm3626, %v3624, %v3628
    %v3630 = vpack.c.b16 %v3627, %v3627
    %v3631 = vpack.c.b16 %v3629, %v3629
    %v3666 = vunpack.c.l.b16 %v3579
    %v3667 = vunpack.c.l.b16 %v3580
    %v3668 = vunpack.c.l.b16 %v3581
    %v3669 = vunpack.c.l.b16 %v3582
    %v3670 = vunpack.c.l.b16 %v3583
    %v3671 = vunpack.c.l.b16 %v3584
    %v3672 = vunpack.c.l.b16 %v3585
    %v3673 = vunpack.c.l.b16 %v3586
    %v3674 = vunpack.c.l.b16 %v3587
    %v3675 = vunpack.c.l.b16 %v3588
    %v3676 = vunpack.c.l.b16 %v3589
    %v3677 = vunpack.c.l.b16 %v3590
    %v3678 = vunpack.c.l.b16 %v3591
    %v3679 = vunpack.c.l.b16 %v3592
    %v3680 = vunpack.c.l.b16 %v3593
    %v3681 = vunpack.c.l.b16 %v3594
    %v3682 = vunpack.c.l.b16 %v3595
    %v3683 = vunpack.c.l.b16 %v3596
    %v3684 = vunpack.c.l.b16 %v3597
    %v3685 = vunpack.c.l.b16 %v3598
    %v3686 = vunpack.c.l.b16 %v3599
    %v3687 = vunpack.c.l.b16 %v3600
    %v3688 = vunpack.c.l.b16 %v3601
    %v3689 = vunpack.c.l.b16 %v3602
    %v3690 = vunpack.c.l.b16 %v3603
    %v3691 = vunpack.c.l.b16 %v3604
    %v3692 = vunpack.c.l.b16 %v3605
    %v3693 = vunpack.c.l.b16 %v3606
    %v3694 = vunpack.c.l.b16 %v3607
    %v3695 = vunpack.c.l.b16 %v3608
    %v3696 = vunpack.c.l.b16 %v3609
    %v3697 = vunpack.c.l.b16 %v3610
    %v3698 = vpack.c.b16 %v3667, %v3666
    %v3699 = vpack.c.b16 %v3669, %v3668
    %v3700 = vpack.c.b16 %v3671, %v3670
    %v3701 = vpack.c.b16 %v3673, %v3672
    %v3702 = vpack.c.b16 %v3675, %v3674
    %v3703 = vpack.c.b16 %v3677, %v3676
    %v3704 = vpack.c.b16 %v3679, %v3678
    %v3705 = vpack.c.b16 %v3681, %v3680
    %v3706 = vpack.c.b16 %v3683, %v3682
    %v3707 = vpack.c.b16 %v3685, %v3684
    %v3708 = vpack.c.b16 %v3687, %v3686
    %v3709 = vpack.c.b16 %v3689, %v3688
    %v3710 = vpack.c.b16 %v3691, %v3690
    %v3711 = vpack.c.b16 %v3693, %v3692
    %v3712 = vpack.c.b16 %v3695, %v3694
    %v3713 = vpack.c.b16 %v3697, %v3696
    %3730 = vmatprep.subr.bf16.mxu0 0
    %3731 = vmatpush1.bf16.msra.mxu0 %v3698
    %3732 = vmatprep.subr.bf16.mxu0 0
    %3733 = vmatpush1.bf16.msra.mxu0 %v3699
    %3734 = vmatprep.subr.bf16.mxu0 0
    %3735 = vmatpush1.bf16.msra.mxu0 %v3700
    %3736 = vmatprep.subr.bf16.mxu0 0
    %3737 = vmatpush1.bf16.msra.mxu0 %v3701
    %3738 = vmatprep.subr.bf16.mxu0 0
    %3739 = vmatpush1.bf16.msra.mxu0 %v3702
    %3740 = vmatprep.subr.bf16.mxu0 0
    %3741 = vmatpush1.bf16.msra.mxu0 %v3703
    %3742 = vmatprep.subr.bf16.mxu0 0
    %3743 = vmatpush1.bf16.msra.mxu0 %v3704
    %3744 = vmatprep.subr.bf16.mxu0 0
    %3745 = vmatpush1.bf16.msra.mxu0 %v3705
    %3746 = vmatprep.subr.bf16.mxu0 0
    %3747 = vmatpush1.bf16.msra.mxu0 %v3706
    %3748 = vmatprep.subr.bf16.mxu0 0
    %3749 = vmatpush1.bf16.msra.mxu0 %v3707
    %3750 = vmatprep.subr.bf16.mxu0 0
    %3751 = vmatpush1.bf16.msra.mxu0 %v3708
    %3752 = vmatprep.subr.bf16.mxu0 0
    %3753 = vmatpush1.bf16.msra.mxu0 %v3709
    %3754 = vmatprep.subr.bf16.mxu0 0
    %3755 = vmatpush1.bf16.msra.mxu0 %v3710
    %3756 = vmatprep.subr.bf16.mxu0 0
    %3757 = vmatpush1.bf16.msra.mxu0 %v3711
    %3758 = vmatprep.subr.bf16.mxu0 0
    %3759 = vmatpush1.bf16.msra.mxu0 %v3712
    %3760 = vmatprep.subr.bf16.mxu0 0
    %3761 = vmatpush1.bf16.msra.mxu0 %v3713
    %3762 = vmatprep.mubr.bf16.mxu0 %v3631
    %3763 = vmatmul.mubr.bf16.gmra.mrb[0].mxu0 %v3630
    %v3764 = vpop.f32.mrb[0].mxu0
    %v3765 = vadd.f32 0.0, %v3764
    %v3766 = vpop.f32.mrb[0].mxu0
    %v3767 = vpop.f32.mrb[0].mxu0
    %v3768 = vpop.f32.mrb[0].mxu0
    %3769 = vdwg.mxu0
    %v3770 = vrot.slane %v3623, 7
    %v3771 = vsel %vm3626, %v3770, %v3621
    %v3772 = vrot.slane %v3624, 7
    %v3773 = vsel %vm3626, %v3772, %v3622
    %v3774 = vpack.c.b16 %v3771, %v3771
    %v3775 = vpack.c.b16 %v3773, %v3773
    %v3810 = vunpack.c.l.b16 %v3546
    %v3811 = vunpack.c.l.b16 %v3547
    %v3812 = vunpack.c.l.b16 %v3548
    %v3813 = vunpack.c.l.b16 %v3549
    %v3814 = vunpack.c.l.b16 %v3550
    %v3815 = vunpack.c.l.b16 %v3551
    %v3816 = vunpack.c.l.b16 %v3552
    %v3817 = vunpack.c.l.b16 %v3553
    %v3818 = vunpack.c.l.b16 %v3554
    %v3819 = vunpack.c.l.b16 %v3555
    %v3820 = vunpack.c.l.b16 %v3556
    %v3821 = vunpack.c.l.b16 %v3557
    %v3822 = vunpack.c.l.b16 %v3558
    %v3823 = vunpack.c.l.b16 %v3559
    %v3824 = vunpack.c.l.b16 %v3560
    %v3825 = vunpack.c.l.b16 %v3561
    %v3826 = vunpack.c.l.b16 %v3562
    %v3827 = vunpack.c.l.b16 %v3563
    %v3828 = vunpack.c.l.b16 %v3564
    %v3829 = vunpack.c.l.b16 %v3565
    %v3830 = vunpack.c.l.b16 %v3566
    %v3831 = vunpack.c.l.b16 %v3567
    %v3832 = vunpack.c.l.b16 %v3568
    %v3833 = vunpack.c.l.b16 %v3569
    %v3834 = vunpack.c.l.b16 %v3570
    %v3835 = vunpack.c.l.b16 %v3571
    %v3836 = vunpack.c.l.b16 %v3572
    %v3837 = vunpack.c.l.b16 %v3573
    %v3838 = vunpack.c.l.b16 %v3574
    %v3839 = vunpack.c.l.b16 %v3575
    %v3840 = vunpack.c.l.b16 %v3576
    %v3841 = vunpack.c.l.b16 %v3577
    %v3842 = vpack.c.b16 %v3811, %v3810
    %v3843 = vpack.c.b16 %v3813, %v3812
    %v3844 = vpack.c.b16 %v3815, %v3814
    %v3845 = vpack.c.b16 %v3817, %v3816
    %v3846 = vpack.c.b16 %v3819, %v3818
    %v3847 = vpack.c.b16 %v3821, %v3820
    %v3848 = vpack.c.b16 %v3823, %v3822
    %v3849 = vpack.c.b16 %v3825, %v3824
    %v3850 = vpack.c.b16 %v3827, %v3826
    %v3851 = vpack.c.b16 %v3829, %v3828
    %v3852 = vpack.c.b16 %v3831, %v3830
    %v3853 = vpack.c.b16 %v3833, %v3832
    %v3854 = vpack.c.b16 %v3835, %v3834
    %v3855 = vpack.c.b16 %v3837, %v3836
    %v3856 = vpack.c.b16 %v3839, %v3838
    %v3857 = vpack.c.b16 %v3841, %v3840
    %3874 = vmatprep.subr.bf16.mxu0 0
    %3875 = vmatpush1.bf16.msra.mxu0 %v3842
    %3876 = vmatprep.subr.bf16.mxu0 0
    %3877 = vmatpush1.bf16.msra.mxu0 %v3843
    %3878 = vmatprep.subr.bf16.mxu0 0
    %3879 = vmatpush1.bf16.msra.mxu0 %v3844
    %3880 = vmatprep.subr.bf16.mxu0 0
    %3881 = vmatpush1.bf16.msra.mxu0 %v3845
    %3882 = vmatprep.subr.bf16.mxu0 0
    %3883 = vmatpush1.bf16.msra.mxu0 %v3846
    %3884 = vmatprep.subr.bf16.mxu0 0
    %3885 = vmatpush1.bf16.msra.mxu0 %v3847
    %3886 = vmatprep.subr.bf16.mxu0 0
    %3887 = vmatpush1.bf16.msra.mxu0 %v3848
    %3888 = vmatprep.subr.bf16.mxu0 0
    %3889 = vmatpush1.bf16.msra.mxu0 %v3849
    %3890 = vmatprep.subr.bf16.mxu0 0
    %3891 = vmatpush1.bf16.msra.mxu0 %v3850
    %3892 = vmatprep.subr.bf16.mxu0 0
    %3893 = vmatpush1.bf16.msra.mxu0 %v3851
    %3894 = vmatprep.subr.bf16.mxu0 0
    %3895 = vmatpush1.bf16.msra.mxu0 %v3852
    %3896 = vmatprep.subr.bf16.mxu0 0
    %3897 = vmatpush1.bf16.msra.mxu0 %v3853
    %3898 = vmatprep.subr.bf16.mxu0 0
    %3899 = vmatpush1.bf16.msra.mxu0 %v3854
    %3900 = vmatprep.subr.bf16.mxu0 0
    %3901 = vmatpush1.bf16.msra.mxu0 %v3855
    %3902 = vmatprep.subr.bf16.mxu0 0
    %3903 = vmatpush1.bf16.msra.mxu0 %v3856
    %3904 = vmatprep.subr.bf16.mxu0 0
    %3905 = vmatpush1.bf16.msra.mxu0 %v3857
    %3906 = vmatprep.mubr.bf16.mxu0 %v3775
    %3907 = vmatmul.mubr.bf16.gmra.mrb[0].mxu0 %v3774
    %v3908 = vpop.f32.mrb[0].mxu0
    %v3909 = vadd.f32 %v3765, %v3908
    %v3910 = vpop.f32.mrb[0].mxu0
    %v3911 = vpop.f32.mrb[0].mxu0
    %v3912 = vpop.f32.mrb[0].mxu0
    %3913 = vdwg.mxu0
    %v3914 = vld [vmem:[#allocation2] sm:$0x22]
    %v3915 = vld [vmem:[#allocation2 + $0x8] sm:$0x22]
    %s3916 = scalar_lea.vmem [#allocation6], 256
    %v3917 = vld [vmem:[%s3916] sm:$0xf]
    %v3918 = vld [vmem:[%s3916 + $0x4] sm:$0xf]
    %v3919 = vld [vmem:[%s3916 + $0x8] sm:$0xf]
    %v3920 = vld [vmem:[%s3916 + $0xc] sm:$0xf]
    %v3921 = vld [vmem:[%s3916 + $0x10] sm:$0xf]
    %v3922 = vld [vmem:[%s3916 + $0x14] sm:$0xf]
    %v3923 = vld [vmem:[%s3916 + $0x18] sm:$0xf]
    %v3924 = vld [vmem:[%s3916 + $0x1c] sm:$0xf]
    %v3925 = vld [vmem:[%s3916 + $0x20] sm:$0xf]
    %v3926 = vld [vmem:[%s3916 + $0x24] sm:$0xf]
    %v3927 = vld [vmem:[%s3916 + $0x28] sm:$0xf]
    %v3928 = vld [vmem:[%s3916 + $0x2c] sm:$0xf]
    %v3929 = vld [vmem:[%s3916 + $0x30] sm:$0xf]
    %v3930 = vld [vmem:[%s3916 + $0x34] sm:$0xf]
    %v3931 = vld [vmem:[%s3916 + $0x38] sm:$0xf]
    %v3932 = vld [vmem:[%s3916 + $0x3c] sm:$0xf]
    %v3933 = vld [vmem:[%s3916 + $0x40] sm:$0xf]
    %v3934 = vld [vmem:[%s3916 + $0x44] sm:$0xf]
    %v3935 = vld [vmem:[%s3916 + $0x48] sm:$0xf]
    %v3936 = vld [vmem:[%s3916 + $0x4c] sm:$0xf]
    %v3937 = vld [vmem:[%s3916 + $0x50] sm:$0xf]
    %v3938 = vld [vmem:[%s3916 + $0x54] sm:$0xf]
    %v3939 = vld [vmem:[%s3916 + $0x58] sm:$0xf]
    %v3940 = vld [vmem:[%s3916 + $0x5c] sm:$0xf]
    %v3941 = vld [vmem:[%s3916 + $0x60] sm:$0xf]
    %v3942 = vld [vmem:[%s3916 + $0x64] sm:$0xf]
    %v3943 = vld [vmem:[%s3916 + $0x68] sm:$0xf]
    %v3944 = vld [vmem:[%s3916 + $0x6c] sm:$0xf]
    %v3945 = vld [vmem:[%s3916 + $0x70] sm:$0xf]
    %v3946 = vld [vmem:[%s3916 + $0x74] sm:$0xf]
    %v3947 = vld [vmem:[%s3916 + $0x78] sm:$0xf]
    %v3948 = vld [vmem:[%s3916 + $0x7c] sm:$0xf]
    %v3951 = vunpack.c.l.b16 %v3914
    %v3952 = vunpack.c.h.b16 %v3914
    %v3953 = vunpack.c.l.b16 %v3915
    %v3954 = vunpack.c.h.b16 %v3915
    %v3955 = vpack.c.b16 %v3951, %v3951
    %v3956 = vpack.c.b16 %v3952, %v3952
    %v3957 = vpack.c.b16 %v3953, %v3953
    %v3958 = vpack.c.b16 %v3954, %v3954
    %v3959 = vunpack.c.l.b16 %v3955
    %v3960 = vunpack.c.l.b16 %v3956
    %v3961 = vunpack.c.l.b16 %v3957
    %v3962 = vunpack.c.l.b16 %v3958
    %v3963 = vrot.slane %v3959, 2
    %v3964 = vrot.slane %v3961, 1
    %v3965 = vsel %vm3626, %v3964, %v3963
    %v3966 = vrot.slane %v3960, 2
    %v3967 = vrot.slane %v3962, 1
    %v3968 = vsel %vm3626, %v3967, %v3966
    %v3969 = vpack.c.b16 %v3965, %v3965
    %v3970 = vpack.c.b16 %v3968, %v3968
    %v4005 = vunpack.c.l.b16 %v3917
    %v4006 = vunpack.c.l.b16 %v3918
    %v4007 = vunpack.c.l.b16 %v3919
    %v4008 = vunpack.c.l.b16 %v3920
    %v4009 = vunpack.c.l.b16 %v3921
    %v4010 = vunpack.c.l.b16 %v3922
    %v4011 = vunpack.c.l.b16 %v3923
    %v4012 = vunpack.c.l.b16 %v3924
    %v4013 = vunpack.c.l.b16 %v3925
    %v4014 = vunpack.c.l.b16 %v3926
    %v4015 = vunpack.c.l.b16 %v3927
    %v4016 = vunpack.c.l.b16 %v3928
    %v4017 = vunpack.c.l.b16 %v3929
    %v4018 = vunpack.c.l.b16 %v3930
    %v4019 = vunpack.c.l.b16 %v3931
    %v4020 = vunpack.c.l.b16 %v3932
    %v4021 = vunpack.c.l.b16 %v3933
    %v4022 = vunpack.c.l.b16 %v3934
    %v4023 = vunpack.c.l.b16 %v3935
    %v4024 = vunpack.c.l.b16 %v3936
    %v4025 = vunpack.c.l.b16 %v3937
    %v4026 = vunpack.c.l.b16 %v3938
    %v4027 = vunpack.c.l.b16 %v3939
    %v4028 = vunpack.c.l.b16 %v3940
    %v4029 = vunpack.c.l.b16 %v3941
    %v4030 = vunpack.c.l.b16 %v3942
    %v4031 = vunpack.c.l.b16 %v3943
    %v4032 = vunpack.c.l.b16 %v3944
    %v4033 = vunpack.c.l.b16 %v3945
    %v4034 = vunpack.c.l.b16 %v3946
    %v4035 = vunpack.c.l.b16 %v3947
    %v4036 = vunpack.c.l.b16 %v3948
    %v4037 = vpack.c.b16 %v4006, %v4005
    %v4038 = vpack.c.b16 %v4008, %v4007
    %v4039 = vpack.c.b16 %v4010, %v4009
    %v4040 = vpack.c.b16 %v4012, %v4011
    %v4041 = vpack.c.b16 %v4014, %v4013
    %v4042 = vpack.c.b16 %v4016, %v4015
    %v4043 = vpack.c.b16 %v4018, %v4017
    %v4044 = vpack.c.b16 %v4020, %v4019
    %v4045 = vpack.c.b16 %v4022, %v4021
    %v4046 = vpack.c.b16 %v4024, %v4023
    %v4047 = vpack.c.b16 %v4026, %v4025
    %v4048 = vpack.c.b16 %v4028, %v4027
    %v4049 = vpack.c.b16 %v4030, %v4029
    %v4050 = vpack.c.b16 %v4032, %v4031
    %v4051 = vpack.c.b16 %v4034, %v4033
    %v4052 = vpack.c.b16 %v4036, %v4035
    %4069 = vmatprep.subr.bf16.mxu0 0
    %4070 = vmatpush1.bf16.msra.mxu0 %v4037
    %4071 = vmatprep.subr.bf16.mxu0 0
    %4072 = vmatpush1.bf16.msra.mxu0 %v4038
    %4073 = vmatprep.subr.bf16.mxu0 0
    %4074 = vmatpush1.bf16.msra.mxu0 %v4039
    %4075 = vmatprep.subr.bf16.mxu0 0
    %4076 = vmatpush1.bf16.msra.mxu0 %v4040
    %4077 = vmatprep.subr.bf16.mxu0 0
    %4078 = vmatpush1.bf16.msra.mxu0 %v4041
    %4079 = vmatprep.subr.bf16.mxu0 0
    %4080 = vmatpush1.bf16.msra.mxu0 %v4042
    %4081 = vmatprep.subr.bf16.mxu0 0
    %4082 = vmatpush1.bf16.msra.mxu0 %v4043
    %4083 = vmatprep.subr.bf16.mxu0 0
    %4084 = vmatpush1.bf16.msra.mxu0 %v4044
    %4085 = vmatprep.subr.bf16.mxu0 0
    %4086 = vmatpush1.bf16.msra.mxu0 %v4045
    %4087 = vmatprep.subr.bf16.mxu0 0
    %4088 = vmatpush1.bf16.msra.mxu0 %v4046
    %4089 = vmatprep.subr.bf16.mxu0 0
    %4090 = vmatpush1.bf16.msra.mxu0 %v4047
    %4091 = vmatprep.subr.bf16.mxu0 0
    %4092 = vmatpush1.bf16.msra.mxu0 %v4048
    %4093 = vmatprep.subr.bf16.mxu0 0
    %4094 = vmatpush1.bf16.msra.mxu0 %v4049
    %4095 = vmatprep.subr.bf16.mxu0 0
    %4096 = vmatpush1.bf16.msra.mxu0 %v4050
    %4097 = vmatprep.subr.bf16.mxu0 0
    %4098 = vmatpush1.bf16.msra.mxu0 %v4051
    %4099 = vmatprep.subr.bf16.mxu0 0
    %4100 = vmatpush1.bf16.msra.mxu0 %v4052
    %4101 = vmatprep.mubr.bf16.mxu0 %v3970
    %4102 = vmatmul.mubr.bf16.gmra.mrb[0].mxu0 %v3969
    %v4103 = vpop.f32.mrb[0].mxu0
    %v4104 = vadd.f32 0.0, %v4103
    %v4105 = vpop.f32.mrb[0].mxu0
    %v4106 = vpop.f32.mrb[0].mxu0
    %v4107 = vpop.f32.mrb[0].mxu0
    %4108 = vdwg.mxu0
    %v4109 = vadd.f32 %v3909, %v4104
    %s4110 = scalar_lea.vmem [#allocation6], 384
    %v4111 = vld [vmem:[%s4110] sm:$0xf]
    %v4112 = vld [vmem:[%s4110 + $0x4] sm:$0xf]
    %v4113 = vld [vmem:[%s4110 + $0x8] sm:$0xf]
    %v4114 = vld [vmem:[%s4110 + $0xc] sm:$0xf]
    %v4115 = vld [vmem:[%s4110 + $0x10] sm:$0xf]
    %v4116 = vld [vmem:[%s4110 + $0x14] sm:$0xf]
    %v4117 = vld [vmem:[%s4110 + $0x18] sm:$0xf]
    %v4118 = vld [vmem:[%s4110 + $0x1c] sm:$0xf]
    %v4119 = vld [vmem:[%s4110 + $0x20] sm:$0xf]
    %v4120 = vld [vmem:[%s4110 + $0x24] sm:$0xf]
    %v4121 = vld [vmem:[%s4110 + $0x28] sm:$0xf]
    %v4122 = vld [vmem:[%s4110 + $0x2c] sm:$0xf]
    %v4123 = vld [vmem:[%s4110 + $0x30] sm:$0xf]
    %v4124 = vld [vmem:[%s4110 + $0x34] sm:$0xf]
    %v4125 = vld [vmem:[%s4110 + $0x38] sm:$0xf]
    %v4126 = vld [vmem:[%s4110 + $0x3c] sm:$0xf]
    %v4127 = vld [vmem:[%s4110 + $0x40] sm:$0xf]
    %v4128 = vld [vmem:[%s4110 + $0x44] sm:$0xf]
    %v4129 = vld [vmem:[%s4110 + $0x48] sm:$0xf]
    %v4130 = vld [vmem:[%s4110 + $0x4c] sm:$0xf]
    %v4131 = vld [vmem:[%s4110 + $0x50] sm:$0xf]
    %v4132 = vld [vmem:[%s4110 + $0x54] sm:$0xf]
    %v4133 = vld [vmem:[%s4110 + $0x58] sm:$0xf]
    %v4134 = vld [vmem:[%s4110 + $0x5c] sm:$0xf]
    %v4135 = vld [vmem:[%s4110 + $0x60] sm:$0xf]
    %v4136 = vld [vmem:[%s4110 + $0x64] sm:$0xf]
    %v4137 = vld [vmem:[%s4110 + $0x68] sm:$0xf]
    %v4138 = vld [vmem:[%s4110 + $0x6c] sm:$0xf]
    %v4139 = vld [vmem:[%s4110 + $0x70] sm:$0xf]
    %v4140 = vld [vmem:[%s4110 + $0x74] sm:$0xf]
    %v4141 = vld [vmem:[%s4110 + $0x78] sm:$0xf]
    %v4142 = vld [vmem:[%s4110 + $0x7c] sm:$0xf]
    %v4143 = vrot.slane %v3959, 3
    %v4144 = vrot.slane %v3961, 2
    %v4145 = vsel %vm3626, %v4144, %v4143
    %v4146 = vrot.slane %v3960, 3
    %v4147 = vrot.slane %v3962, 2
    %v4148 = vsel %vm3626, %v4147, %v4146
    %v4149 = vpack.c.b16 %v4145, %v4145
    %v4150 = vpack.c.b16 %v4148, %v4148
    %v4185 = vunpack.c.l.b16 %v4111
    %v4186 = vunpack.c.l.b16 %v4112
    %v4187 = vunpack.c.l.b16 %v4113
    %v4188 = vunpack.c.l.b16 %v4114
    %v4189 = vunpack.c.l.b16 %v4115
    %v4190 = vunpack.c.l.b16 %v4116
    %v4191 = vunpack.c.l.b16 %v4117
    %v4192 = vunpack.c.l.b16 %v4118
    %v4193 = vunpack.c.l.b16 %v4119
    %v4194 = vunpack.c.l.b16 %v4120
    %v4195 = vunpack.c.l.b16 %v4121
    %v4196 = vunpack.c.l.b16 %v4122
    %v4197 = vunpack.c.l.b16 %v4123
    %v4198 = vunpack.c.l.b16 %v4124
    %v4199 = vunpack.c.l.b16 %v4125
    %v4200 = vunpack.c.l.b16 %v4126
    %v4201 = vunpack.c.l.b16 %v4127
    %v4202 = vunpack.c.l.b16 %v4128
    %v4203 = vunpack.c.l.b16 %v4129
    %v4204 = vunpack.c.l.b16 %v4130
    %v4205 = vunpack.c.l.b16 %v4131
    %v4206 = vunpack.c.l.b16 %v4132
    %v4207 = vunpack.c.l.b16 %v4133
    %v4208 = vunpack.c.l.b16 %v4134
    %v4209 = vunpack.c.l.b16 %v4135
    %v4210 = vunpack.c.l.b16 %v4136
    %v4211 = vunpack.c.l.b16 %v4137
    %v4212 = vunpack.c.l.b16 %v4138
    %v4213 = vunpack.c.l.b16 %v4139
    %v4214 = vunpack.c.l.b16 %v4140
    %v4215 = vunpack.c.l.b16 %v4141
    %v4216 = vunpack.c.l.b16 %v4142
    %v4217 = vpack.c.b16 %v4186, %v4185
    %v4218 = vpack.c.b16 %v4188, %v4187
    %v4219 = vpack.c.b16 %v4190, %v4189
    %v4220 = vpack.c.b16 %v4192, %v4191
    %v4221 = vpack.c.b16 %v4194, %v4193
    %v4222 = vpack.c.b16 %v4196, %v4195
    %v4223 = vpack.c.b16 %v4198, %v4197
    %v4224 = vpack.c.b16 %v4200, %v4199
    %v4225 = vpack.c.b16 %v4202, %v4201
    %v4226 = vpack.c.b16 %v4204, %v4203
    %v4227 = vpack.c.b16 %v4206, %v4205
    %v4228 = vpack.c.b16 %v4208, %v4207
    %v4229 = vpack.c.b16 %v4210, %v4209
    %v4230 = vpack.c.b16 %v4212, %v4211
    %v4231 = vpack.c.b16 %v4214, %v4213
    %v4232 = vpack.c.b16 %v4216, %v4215
    %4249 = vmatprep.subr.bf16.mxu0 0
    %4250 = vmatpush1.bf16.msra.mxu0 %v4217
    %4251 = vmatprep.subr.bf16.mxu0 0
    %4252 = vmatpush1.bf16.msra.mxu0 %v4218
    %4253 = vmatprep.subr.bf16.mxu0 0
    %4254 = vmatpush1.bf16.msra.mxu0 %v4219
    %4255 = vmatprep.subr.bf16.mxu0 0
    %4256 = vmatpush1.bf16.msra.mxu0 %v4220
    %4257 = vmatprep.subr.bf16.mxu0 0
    %4258 = vmatpush1.bf16.msra.mxu0 %v4221
    %4259 = vmatprep.subr.bf16.mxu0 0
    %4260 = vmatpush1.bf16.msra.mxu0 %v4222
    %4261 = vmatprep.subr.bf16.mxu0 0
    %4262 = vmatpush1.bf16.msra.mxu0 %v4223
    %4263 = vmatprep.subr.bf16.mxu0 0
    %4264 = vmatpush1.bf16.msra.mxu0 %v4224
    %4265 = vmatprep.subr.bf16.mxu0 0
    %4266 = vmatpush1.bf16.msra.mxu0 %v4225
    %4267 = vmatprep.subr.bf16.mxu0 0
    %4268 = vmatpush1.bf16.msra.mxu0 %v4226
    %4269 = vmatprep.subr.bf16.mxu0 0
    %4270 = vmatpush1.bf16.msra.mxu0 %v4227
    %4271 = vmatprep.subr.bf16.mxu0 0
    %4272 = vmatpush1.bf16.msra.mxu0 %v4228
    %4273 = vmatprep.subr.bf16.mxu0 0
    %4274 = vmatpush1.bf16.msra.mxu0 %v4229
    %4275 = vmatprep.subr.bf16.mxu0 0
    %4276 = vmatpush1.bf16.msra.mxu0 %v4230
    %4277 = vmatprep.subr.bf16.mxu0 0
    %4278 = vmatpush1.bf16.msra.mxu0 %v4231
    %4279 = vmatprep.subr.bf16.mxu0 0
    %4280 = vmatpush1.bf16.msra.mxu0 %v4232
    %4281 = vmatprep.mubr.bf16.mxu0 %v4150
    %4282 = vmatmul.mubr.bf16.gmra.mrb[0].mxu0 %v4149
    %v4283 = vpop.f32.mrb[0].mxu0
    %v4284 = vadd.f32 0.0, %v4283
    %v4285 = vpop.f32.mrb[0].mxu0
    %v4286 = vpop.f32.mrb[0].mxu0
    %v4287 = vpop.f32.mrb[0].mxu0
    %4288 = vdwg.mxu0
    %v4289 = vadd.f32 %v4109, %v4284
    %v4290 = vld [vmem:[#allocation2] sm:$0x44]
    %v4291 = vld [vmem:[#allocation2 + $0x8] sm:$0x44]
    %s4292 = scalar_lea.vmem [#allocation6], 512
    %v4293 = vld [vmem:[%s4292] sm:$0xf]
    %v4294 = vld [vmem:[%s4292 + $0x4] sm:$0xf]
    %v4295 = vld [vmem:[%s4292 + $0x8] sm:$0xf]
    %v4296 = vld [vmem:[%s4292 + $0xc] sm:$0xf]
    %v4297 = vld [vmem:[%s4292 + $0x10] sm:$0xf]
    %v4298 = vld [vmem:[%s4292 + $0x14] sm:$0xf]
    %v4299 = vld [vmem:[%s4292 + $0x18] sm:$0xf]
    %v4300 = vld [vmem:[%s4292 + $0x1c] sm:$0xf]
    %v4301 = vld [vmem:[%s4292 + $0x20] sm:$0xf]
    %v4302 = vld [vmem:[%s4292 + $0x24] sm:$0xf]
    %v4303 = vld [vmem:[%s4292 + $0x28] sm:$0xf]
    %v4304 = vld [vmem:[%s4292 + $0x2c] sm:$0xf]
    %v4305 = vld [vmem:[%s4292 + $0x30] sm:$0xf]
    %v4306 = vld [vmem:[%s4292 + $0x34] sm:$0xf]
    %v4307 = vld [vmem:[%s4292 + $0x38] sm:$0xf]
    %v4308 = vld [vmem:[%s4292 + $0x3c] sm:$0xf]
    %v4309 = vld [vmem:[%s4292 + $0x40] sm:$0xf]
    %v4310 = vld [vmem:[%s4292 + $0x44] sm:$0xf]
    %v4311 = vld [vmem:[%s4292 + $0x48] sm:$0xf]
    %v4312 = vld [vmem:[%s4292 + $0x4c] sm:$0xf]
    %v4313 = vld [vmem:[%s4292 + $0x50] sm:$0xf]
    %v4314 = vld [vmem:[%s4292 + $0x54] sm:$0xf]
    %v4315 = vld [vmem:[%s4292 + $0x58] sm:$0xf]
    %v4316 = vld [vmem:[%s4292 + $0x5c] sm:$0xf]
    %v4317 = vld [vmem:[%s4292 + $0x60] sm:$0xf]
    %v4318 = vld [vmem:[%s4292 + $0x64] sm:$0xf]
    %v4319 = vld [vmem:[%s4292 + $0x68] sm:$0xf]
    %v4320 = vld [vmem:[%s4292 + $0x6c] sm:$0xf]
    %v4321 = vld [vmem:[%s4292 + $0x70] sm:$0xf]
    %v4322 = vld [vmem:[%s4292 + $0x74] sm:$0xf]
    %v4323 = vld [vmem:[%s4292 + $0x78] sm:$0xf]
    %v4324 = vld [vmem:[%s4292 + $0x7c] sm:$0xf]
    %v4327 = vunpack.c.l.b16 %v4290
    %v4328 = vunpack.c.h.b16 %v4290
    %v4329 = vunpack.c.l.b16 %v4291
    %v4330 = vunpack.c.h.b16 %v4291
    %v4331 = vpack.c.b16 %v4327, %v4327
    %v4332 = vpack.c.b16 %v4328, %v4328
    %v4333 = vpack.c.b16 %v4329, %v4329
    %v4334 = vpack.c.b16 %v4330, %v4330
    %v4335 = vunpack.c.l.b16 %v4331
    %v4336 = vunpack.c.l.b16 %v4332
    %v4337 = vunpack.c.l.b16 %v4333
    %v4338 = vunpack.c.l.b16 %v4334
    %v4339 = vrot.slane %v4335, 4
    %v4340 = vrot.slane %v4337, 3
    %v4341 = vsel %vm3626, %v4340, %v4339
    %v4342 = vrot.slane %v4336, 4
    %v4343 = vrot.slane %v4338, 3
    %v4344 = vsel %vm3626, %v4343, %v4342
    %v4345 = vpack.c.b16 %v4341, %v4341
    %v4346 = vpack.c.b16 %v4344, %v4344
    %v4381 = vunpack.c.l.b16 %v4293
    %v4382 = vunpack.c.l.b16 %v4294
    %v4383 = vunpack.c.l.b16 %v4295
    %v4384 = vunpack.c.l.b16 %v4296
    %v4385 = vunpack.c.l.b16 %v4297
    %v4386 = vunpack.c.l.b16 %v4298
    %v4387 = vunpack.c.l.b16 %v4299
    %v4388 = vunpack.c.l.b16 %v4300
    %v4389 = vunpack.c.l.b16 %v4301
    %v4390 = vunpack.c.l.b16 %v4302
    %v4391 = vunpack.c.l.b16 %v4303
    %v4392 = vunpack.c.l.b16 %v4304
    %v4393 = vunpack.c.l.b16 %v4305
    %v4394 = vunpack.c.l.b16 %v4306
    %v4395 = vunpack.c.l.b16 %v4307
    %v4396 = vunpack.c.l.b16 %v4308
    %v4397 = vunpack.c.l.b16 %v4309
    %v4398 = vunpack.c.l.b16 %v4310
    %v4399 = vunpack.c.l.b16 %v4311
    %v4400 = vunpack.c.l.b16 %v4312
    %v4401 = vunpack.c.l.b16 %v4313
    %v4402 = vunpack.c.l.b16 %v4314
    %v4403 = vunpack.c.l.b16 %v4315
    %v4404 = vunpack.c.l.b16 %v4316
    %v4405 = vunpack.c.l.b16 %v4317
    %v4406 = vunpack.c.l.b16 %v4318
    %v4407 = vunpack.c.l.b16 %v4319
    %v4408 = vunpack.c.l.b16 %v4320
    %v4409 = vunpack.c.l.b16 %v4321
    %v4410 = vunpack.c.l.b16 %v4322
    %v4411 = vunpack.c.l.b16 %v4323
    %v4412 = vunpack.c.l.b16 %v4324
    %v4413 = vpack.c.b16 %v4382, %v4381
    %v4414 = vpack.c.b16 %v4384, %v4383
    %v4415 = vpack.c.b16 %v4386, %v4385
    %v4416 = vpack.c.b16 %v4388, %v4387
    %v4417 = vpack.c.b16 %v4390, %v4389
    %v4418 = vpack.c.b16 %v4392, %v4391
    %v4419 = vpack.c.b16 %v4394, %v4393
    %v4420 = vpack.c.b16 %v4396, %v4395
    %v4421 = vpack.c.b16 %v4398, %v4397
    %v4422 = vpack.c.b16 %v4400, %v4399
    %v4423 = vpack.c.b16 %v4402, %v4401
    %v4424 = vpack.c.b16 %v4404, %v4403
    %v4425 = vpack.c.b16 %v4406, %v4405
    %v4426 = vpack.c.b16 %v4408, %v4407
    %v4427 = vpack.c.b16 %v4410, %v4409
    %v4428 = vpack.c.b16 %v4412, %v4411
    %4445 = vmatprep.subr.bf16.mxu0 0
    %4446 = vmatpush1.bf16.msra.mxu0 %v4413
    %4447 = vmatprep.subr.bf16.mxu0 0
    %4448 = vmatpush1.bf16.msra.mxu0 %v4414
    %4449 = vmatprep.subr.bf16.mxu0 0
    %4450 = vmatpush1.bf16.msra.mxu0 %v4415
    %4451 = vmatprep.subr.bf16.mxu0 0
    %4452 = vmatpush1.bf16.msra.mxu0 %v4416
    %4453 = vmatprep.subr.bf16.mxu0 0
    %4454 = vmatpush1.bf16.msra.mxu0 %v4417
    %4455 = vmatprep.subr.bf16.mxu0 0
    %4456 = vmatpush1.bf16.msra.mxu0 %v4418
    %4457 = vmatprep.subr.bf16.mxu0 0
    %4458 = vmatpush1.bf16.msra.mxu0 %v4419
    %4459 = vmatprep.subr.bf16.mxu0 0
    %4460 = vmatpush1.bf16.msra.mxu0 %v4420
    %4461 = vmatprep.subr.bf16.mxu0 0
    %4462 = vmatpush1.bf16.msra.mxu0 %v4421
    %4463 = vmatprep.subr.bf16.mxu0 0
    %4464 = vmatpush1.bf16.msra.mxu0 %v4422
    %4465 = vmatprep.subr.bf16.mxu0 0
    %4466 = vmatpush1.bf16.msra.mxu0 %v4423
    %4467 = vmatprep.subr.bf16.mxu0 0
    %4468 = vmatpush1.bf16.msra.mxu0 %v4424
    %4469 = vmatprep.subr.bf16.mxu0 0
    %4470 = vmatpush1.bf16.msra.mxu0 %v4425
    %4471 = vmatprep.subr.bf16.mxu0 0
    %4472 = vmatpush1.bf16.msra.mxu0 %v4426
    %4473 = vmatprep.subr.bf16.mxu0 0
    %4474 = vmatpush1.bf16.msra.mxu0 %v4427
    %4475 = vmatprep.subr.bf16.mxu0 0
    %4476 = vmatpush1.bf16.msra.mxu0 %v4428
    %4477 = vmatprep.mubr.bf16.mxu0 %v4346
    %4478 = vmatmul.mubr.bf16.gmra.mrb[0].mxu0 %v4345
    %v4479 = vpop.f32.mrb[0].mxu0
    %v4480 = vadd.f32 0.0, %v4479
    %v4481 = vpop.f32.mrb[0].mxu0
    %v4482 = vpop.f32.mrb[0].mxu0
    %v4483 = vpop.f32.mrb[0].mxu0
    %4484 = vdwg.mxu0
    %v4485 = vadd.f32 %v4289, %v4480
    %s4486 = scalar_lea.vmem [#allocation6], 640
    %v4487 = vld [vmem:[%s4486] sm:$0xf]
    %v4488 = vld [vmem:[%s4486 + $0x4] sm:$0xf]
    %v4489 = vld [vmem:[%s4486 + $0x8] sm:$0xf]
    %v4490 = vld [vmem:[%s4486 + $0xc] sm:$0xf]
    %v4491 = vld [vmem:[%s4486 + $0x10] sm:$0xf]
    %v4492 = vld [vmem:[%s4486 + $0x14] sm:$0xf]
    %v4493 = vld [vmem:[%s4486 + $0x18] sm:$0xf]
    %v4494 = vld [vmem:[%s4486 + $0x1c] sm:$0xf]
    %v4495 = vld [vmem:[%s4486 + $0x20] sm:$0xf]
    %v4496 = vld [vmem:[%s4486 + $0x24] sm:$0xf]
    %v4497 = vld [vmem:[%s4486 + $0x28] sm:$0xf]
    %v4498 = vld [vmem:[%s4486 + $0x2c] sm:$0xf]
    %v4499 = vld [vmem:[%s4486 + $0x30] sm:$0xf]
    %v4500 = vld [vmem:[%s4486 + $0x34] sm:$0xf]
    %v4501 = vld [vmem:[%s4486 + $0x38] sm:$0xf]
    %v4502 = vld [vmem:[%s4486 + $0x3c] sm:$0xf]
    %v4503 = vld [vmem:[%s4486 + $0x40] sm:$0xf]
    %v4504 = vld [vmem:[%s4486 + $0x44] sm:$0xf]
    %v4505 = vld [vmem:[%s4486 + $0x48] sm:$0xf]
    %v4506 = vld [vmem:[%s4486 + $0x4c] sm:$0xf]
    %v4507 = vld [vmem:[%s4486 + $0x50] sm:$0xf]
    %v4508 = vld [vmem:[%s4486 + $0x54] sm:$0xf]
    %v4509 = vld [vmem:[%s4486 + $0x58] sm:$0xf]
    %v4510 = vld [vmem:[%s4486 + $0x5c] sm:$0xf]
    %v4511 = vld [vmem:[%s4486 + $0x60] sm:$0xf]
    %v4512 = vld [vmem:[%s4486 + $0x64] sm:$0xf]
    %v4513 = vld [vmem:[%s4486 + $0x68] sm:$0xf]
    %v4514 = vld [vmem:[%s4486 + $0x6c] sm:$0xf]
    %v4515 = vld [vmem:[%s4486 + $0x70] sm:$0xf]
    %v4516 = vld [vmem:[%s4486 + $0x74] sm:$0xf]
    %v4517 = vld [vmem:[%s4486 + $0x78] sm:$0xf]
    %v4518 = vld [vmem:[%s4486 + $0x7c] sm:$0xf]
    %v4519 = vrot.slane %v4335, 5
    %v4520 = vrot.slane %v4337, 4
    %v4521 = vsel %vm3626, %v4520, %v4519
    %v4522 = vrot.slane %v4336, 5
    %v4523 = vrot.slane %v4338, 4
    %v4524 = vsel %vm3626, %v4523, %v4522
    %v4525 = vpack.c.b16 %v4521, %v4521
    %v4526 = vpack.c.b16 %v4524, %v4524
    %v4561 = vunpack.c.l.b16 %v4487
    %v4562 = vunpack.c.l.b16 %v4488
    %v4563 = vunpack.c.l.b16 %v4489
    %v4564 = vunpack.c.l.b16 %v4490
    %v4565 = vunpack.c.l.b16 %v4491
    %v4566 = vunpack.c.l.b16 %v4492
    %v4567 = vunpack.c.l.b16 %v4493
    %v4568 = vunpack.c.l.b16 %v4494
    %v4569 = vunpack.c.l.b16 %v4495
    %v4570 = vunpack.c.l.b16 %v4496
    %v4571 = vunpack.c.l.b16 %v4497
    %v4572 = vunpack.c.l.b16 %v4498
    %v4573 = vunpack.c.l.b16 %v4499
    %v4574 = vunpack.c.l.b16 %v4500
    %v4575 = vunpack.c.l.b16 %v4501
    %v4576 = vunpack.c.l.b16 %v4502
    %v4577 = vunpack.c.l.b16 %v4503
    %v4578 = vunpack.c.l.b16 %v4504
    %v4579 = vunpack.c.l.b16 %v4505
    %v4580 = vunpack.c.l.b16 %v4506
    %v4581 = vunpack.c.l.b16 %v4507
    %v4582 = vunpack.c.l.b16 %v4508
    %v4583 = vunpack.c.l.b16 %v4509
    %v4584 = vunpack.c.l.b16 %v4510
    %v4585 = vunpack.c.l.b16 %v4511
    %v4586 = vunpack.c.l.b16 %v4512
    %v4587 = vunpack.c.l.b16 %v4513
    %v4588 = vunpack.c.l.b16 %v4514
    %v4589 = vunpack.c.l.b16 %v4515
    %v4590 = vunpack.c.l.b16 %v4516
    %v4591 = vunpack.c.l.b16 %v4517
    %v4592 = vunpack.c.l.b16 %v4518
    %v4593 = vpack.c.b16 %v4562, %v4561
    %v4594 = vpack.c.b16 %v4564, %v4563
    %v4595 = vpack.c.b16 %v4566, %v4565
    %v4596 = vpack.c.b16 %v4568, %v4567
    %v4597 = vpack.c.b16 %v4570, %v4569
    %v4598 = vpack.c.b16 %v4572, %v4571
    %v4599 = vpack.c.b16 %v4574, %v4573
    %v4600 = vpack.c.b16 %v4576, %v4575
    %v4601 = vpack.c.b16 %v4578, %v4577
    %v4602 = vpack.c.b16 %v4580, %v4579
    %v4603 = vpack.c.b16 %v4582, %v4581
    %v4604 = vpack.c.b16 %v4584, %v4583
    %v4605 = vpack.c.b16 %v4586, %v4585
    %v4606 = vpack.c.b16 %v4588, %v4587
    %v4607 = vpack.c.b16 %v4590, %v4589
    %v4608 = vpack.c.b16 %v4592, %v4591
    %4625 = vmatprep.subr.bf16.mxu0 0
    %4626 = vmatpush1.bf16.msra.mxu0 %v4593
    %4627 = vmatprep.subr.bf16.mxu0 0
    %4628 = vmatpush1.bf16.msra.mxu0 %v4594
    %4629 = vmatprep.subr.bf16.mxu0 0
    %4630 = vmatpush1.bf16.msra.mxu0 %v4595
    %4631 = vmatprep.subr.bf16.mxu0 0
    %4632 = vmatpush1.bf16.msra.mxu0 %v4596
    %4633 = vmatprep.subr.bf16.mxu0 0
    %4634 = vmatpush1.bf16.msra.mxu0 %v4597
    %4635 = vmatprep.subr.bf16.mxu0 0
    %4636 = vmatpush1.bf16.msra.mxu0 %v4598
    %4637 = vmatprep.subr.bf16.mxu0 0
    %4638 = vmatpush1.bf16.msra.mxu0 %v4599
    %4639 = vmatprep.subr.bf16.mxu0 0
    %4640 = vmatpush1.bf16.msra.mxu0 %v4600
    %4641 = vmatprep.subr.bf16.mxu0 0
    %4642 = vmatpush1.bf16.msra.mxu0 %v4601
    %4643 = vmatprep.subr.bf16.mxu0 0
    %4644 = vmatpush1.bf16.msra.mxu0 %v4602
    %4645 = vmatprep.subr.bf16.mxu0 0
    %4646 = vmatpush1.bf16.msra.mxu0 %v4603
    %4647 = vmatprep.subr.bf16.mxu0 0
    %4648 = vmatpush1.bf16.msra.mxu0 %v4604
    %4649 = vmatprep.subr.bf16.mxu0 0
    %4650 = vmatpush1.bf16.msra.mxu0 %v4605
    %4651 = vmatprep.subr.bf16.mxu0 0
    %4652 = vmatpush1.bf16.msra.mxu0 %v4606
    %4653 = vmatprep.subr.bf16.mxu0 0
    %4654 = vmatpush1.bf16.msra.mxu0 %v4607
    %4655 = vmatprep.subr.bf16.mxu0 0
    %4656 = vmatpush1.bf16.msra.mxu0 %v4608
    %4657 = vmatprep.mubr.bf16.mxu0 %v4526
    %4658 = vmatmul.mubr.bf16.gmra.mrb[0].mxu0 %v4525
    %v4659 = vpop.f32.mrb[0].mxu0
    %v4660 = vadd.f32 0.0, %v4659
    %v4661 = vpop.f32.mrb[0].mxu0
    %v4662 = vpop.f32.mrb[0].mxu0
    %v4663 = vpop.f32.mrb[0].mxu0
    %4664 = vdwg.mxu0
    %v4665 = vadd.f32 %v4485, %v4660
    %v4666 = vld [vmem:[#allocation2] sm:$0x88]
    %v4667 = vld [vmem:[#allocation2 + $0x8] sm:$0x88]
    %s4668 = scalar_lea.vmem [#allocation6], 768
    %v4669 = vld [vmem:[%s4668] sm:$0xf]
    %v4670 = vld [vmem:[%s4668 + $0x4] sm:$0xf]
    %v4671 = vld [vmem:[%s4668 + $0x8] sm:$0xf]
    %v4672 = vld [vmem:[%s4668 + $0xc] sm:$0xf]
    %v4673 = vld [vmem:[%s4668 + $0x10] sm:$0xf]
    %v4674 = vld [vmem:[%s4668 + $0x14] sm:$0xf]
    %v4675 = vld [vmem:[%s4668 + $0x18] sm:$0xf]
    %v4676 = vld [vmem:[%s4668 + $0x1c] sm:$0xf]
    %v4677 = vld [vmem:[%s4668 + $0x20] sm:$0xf]
    %v4678 = vld [vmem:[%s4668 + $0x24] sm:$0xf]
    %v4679 = vld [vmem:[%s4668 + $0x28] sm:$0xf]
    %v4680 = vld [vmem:[%s4668 + $0x2c] sm:$0xf]
    %v4681 = vld [vmem:[%s4668 + $0x30] sm:$0xf]
    %v4682 = vld [vmem:[%s4668 + $0x34] sm:$0xf]
    %v4683 = vld [vmem:[%s4668 + $0x38] sm:$0xf]
    %v4684 = vld [vmem:[%s4668 + $0x3c] sm:$0xf]
    %v4685 = vld [vmem:[%s4668 + $0x40] sm:$0xf]
    %v4686 = vld [vmem:[%s4668 + $0x44] sm:$0xf]
    %v4687 = vld [vmem:[%s4668 + $0x48] sm:$0xf]
    %v4688 = vld [vmem:[%s4668 + $0x4c] sm:$0xf]
    %v4689 = vld [vmem:[%s4668 + $0x50] sm:$0xf]
    %v4690 = vld [vmem:[%s4668 + $0x54] sm:$0xf]
    %v4691 = vld [vmem:[%s4668 + $0x58] sm:$0xf]
    %v4692 = vld [vmem:[%s4668 + $0x5c] sm:$0xf]
    %v4693 = vld [vmem:[%s4668 + $0x60] sm:$0xf]
    %v4694 = vld [vmem:[%s4668 + $0x64] sm:$0xf]
    %v4695 = vld [vmem:[%s4668 + $0x68] sm:$0xf]
    %v4696 = vld [vmem:[%s4668 + $0x6c] sm:$0xf]
    %v4697 = vld [vmem:[%s4668 + $0x70] sm:$0xf]
    %v4698 = vld [vmem:[%s4668 + $0x74] sm:$0xf]
    %v4699 = vld [vmem:[%s4668 + $0x78] sm:$0xf]
    %v4700 = vld [vmem:[%s4668 + $0x7c] sm:$0xf]
    %v4703 = vunpack.c.l.b16 %v4666
    %v4704 = vunpack.c.h.b16 %v4666
    %v4705 = vunpack.c.l.b16 %v4667
    %v4706 = vunpack.c.h.b16 %v4667
    %v4707 = vpack.c.b16 %v4703, %v4703
    %v4708 = vpack.c.b16 %v4704, %v4704
    %v4709 = vpack.c.b16 %v4705, %v4705
    %v4710 = vpack.c.b16 %v4706, %v4706
    %v4711 = vunpack.c.l.b16 %v4707
    %v4712 = vunpack.c.l.b16 %v4708
    %v4713 = vunpack.c.l.b16 %v4709
    %v4714 = vunpack.c.l.b16 %v4710
    %v4715 = vrot.slane %v4711, 6
    %v4716 = vrot.slane %v4713, 5
    %v4717 = vsel %vm3626, %v4716, %v4715
    %v4718 = vrot.slane %v4712, 6
    %v4719 = vrot.slane %v4714, 5
    %v4720 = vsel %vm3626, %v4719, %v4718
    %v4721 = vpack.c.b16 %v4717, %v4717
    %v4722 = vpack.c.b16 %v4720, %v4720
    %v4757 = vunpack.c.l.b16 %v4669
    %v4758 = vunpack.c.l.b16 %v4670
    %v4759 = vunpack.c.l.b16 %v4671
    %v4760 = vunpack.c.l.b16 %v4672
    %v4761 = vunpack.c.l.b16 %v4673
    %v4762 = vunpack.c.l.b16 %v4674
    %v4763 = vunpack.c.l.b16 %v4675
    %v4764 = vunpack.c.l.b16 %v4676
    %v4765 = vunpack.c.l.b16 %v4677
    %v4766 = vunpack.c.l.b16 %v4678
    %v4767 = vunpack.c.l.b16 %v4679
    %v4768 = vunpack.c.l.b16 %v4680
    %v4769 = vunpack.c.l.b16 %v4681
    %v4770 = vunpack.c.l.b16 %v4682
    %v4771 = vunpack.c.l.b16 %v4683
    %v4772 = vunpack.c.l.b16 %v4684
    %v4773 = vunpack.c.l.b16 %v4685
    %v4774 = vunpack.c.l.b16 %v4686
    %v4775 = vunpack.c.l.b16 %v4687
    %v4776 = vunpack.c.l.b16 %v4688
    %v4777 = vunpack.c.l.b16 %v4689
    %v4778 = vunpack.c.l.b16 %v4690
    %v4779 = vunpack.c.l.b16 %v4691
    %v4780 = vunpack.c.l.b16 %v4692
    %v4781 = vunpack.c.l.b16 %v4693
    %v4782 = vunpack.c.l.b16 %v4694
    %v4783 = vunpack.c.l.b16 %v4695
    %v4784 = vunpack.c.l.b16 %v4696
    %v4785 = vunpack.c.l.b16 %v4697
    %v4786 = vunpack.c.l.b16 %v4698
    %v4787 = vunpack.c.l.b16 %v4699
    %v4788 = vunpack.c.l.b16 %v4700
    %v4789 = vpack.c.b16 %v4758, %v4757
    %v4790 = vpack.c.b16 %v4760, %v4759
    %v4791 = vpack.c.b16 %v4762, %v4761
    %v4792 = vpack.c.b16 %v4764, %v4763
    %v4793 = vpack.c.b16 %v4766, %v4765
    %v4794 = vpack.c.b16 %v4768, %v4767
    %v4795 = vpack.c.b16 %v4770, %v4769
    %v4796 = vpack.c.b16 %v4772, %v4771
    %v4797 = vpack.c.b16 %v4774, %v4773
    %v4798 = vpack.c.b16 %v4776, %v4775
    %v4799 = vpack.c.b16 %v4778, %v4777
    %v4800 = vpack.c.b16 %v4780, %v4779
    %v4801 = vpack.c.b16 %v4782, %v4781
    %v4802 = vpack.c.b16 %v4784, %v4783
    %v4803 = vpack.c.b16 %v4786, %v4785
    %v4804 = vpack.c.b16 %v4788, %v4787
    %4821 = vmatprep.subr.bf16.mxu0 0
    %4822 = vmatpush1.bf16.msra.mxu0 %v4789
    %4823 = vmatprep.subr.bf16.mxu0 0
    %4824 = vmatpush1.bf16.msra.mxu0 %v4790
    %4825 = vmatprep.subr.bf16.mxu0 0
    %4826 = vmatpush1.bf16.msra.mxu0 %v4791
    %4827 = vmatprep.subr.bf16.mxu0 0
    %4828 = vmatpush1.bf16.msra.mxu0 %v4792
    %4829 = vmatprep.subr.bf16.mxu0 0
    %4830 = vmatpush1.bf16.msra.mxu0 %v4793
    %4831 = vmatprep.subr.bf16.mxu0 0
    %4832 = vmatpush1.bf16.msra.mxu0 %v4794
    %4833 = vmatprep.subr.bf16.mxu0 0
    %4834 = vmatpush1.bf16.msra.mxu0 %v4795
    %4835 = vmatprep.subr.bf16.mxu0 0
    %4836 = vmatpush1.bf16.msra.mxu0 %v4796
    %4837 = vmatprep.subr.bf16.mxu0 0
    %4838 = vmatpush1.bf16.msra.mxu0 %v4797
    %4839 = vmatprep.subr.bf16.mxu0 0
    %4840 = vmatpush1.bf16.msra.mxu0 %v4798
    %4841 = vmatprep.subr.bf16.mxu0 0
    %4842 = vmatpush1.bf16.msra.mxu0 %v4799
    %4843 = vmatprep.subr.bf16.mxu0 0
    %4844 = vmatpush1.bf16.msra.mxu0 %v4800
    %4845 = vmatprep.subr.bf16.mxu0 0
    %4846 = vmatpush1.bf16.msra.mxu0 %v4801
    %4847 = vmatprep.subr.bf16.mxu0 0
    %4848 = vmatpush1.bf16.msra.mxu0 %v4802
    %4849 = vmatprep.subr.bf16.mxu0 0
    %4850 = vmatpush1.bf16.msra.mxu0 %v4803
    %4851 = vmatprep.subr.bf16.mxu0 0
    %4852 = vmatpush1.bf16.msra.mxu0 %v4804
    %4853 = vmatprep.mubr.bf16.mxu0 %v4722
    %4854 = vmatmul.mubr.bf16.gmra.mrb[0].mxu0 %v4721
    %v4855 = vpop.f32.mrb[0].mxu0
    %v4856 = vadd.f32 0.0, %v4855
    %v4857 = vpop.f32.mrb[0].mxu0
    %v4858 = vpop.f32.mrb[0].mxu0
    %v4859 = vpop.f32.mrb[0].mxu0
    %4860 = vdwg.mxu0
    %v4861 = vadd.f32 %v4665, %v4856
    %s4862 = scalar_lea.vmem [#allocation6], 896
    %v4863 = vld [vmem:[%s4862] sm:$0xf]
    %v4864 = vld [vmem:[%s4862 + $0x4] sm:$0xf]
    %v4865 = vld [vmem:[%s4862 + $0x8] sm:$0xf]
    %v4866 = vld [vmem:[%s4862 + $0xc] sm:$0xf]
    %v4867 = vld [vmem:[%s4862 + $0x10] sm:$0xf]
    %v4868 = vld [vmem:[%s4862 + $0x14] sm:$0xf]
    %v4869 = vld [vmem:[%s4862 + $0x18] sm:$0xf]
    %v4870 = vld [vmem:[%s4862 + $0x1c] sm:$0xf]
    %v4871 = vld [vmem:[%s4862 + $0x20] sm:$0xf]
    %v4872 = vld [vmem:[%s4862 + $0x24] sm:$0xf]
    %v4873 = vld [vmem:[%s4862 + $0x28] sm:$0xf]
    %v4874 = vld [vmem:[%s4862 + $0x2c] sm:$0xf]
    %v4875 = vld [vmem:[%s4862 + $0x30] sm:$0xf]
    %v4876 = vld [vmem:[%s4862 + $0x34] sm:$0xf]
    %v4877 = vld [vmem:[%s4862 + $0x38] sm:$0xf]
    %v4878 = vld [vmem:[%s4862 + $0x3c] sm:$0xf]
    %v4879 = vld [vmem:[%s4862 + $0x40] sm:$0xf]
    %v4880 = vld [vmem:[%s4862 + $0x44] sm:$0xf]
    %v4881 = vld [vmem:[%s4862 + $0x48] sm:$0xf]
    %v4882 = vld [vmem:[%s4862 + $0x4c] sm:$0xf]
    %v4883 = vld [vmem:[%s4862 + $0x50] sm:$0xf]
    %v4884 = vld [vmem:[%s4862 + $0x54] sm:$0xf]
    %v4885 = vld [vmem:[%s4862 + $0x58] sm:$0xf]
    %v4886 = vld [vmem:[%s4862 + $0x5c] sm:$0xf]
    %v4887 = vld [vmem:[%s4862 + $0x60] sm:$0xf]
    %v4888 = vld [vmem:[%s4862 + $0x64] sm:$0xf]
    %v4889 = vld [vmem:[%s4862 + $0x68] sm:$0xf]
    %v4890 = vld [vmem:[%s4862 + $0x6c] sm:$0xf]
    %v4891 = vld [vmem:[%s4862 + $0x70] sm:$0xf]
    %v4892 = vld [vmem:[%s4862 + $0x74] sm:$0xf]
    %v4893 = vld [vmem:[%s4862 + $0x78] sm:$0xf]
    %v4894 = vld [vmem:[%s4862 + $0x7c] sm:$0xf]
    %v4895 = vrot.slane %v4711, 7
    %v4896 = vrot.slane %v4713, 6
    %v4897 = vsel %vm3626, %v4896, %v4895
    %v4898 = vrot.slane %v4712, 7
    %v4899 = vrot.slane %v4714, 6
    %v4900 = vsel %vm3626, %v4899, %v4898
    %v4901 = vpack.c.b16 %v4897, %v4897
    %v4902 = vpack.c.b16 %v4900, %v4900
    %v4937 = vunpack.c.l.b16 %v4863
    %v4938 = vunpack.c.l.b16 %v4864
    %v4939 = vunpack.c.l.b16 %v4865
    %v4940 = vunpack.c.l.b16 %v4866
    %v4941 = vunpack.c.l.b16 %v4867
    %v4942 = vunpack.c.l.b16 %v4868
    %v4943 = vunpack.c.l.b16 %v4869
    %v4944 = vunpack.c.l.b16 %v4870
    %v4945 = vunpack.c.l.b16 %v4871
    %v4946 = vunpack.c.l.b16 %v4872
    %v4947 = vunpack.c.l.b16 %v4873
    %v4948 = vunpack.c.l.b16 %v4874
    %v4949 = vunpack.c.l.b16 %v4875
    %v4950 = vunpack.c.l.b16 %v4876
    %v4951 = vunpack.c.l.b16 %v4877
    %v4952 = vunpack.c.l.b16 %v4878
    %v4953 = vunpack.c.l.b16 %v4879
    %v4954 = vunpack.c.l.b16 %v4880
    %v4955 = vunpack.c.l.b16 %v4881
    %v4956 = vunpack.c.l.b16 %v4882
    %v4957 = vunpack.c.l.b16 %v4883
    %v4958 = vunpack.c.l.b16 %v4884
    %v4959 = vunpack.c.l.b16 %v4885
    %v4960 = vunpack.c.l.b16 %v4886
    %v4961 = vunpack.c.l.b16 %v4887
    %v4962 = vunpack.c.l.b16 %v4888
    %v4963 = vunpack.c.l.b16 %v4889
    %v4964 = vunpack.c.l.b16 %v4890
    %v4965 = vunpack.c.l.b16 %v4891
    %v4966 = vunpack.c.l.b16 %v4892
    %v4967 = vunpack.c.l.b16 %v4893
    %v4968 = vunpack.c.l.b16 %v4894
    %v4969 = vpack.c.b16 %v4938, %v4937
    %v4970 = vpack.c.b16 %v4940, %v4939
    %v4971 = vpack.c.b16 %v4942, %v4941
    %v4972 = vpack.c.b16 %v4944, %v4943
    %v4973 = vpack.c.b16 %v4946, %v4945
    %v4974 = vpack.c.b16 %v4948, %v4947
    %v4975 = vpack.c.b16 %v4950, %v4949
    %v4976 = vpack.c.b16 %v4952, %v4951
    %v4977 = vpack.c.b16 %v4954, %v4953
    %v4978 = vpack.c.b16 %v4956, %v4955
    %v4979 = vpack.c.b16 %v4958, %v4957
    %v4980 = vpack.c.b16 %v4960, %v4959
    %v4981 = vpack.c.b16 %v4962, %v4961
    %v4982 = vpack.c.b16 %v4964, %v4963
    %v4983 = vpack.c.b16 %v4966, %v4965
    %v4984 = vpack.c.b16 %v4968, %v4967
    %5001 = vmatprep.subr.bf16.mxu0 0
    %5002 = vmatpush1.bf16.msra.mxu0 %v4969
    %5003 = vmatprep.subr.bf16.mxu0 0
    %5004 = vmatpush1.bf16.msra.mxu0 %v4970
    %5005 = vmatprep.subr.bf16.mxu0 0
    %5006 = vmatpush1.bf16.msra.mxu0 %v4971
    %5007 = vmatprep.subr.bf16.mxu0 0
    %5008 = vmatpush1.bf16.msra.mxu0 %v4972
    %5009 = vmatprep.subr.bf16.mxu0 0
    %5010 = vmatpush1.bf16.msra.mxu0 %v4973
    %5011 = vmatprep.subr.bf16.mxu0 0
    %5012 = vmatpush1.bf16.msra.mxu0 %v4974
    %5013 = vmatprep.subr.bf16.mxu0 0
    %5014 = vmatpush1.bf16.msra.mxu0 %v4975
    %5015 = vmatprep.subr.bf16.mxu0 0
    %5016 = vmatpush1.bf16.msra.mxu0 %v4976
    %5017 = vmatprep.subr.bf16.mxu0 0
    %5018 = vmatpush1.bf16.msra.mxu0 %v4977
    %5019 = vmatprep.subr.bf16.mxu0 0
    %5020 = vmatpush1.bf16.msra.mxu0 %v4978
    %5021 = vmatprep.subr.bf16.mxu0 0
    %5022 = vmatpush1.bf16.msra.mxu0 %v4979
    %5023 = vmatprep.subr.bf16.mxu0 0
    %5024 = vmatpush1.bf16.msra.mxu0 %v4980
    %5025 = vmatprep.subr.bf16.mxu0 0
    %5026 = vmatpush1.bf16.msra.mxu0 %v4981
    %5027 = vmatprep.subr.bf16.mxu0 0
    %5028 = vmatpush1.bf16.msra.mxu0 %v4982
    %5029 = vmatprep.subr.bf16.mxu0 0
    %5030 = vmatpush1.bf16.msra.mxu0 %v4983
    %5031 = vmatprep.subr.bf16.mxu0 0
    %5032 = vmatpush1.bf16.msra.mxu0 %v4984
    %5033 = vmatprep.mubr.bf16.mxu0 %v4902
    %5034 = vmatmul.mubr.bf16.gmra.mrb[0].mxu0 %v4901
    %v5035 = vpop.f32.mrb[0].mxu0
    %v5036 = vadd.f32 0.0, %v5035
    %v5037 = vpop.f32.mrb[0].mxu0
    %v5038 = vpop.f32.mrb[0].mxu0
    %v5039 = vpop.f32.mrb[0].mxu0
    %5040 = vdwg.mxu0
    %v5041 = vadd.f32 %v4861, %v5036
    %v5042 = vld [vmem:[%s8] sm:$0x1]
    %v5044 = vlaneseq
    %v5045 = vshrl.u32 %v5044, 7
    %v5046 = vsub.s32 0, %v5045
    %v5047 = vrot.slane %v5042, %v5046
    %v5049 = vadd.f32 %v5041, %v5047
    %v5050 = vmax.f32 %v5049, 0.0
    %v5051 = vpack.c.bf16 %v5050, %v5050
    %v5052 = vld [vmem:[%s9] sm:$0xf]
    %v5053 = vld [vmem:[%s9 + $0x4] sm:$0xf]
    %v5054 = vld [vmem:[%s9 + $0x8] sm:$0xf]
    %v5055 = vld [vmem:[%s9 + $0xc] sm:$0xf]
    %v5056 = vld [vmem:[%s9 + $0x10] sm:$0xf]
    %v5057 = vld [vmem:[%s9 + $0x14] sm:$0xf]
    %v5058 = vld [vmem:[%s9 + $0x18] sm:$0xf]
    %v5059 = vld [vmem:[%s9 + $0x1c] sm:$0xf]
    %v5060 = vld [vmem:[%s9 + $0x20] sm:$0xf]
    %v5061 = vld [vmem:[%s9 + $0x24] sm:$0xf]
    %v5062 = vld [vmem:[%s9 + $0x28] sm:$0xf]
    %v5063 = vld [vmem:[%s9 + $0x2c] sm:$0xf]
    %v5064 = vld [vmem:[%s9 + $0x30] sm:$0xf]
    %v5065 = vld [vmem:[%s9 + $0x34] sm:$0xf]
    %v5066 = vld [vmem:[%s9 + $0x38] sm:$0xf]
    %v5067 = vld [vmem:[%s9 + $0x3c] sm:$0xf]
    %v5068 = vld [vmem:[%s10] sm:$0x1]
    %v5070 = vlaneseq
    %v5071 = vshrl.u32 %v5070, 7
    %v5072 = vsub.s32 0, %v5071
    %v5073 = vrot.slane %v5068, %v5072
    %v5091 = vunpack.c.l.b16 %v5052
    %v5092 = vunpack.c.l.b16 %v5053
    %v5093 = vunpack.c.l.b16 %v5054
    %v5094 = vunpack.c.l.b16 %v5055
    %v5095 = vunpack.c.l.b16 %v5056
    %v5096 = vunpack.c.l.b16 %v5057
    %v5097 = vunpack.c.l.b16 %v5058
    %v5098 = vunpack.c.l.b16 %v5059
    %v5099 = vunpack.c.l.b16 %v5060
    %v5100 = vunpack.c.l.b16 %v5061
    %v5101 = vunpack.c.l.b16 %v5062
    %v5102 = vunpack.c.l.b16 %v5063
    %v5103 = vunpack.c.l.b16 %v5064
    %v5104 = vunpack.c.l.b16 %v5065
    %v5105 = vunpack.c.l.b16 %v5066
    %v5106 = vunpack.c.l.b16 %v5067
    %v5107 = vpack.c.b16 %v5092, %v5091
    %v5108 = vpack.c.b16 %v5094, %v5093
    %v5109 = vpack.c.b16 %v5096, %v5095
    %v5110 = vpack.c.b16 %v5098, %v5097
    %v5111 = vpack.c.b16 %v5100, %v5099
    %v5112 = vpack.c.b16 %v5102, %v5101
    %v5113 = vpack.c.b16 %v5104, %v5103
    %v5114 = vpack.c.b16 %v5106, %v5105
    %5123 = vmatprep.subr.bf16.mxu0 0
    %5124 = vmatpush1.bf16.msra.mxu0 %v5107
    %5125 = vmatprep.subr.bf16.mxu0 0
    %5126 = vmatpush1.bf16.msra.mxu0 %v5108
    %5127 = vmatprep.subr.bf16.mxu0 0
    %5128 = vmatpush1.bf16.msra.mxu0 %v5109
    %5129 = vmatprep.subr.bf16.mxu0 0
    %5130 = vmatpush1.bf16.msra.mxu0 %v5110
    %5131 = vmatprep.subr.bf16.mxu0 0
    %5132 = vmatpush1.bf16.msra.mxu0 %v5111
    %5133 = vmatprep.subr.bf16.mxu0 0
    %5134 = vmatpush1.bf16.msra.mxu0 %v5112
    %5135 = vmatprep.subr.bf16.mxu0 0
    %5136 = vmatpush1.bf16.msra.mxu0 %v5113
    %5137 = vmatprep.subr.bf16.mxu0 0
    %5138 = vmatpush1.bf16.msra.mxu0 %v5114
    %5139 = vmatprep.subr.bf16.mxu0 0
    %5140 = vmatpush1.bf16.msra.mxu0 0
    %5141 = vmatprep.subr.bf16.mxu0 0
    %5142 = vmatpush1.bf16.msra.mxu0 0
    %5143 = vmatprep.subr.bf16.mxu0 0
    %5144 = vmatpush1.bf16.msra.mxu0 0
    %5145 = vmatprep.subr.bf16.mxu0 0
    %5146 = vmatpush1.bf16.msra.mxu0 0
    %5147 = vmatprep.subr.bf16.mxu0 0
    %5148 = vmatpush1.bf16.msra.mxu0 0
    %5149 = vmatprep.subr.bf16.mxu0 0
    %5150 = vmatpush1.bf16.msra.mxu0 0
    %5151 = vmatprep.subr.bf16.mxu0 0
    %5152 = vmatpush1.bf16.msra.mxu0 0
    %5153 = vmatprep.subr.bf16.mxu0 0
    %5154 = vmatpush1.bf16.msra.mxu0 0
    %5155 = vmatprep.mubr.bf16.mxu0 0
    %5156 = vmatmul.mubr.bf16.gmra.mrb[0].mxu0 %v5051
    %v5157 = vpop.f32.mrb[0].mxu0
    %v5158 = vadd.f32 %v5073, %v5157
    %v5159 = vpop.f32.mrb[0].mxu0
    %v5160 = vpop.f32.mrb[0].mxu0
    %v5161 = vpop.f32.mrb[0].mxu0
    %5162 = vdwg.mxu0
    %vm5163 = vcmask 74752
    %5164 = vst.msk [vmem:[#allocation8] sm:$0x3] %vm5163, %v5158
    // Predicated region
    $region54: #{forward.1} parent=1 // pred_check
      _
    $region55: #{forward.1} parent=1 // pred_check_branch
      %5166 = sbr.rel (0) target = $region57
    $region56: #{forward.1} parent=1 // pred_region
      %s5168 = ssub.s32 32, 32
      %5169 = vsyncadd [#allocation5], %s5168
      %s5171 = sshll.u32 [#allocation8], 4
      %s5172 = int_to_ptr.vmem [resolvable:$true] %s5171
      %5174 = dma.vmem_to_hbm [thread:$0]  %s5172, 32, %s11, [#allocation5]
    $region57: #{forward.1} parent=1 // pred_fallthru
      _
    // Predicated region
    $region58: #{forward.1} parent=1 // pred_check
      _
    $region59: #{forward.1} parent=1 // pred_check_branch
      %5176 = sbr.rel (0) target = $region61
    $region60: #{forward.1} parent=1 // pred_region
      %5177 = dma.done [#allocation5], 32
    $region61: #{forward.1} parent=1 // pred_fallthru
      _
    %5178 = vsyncpa [#allocation4], 1
    %5179 = vsyncpa [#allocation7], 1
    %5180 = vsyncpa [#allocation5], 1

</llo_original>
